<compile_context>
chip_gen: v7x
topology: tpu7x:2x2x1
jax: 0.10.0
libtpu: 0.0.40
codegen_flags: <defaults>
</compile_context>

<pallas_src>
import jax
import jax.numpy as jnp
from jax.experimental import pallas as pl
from jax.experimental.pallas import tpu as pltpu

D_IN, H1, H2, H3, D_OUT = 185, 1024, 512, 256, 181
XD_DIM, XF_DIM = 120, 65            # feature split implied by the forward pass
XD_PAD, XF_PAD = 128, 128           # lane-padded halves of the feature block
D_INP, D_OUTP = XD_PAD + XF_PAD, 256  # 256-wide padded input / output
MAX_BLOCK_B = 512                   # batch rows per grid step (cap)


# ----------------------------- Pallas kernel -------------------------------

def _mlp_kernel(xd_ref, xf_ref, w1_ref, b1_ref, w2_ref, b2_ref,
                w3_ref, b3_ref, w4_ref, b4_ref, o_ref):
    bf16 = jnp.bfloat16
    # Assemble the lane-dense 256-wide feature block in VMEM (fused concat):
    # layout [xd(120) | 0(8) | xf(65) | 0(63)], matched by the W1 row layout.
    x = jnp.concatenate((xd_ref[...], xf_ref[...]), axis=1)      # (bb, 256) bf16
    # fc1 + tanh (bf16 operands, f32 MXU accumulation)
    h = jnp.tanh(
        jnp.dot(x, w1_ref[...], preferred_element_type=jnp.float32) + b1_ref[...])
    # fc2 + tanh
    h = jnp.tanh(
        jnp.dot(h.astype(bf16), w2_ref[...],
                preferred_element_type=jnp.float32) + b2_ref[...])
    # fc3 + sigmoid
    h = jax.nn.sigmoid(
        jnp.dot(h.astype(bf16), w3_ref[...],
                preferred_element_type=jnp.float32) + b3_ref[...])
    # fc4 (no activation), f32 output
    o_ref[...] = (
        jnp.dot(h.astype(bf16), w4_ref[...],
                preferred_element_type=jnp.float32) + b4_ref[...])


# ------------------------- one-time param prep ------------------------------

def prepare_params(params):
    """Cast weights to bf16 and pre-pad/re-layout to tile-friendly shapes (once)."""
    w1, b1, w2, b2, w3, b3, w4, b4 = params
    bf16 = jnp.bfloat16
    # W1 rows re-laid-out to match the in-kernel [xd_pad(128) | xf_pad(128)] layout.
    w1p = jnp.zeros((D_INP, H1), jnp.float32)
    w1p = w1p.at[:XD_DIM].set(w1[:XD_DIM])
    w1p = w1p.at[XD_PAD:XD_PAD + XF_DIM].set(w1[XD_DIM:])
    w1p = w1p.astype(bf16)                                          # (256, 1024)
    w2p = w2.astype(bf16)                                           # (1024, 512)
    w3p = w3.astype(bf16)                                           # (512, 256)
    w4p = jnp.pad(w4, ((0, 0), (0, D_OUTP - D_OUT))).astype(bf16)   # (256, 256)
    b1p = b1.reshape(1, -1).astype(jnp.float32)
    b2p = b2.reshape(1, -1).astype(jnp.float32)
    b3p = b3.reshape(1, -1).astype(jnp.float32)
    b4p = jnp.pad(b4, (0, D_OUTP - D_OUT)).reshape(1, -1).astype(jnp.float32)
    return (w1p, b1p, w2p, b2p, w3p, b3p, w4p, b4p)


# ------------------------------- forward ------------------------------------

def _make_forward(weight_buffer_count):
    """Build the jitted forward; weight_buffer_count=None -> default pipelining."""
    if weight_buffer_count is None:
        resident_kwargs = {}
    else:
        resident_kwargs = dict(pipeline_mode=pl.Buffered(weight_buffer_count))

    @jax.jit
    def fwd(xd_last, xf, prepared):
        w1, b1, w2, b2, w3, b3, w4, b4 = prepared
        B = xd_last.shape[0]

        # batch padding / block selection (static under jit)
        Bp = max(8, ((B + 7) // 8) * 8)
        if Bp <= MAX_BLOCK_B:
            block_b = Bp
        else:
            block_b = MAX_BLOCK_B
            Bp = ((Bp + MAX_BLOCK_B - 1) // MAX_BLOCK_B) * MAX_BLOCK_B

        bf16 = jnp.bfloat16
        xd_p = jnp.pad(xd_last, ((0, Bp - B), (0, XD_PAD - XD_DIM))).astype(bf16)
        xf_p = jnp.pad(xf, ((0, Bp - B), (0, XF_PAD - XF_DIM))).astype(bf16)

        grid = (Bp // block_b,)
        act = lambda i: (i, 0)          # activation tiles stream over the batch
        res = lambda i: (0, 0)          # weights/biases stay resident

        def rspec(arr):
            return pl.BlockSpec(arr.shape, res, **resident_kwargs)

        out_p = pl.pallas_call(
            _mlp_kernel,
            out_shape=jax.ShapeDtypeStruct((Bp, D_OUTP), jnp.float32),
            grid=grid,
            in_specs=[
                pl.BlockSpec((block_b, XD_PAD), act),
                pl.BlockSpec((block_b, XF_PAD), act),
                rspec(w1), rspec(b1), rspec(w2), rspec(b2),
                rspec(w3), rspec(b3), rspec(w4), rspec(b4),
            ],
            out_specs=pl.BlockSpec((block_b, D_OUTP), act),
            compiler_params=pltpu.CompilerParams(
                dimension_semantics=(
                    ("parallel",) if grid[0] >= 4 else ("arbitrary",)),
                vmem_limit_bytes=32 << 20),
        )(xd_p, xf_p, w1, b1, w2, b2, w3, b3, w4, b4)

        return out_p[:B, :D_OUT]

    return fwd


_forwards = {}
_buffer_count = 1   # single-buffer resident weights; fall back if unsupported


def dnn_forward(x, xd, xf, prepared):
    """Reproduces DNN.forward(x, xd, xf).

    cat((x, xd, xf.repeat), 2)[:, -1, 181:]  ==  concat([xd[:, -1, :], xf], 1)
    (x only contributes columns 0..180, which are sliced away).
    """
    global _buffer_count
    xd_last = xd[:, -1, :]
    try:
        if _buffer_count not in _forwards:
            _forwards[_buffer_count] = _make_forward(_buffer_count)
        return _forwards[_buffer_count](xd_last, xf, prepared)
    except Exception:
        if _buffer_count is None:
            raise
        # pl.Buffered(1) not accepted by this JAX version -> default pipelining.
        _buffer_count = None
        if None not in _forwards:
            _forwards[None] = _make_forward(None)
        return _forwards[None](xd_last, xf, prepared)


# ----------------------------- parameter init ------------------------------

def init_params(key):
    """PyTorch nn.Linear-style init; weights stored (in, out) so y = x @ W + b."""
    dims = [(D_IN, H1), (H1, H2), (H2, H3), (H3, D_OUT)]
    params = []
    for fan_in, fan_out in dims:
        key, kw, kb = jax.random.split(key, 3)
        bound = 1.0 / (fan_in ** 0.5)
        w = jax.random.uniform(kw, (fan_in, fan_out), jnp.float32, -bound, bound)
        b = jax.random.uniform(kb, (fan_out,), jnp.float32, -bound, bound)
        params += [w, b]
    return tuple(params)


# --------------------------------- main -------------------------------------

if __name__ == "__main__":
    key = jax.random.PRNGKey(0)
    kp, kx, kxd, kxf = jax.random.split(key, 4)

    params = init_params(kp)
    prepared = jax.block_until_ready(prepare_params(params))   # one-time prep

    # small shapes consistent with the forward pass:
    #   concat feature dim = 181 + 120 + 65 = 366, so [:, 181:] -> 185 = fc1 in
    B, T = 2, 8
    x = jax.random.normal(kx, (B, T, 181), jnp.float32)
    xd = jax.random.normal(kxd, (B, T, 120), jnp.float32)
    xf = jax.random.normal(kxf, (B, 65), jnp.float32)

    out = jax.block_until_ready(dnn_forward(x, xd, xf, prepared))
    assert out.shape == (B, D_OUT), out.shape

    # sanity check against the fp32 reference of the original module math
    # (tolerance loosened because weights/activations are bf16 on the MXU)
    feat = jnp.concatenate(
        (x, xd, jnp.repeat(xf[:, None, :], T, axis=1)), axis=2)[:, -1, 181:]
    w1, b1, w2, b2, w3, b3, w4, b4 = params
    ref = jnp.tanh(feat @ w1 + b1)
    ref = jnp.tanh(ref @ w2 + b2)
    ref = jax.nn.sigmoid(ref @ w3 + b3)
    ref = ref @ w4 + b4
    max_err = float(jnp.max(jnp.abs(out - ref)))
    assert jnp.allclose(out, ref, atol=1e-2, rtol=1e-2), max_err

    # TODO(synk): nn.Dropout(p=0.25) is defined but never used in forward(); nothing to emit.
    print("KERNEL_OK")
</pallas_src>

<mosaic_0001>
module attributes {stable_mosaic.version = 11 : i64} {
  func.func @_mlp_kernel(%arg0: i32, %arg1: memref<8x128xbf16, #tpu.memory_space<vmem>>, %arg2: memref<8x128xbf16, #tpu.memory_space<vmem>>, %arg3: memref<256x1024xbf16, #tpu.memory_space<vmem>>, %arg4: memref<1x1024xf32, #tpu.memory_space<vmem>>, %arg5: memref<1024x512xbf16, #tpu.memory_space<vmem>>, %arg6: memref<1x512xf32, #tpu.memory_space<vmem>>, %arg7: memref<512x256xbf16, #tpu.memory_space<vmem>>, %arg8: memref<1x256xf32, #tpu.memory_space<vmem>>, %arg9: memref<256x256xbf16, #tpu.memory_space<vmem>>, %arg10: memref<1x256xf32, #tpu.memory_space<vmem>>, %arg11: memref<8x256xf32, #tpu.memory_space<vmem>>) attributes {dimension_semantics = [#tpu.dimension_semantics<arbitrary>], iteration_bounds = array<i64: 1>, scalar_prefetch = 0 : i64, scratch_operands = 0 : i64, tpu.core_type = #tpu.core_type<tc>, window_params = [{transform_indices = @transform_0, window_bounds = array<i64: 8, 128>}, {transform_indices = @transform_1, window_bounds = array<i64: 8, 128>}, {pipeline_mode = #tpu.pipeline_mode<synchronous>, transform_indices = @transform_2, window_bounds = array<i64: 256, 1024>}, {pipeline_mode = #tpu.pipeline_mode<synchronous>, transform_indices = @transform_3, window_bounds = array<i64: 1, 1024>}, {pipeline_mode = #tpu.pipeline_mode<synchronous>, transform_indices = @transform_4, window_bounds = array<i64: 1024, 512>}, {pipeline_mode = #tpu.pipeline_mode<synchronous>, transform_indices = @transform_5, window_bounds = array<i64: 1, 512>}, {pipeline_mode = #tpu.pipeline_mode<synchronous>, transform_indices = @transform_6, window_bounds = array<i64: 512, 256>}, {pipeline_mode = #tpu.pipeline_mode<synchronous>, transform_indices = @transform_7, window_bounds = array<i64: 1, 256>}, {pipeline_mode = #tpu.pipeline_mode<synchronous>, transform_indices = @transform_8, window_bounds = array<i64: 256, 256>}, {pipeline_mode = #tpu.pipeline_mode<synchronous>, transform_indices = @transform_9, window_bounds = array<i64: 1, 256>}, {transform_indices = @transform_10, window_bounds = array<i64: 8, 256>}]} {
    %c0 = arith.constant 0 : index
    %c0_0 = arith.constant 0 : index
    %0 = vector.load %arg1[%c0, %c0_0] : memref<8x128xbf16, #tpu.memory_space<vmem>>, vector<8x128xbf16>
    %c0_1 = arith.constant 0 : index
    %c0_2 = arith.constant 0 : index
    %1 = vector.load %arg2[%c0_1, %c0_2] : memref<8x128xbf16, #tpu.memory_space<vmem>>, vector<8x128xbf16>
    %2 = tpu.concatenate %0, %1 in 1 : vector<8x128xbf16>, vector<8x128xbf16> -> vector<8x256xbf16>
    %c0_3 = arith.constant 0 : index
    %c0_4 = arith.constant 0 : index
    %3 = vector.load %arg3[%c0_3, %c0_4] : memref<256x1024xbf16, #tpu.memory_space<vmem>>, vector<256x1024xbf16>
    %cst = arith.constant dense<0.000000e+00> : vector<8x1024xf32>
    %4 = tpu.matmul %2, %3, %cst {dimension_numbers = #tpu.dot_dimension_numbers<[1], [0], [0], [1], [0, 0, 1, 1], [], []>} : vector<8x256xbf16>, vector<256x1024xbf16>, vector<8x1024xf32> -> vector<8x1024xf32>
    %c0_5 = arith.constant 0 : index
    %c0_6 = arith.constant 0 : index
    %5 = vector.load %arg4[%c0_5, %c0_6] : memref<1x1024xf32, #tpu.memory_space<vmem>>, vector<1x1024xf32>
    %6 = vector.broadcast %5 : vector<1x1024xf32> to vector<8x1024xf32>
    %7 = arith.addf %4, %6 : vector<8x1024xf32>
    %8 = math.tanh %7 : vector<8x1024xf32>
    %9 = arith.truncf %8 : vector<8x1024xf32> to vector<8x1024xbf16>
    %c0_7 = arith.constant 0 : index
    %c0_8 = arith.constant 0 : index
    %10 = vector.load %arg5[%c0_7, %c0_8] : memref<1024x512xbf16, #tpu.memory_space<vmem>>, vector<1024x512xbf16>
    %cst_9 = arith.constant dense<0.000000e+00> : vector<8x512xf32>
    %11 = tpu.matmul %9, %10, %cst_9 {dimension_numbers = #tpu.dot_dimension_numbers<[1], [0], [0], [1], [0, 0, 1, 1], [], []>} : vector<8x1024xbf16>, vector<1024x512xbf16>, vector<8x512xf32> -> vector<8x512xf32>
    %c0_10 = arith.constant 0 : index
    %c0_11 = arith.constant 0 : index
    %12 = vector.load %arg6[%c0_10, %c0_11] : memref<1x512xf32, #tpu.memory_space<vmem>>, vector<1x512xf32>
    %13 = vector.broadcast %12 : vector<1x512xf32> to vector<8x512xf32>
    %14 = arith.addf %11, %13 : vector<8x512xf32>
    %15 = math.tanh %14 : vector<8x512xf32>
    %16 = arith.truncf %15 : vector<8x512xf32> to vector<8x512xbf16>
    %c0_12 = arith.constant 0 : index
    %c0_13 = arith.constant 0 : index
    %17 = vector.load %arg7[%c0_12, %c0_13] : memref<512x256xbf16, #tpu.memory_space<vmem>>, vector<512x256xbf16>
    %cst_14 = arith.constant dense<0.000000e+00> : vector<8x256xf32>
    %18 = tpu.matmul %16, %17, %cst_14 {dimension_numbers = #tpu.dot_dimension_numbers<[1], [0], [0], [1], [0, 0, 1, 1], [], []>} : vector<8x512xbf16>, vector<512x256xbf16>, vector<8x256xf32> -> vector<8x256xf32>
    %c0_15 = arith.constant 0 : index
    %c0_16 = arith.constant 0 : index
    %19 = vector.load %arg8[%c0_15, %c0_16] : memref<1x256xf32, #tpu.memory_space<vmem>>, vector<1x256xf32>
    %20 = vector.broadcast %19 : vector<1x256xf32> to vector<8x256xf32>
    %21 = arith.addf %18, %20 : vector<8x256xf32>
    %22 = arith.negf %21 : vector<8x256xf32>
    %23 = math.exp %22 : vector<8x256xf32>
    %cst_17 = arith.constant 1.000000e+00 : f32
    %24 = vector.broadcast %cst_17 : f32 to vector<8x256xf32>
    %25 = arith.addf %24, %23 : vector<8x256xf32>
    %26 = arith.divf %24, %25 : vector<8x256xf32>
    %27 = arith.truncf %26 : vector<8x256xf32> to vector<8x256xbf16>
    %c0_18 = arith.constant 0 : index
    %c0_19 = arith.constant 0 : index
    %28 = vector.load %arg9[%c0_18, %c0_19] : memref<256x256xbf16, #tpu.memory_space<vmem>>, vector<256x256xbf16>
    %cst_20 = arith.constant dense<0.000000e+00> : vector<8x256xf32>
    %29 = tpu.matmul %27, %28, %cst_20 {dimension_numbers = #tpu.dot_dimension_numbers<[1], [0], [0], [1], [0, 0, 1, 1], [], []>} : vector<8x256xbf16>, vector<256x256xbf16>, vector<8x256xf32> -> vector<8x256xf32>
    %c0_21 = arith.constant 0 : index
    %c0_22 = arith.constant 0 : index
    %30 = vector.load %arg10[%c0_21, %c0_22] : memref<1x256xf32, #tpu.memory_space<vmem>>, vector<1x256xf32>
    %31 = vector.broadcast %30 : vector<1x256xf32> to vector<8x256xf32>
    %32 = arith.addf %29, %31 : vector<8x256xf32>
    %c0_23 = arith.constant 0 : index
    %c0_24 = arith.constant 0 : index
    %33 = vector.load %arg11[%c0_23, %c0_24] : memref<8x256xf32, #tpu.memory_space<vmem>>, vector<8x256xf32>
    tpu.vector_store %arg11[%c0_23, %c0_24], %32 {strides = array<i32>} : memref<8x256xf32, #tpu.memory_space<vmem>>, vector<8x256xf32>,
    return
  }
  func.func @transform_0(%arg0: i32) -> (i32, i32) {
    %c0_i32 = arith.constant 0 : i32
    %c0_i32_0 = arith.constant 0 : i32
    return %arg0, %c0_i32 : i32, i32
  }
  func.func @transform_1(%arg0: i32) -> (i32, i32) {
    %c0_i32 = arith.constant 0 : i32
    %c0_i32_0 = arith.constant 0 : i32
    return %arg0, %c0_i32 : i32, i32
  }
  func.func @transform_2(%arg0: i32) -> (i32, i32) {
    %c0_i32 = arith.constant 0 : i32
    %c0_i32_0 = arith.constant 0 : i32
    %c0_i32_1 = arith.constant 0 : i32
    return %c0_i32, %c0_i32_0 : i32, i32
  }
  func.func @transform_3(%arg0: i32) -> (i32, i32) {
    %c0_i32 = arith.constant 0 : i32
    %c0_i32_0 = arith.constant 0 : i32
    %c0_i32_1 = arith.constant 0 : i32
    return %c0_i32, %c0_i32_0 : i32, i32
  }
  func.func @transform_4(%arg0: i32) -> (i32, i32) {
    %c0_i32 = arith.constant 0 : i32
    %c0_i32_0 = arith.constant 0 : i32
    %c0_i32_1 = arith.constant 0 : i32
    return %c0_i32, %c0_i32_0 : i32, i32
  }
  func.func @transform_5(%arg0: i32) -> (i32, i32) {
    %c0_i32 = arith.constant 0 : i32
    %c0_i32_0 = arith.constant 0 : i32
    %c0_i32_1 = arith.constant 0 : i32
    return %c0_i32, %c0_i32_0 : i32, i32
  }
  func.func @transform_6(%arg0: i32) -> (i32, i32) {
    %c0_i32 = arith.constant 0 : i32
    %c0_i32_0 = arith.constant 0 : i32
    %c0_i32_1 = arith.constant 0 : i32
    return %c0_i32, %c0_i32_0 : i32, i32
  }
  func.func @transform_7(%arg0: i32) -> (i32, i32) {
    %c0_i32 = arith.constant 0 : i32
    %c0_i32_0 = arith.constant 0 : i32
    %c0_i32_1 = arith.constant 0 : i32
    return %c0_i32, %c0_i32_0 : i32, i32
  }
  func.func @transform_8(%arg0: i32) -> (i32, i32) {
    %c0_i32 = arith.constant 0 : i32
    %c0_i32_0 = arith.constant 0 : i32
    %c0_i32_1 = arith.constant 0 : i32
    return %c0_i32, %c0_i32_0 : i32, i32
  }
  func.func @transform_9(%arg0: i32) -> (i32, i32) {
    %c0_i32 = arith.constant 0 : i32
    %c0_i32_0 = arith.constant 0 : i32
    %c0_i32_1 = arith.constant 0 : i32
    return %c0_i32, %c0_i32_0 : i32, i32
  }
  func.func @transform_10(%arg0: i32) -> (i32, i32) {
    %c0_i32 = arith.constant 0 : i32
    %c0_i32_0 = arith.constant 0 : i32
    return %arg0, %c0_i32 : i32, i32
  }
}

module attributes {stable_mosaic.version = 11 : i64} {
  func.func @_mlp_kernel(%arg0: i32, %arg1: memref<8x128xbf16, #tpu.memory_space<vmem>>, %arg2: memref<8x128xbf16, #tpu.memory_space<vmem>>, %arg3: memref<256x1024xbf16, #tpu.memory_space<vmem>>, %arg4: memref<1x1024xf32, #tpu.memory_space<vmem>>, %arg5: memref<1024x512xbf16, #tpu.memory_space<vmem>>, %arg6: memref<1x512xf32, #tpu.memory_space<vmem>>, %arg7: memref<512x256xbf16, #tpu.memory_space<vmem>>, %arg8: memref<1x256xf32, #tpu.memory_space<vmem>>, %arg9: memref<256x256xbf16, #tpu.memory_space<vmem>>, %arg10: memref<1x256xf32, #tpu.memory_space<vmem>>, %arg11: memref<8x256xf32, #tpu.memory_space<vmem>>) attributes {dimension_semantics = [#tpu.dimension_semantics<arbitrary>], iteration_bounds = array<i64: 1>, scalar_prefetch = 0 : i64, scratch_operands = 0 : i64, tpu.core_type = #tpu.core_type<tc>, window_params = [{transform_indices = @transform_0, window_bounds = array<i64: 8, 128>}, {transform_indices = @transform_1, window_bounds = array<i64: 8, 128>}, {pipeline_mode = #tpu.pipeline_mode<synchronous>, transform_indices = @transform_2, window_bounds = array<i64: 256, 1024>}, {pipeline_mode = #tpu.pipeline_mode<synchronous>, transform_indices = @transform_3, window_bounds = array<i64: 1, 1024>}, {pipeline_mode = #tpu.pipeline_mode<synchronous>, transform_indices = @transform_4, window_bounds = array<i64: 1024, 512>}, {pipeline_mode = #tpu.pipeline_mode<synchronous>, transform_indices = @transform_5, window_bounds = array<i64: 1, 512>}, {pipeline_mode = #tpu.pipeline_mode<synchronous>, transform_indices = @transform_6, window_bounds = array<i64: 512, 256>}, {pipeline_mode = #tpu.pipeline_mode<synchronous>, transform_indices = @transform_7, window_bounds = array<i64: 1, 256>}, {pipeline_mode = #tpu.pipeline_mode<synchronous>, transform_indices = @transform_8, window_bounds = array<i64: 256, 256>}, {pipeline_mode = #tpu.pipeline_mode<synchronous>, transform_indices = @transform_9, window_bounds = array<i64: 1, 256>}, {transform_indices = @transform_10, window_bounds = array<i64: 8, 256>}]} {
    %c0 = arith.constant 0 : index
    %c0_0 = arith.constant 0 : index
    %0 = vector.load %arg1[%c0, %c0_0] : memref<8x128xbf16, #tpu.memory_space<vmem>>, vector<8x128xbf16>
    %c0_1 = arith.constant 0 : index
    %c0_2 = arith.constant 0 : index
    %1 = vector.load %arg2[%c0_1, %c0_2] : memref<8x128xbf16, #tpu.memory_space<vmem>>, vector<8x128xbf16>
    %2 = tpu.concatenate %0, %1 in 1 : vector<8x128xbf16>, vector<8x128xbf16> -> vector<8x256xbf16>
    %c0_3 = arith.constant 0 : index
    %c0_4 = arith.constant 0 : index
    %3 = vector.load %arg3[%c0_3, %c0_4] : memref<256x1024xbf16, #tpu.memory_space<vmem>>, vector<256x1024xbf16>
    %cst = arith.constant dense<0.000000e+00> : vector<8x1024xf32>
    %4 = tpu.matmul %2, %3, %cst {dimension_numbers = #tpu.dot_dimension_numbers<[1], [0], [0], [1], [0, 0, 1, 1], [], []>} : vector<8x256xbf16>, vector<256x1024xbf16>, vector<8x1024xf32> -> vector<8x1024xf32>
    %c0_5 = arith.constant 0 : index
    %c0_6 = arith.constant 0 : index
    %5 = vector.load %arg4[%c0_5, %c0_6] : memref<1x1024xf32, #tpu.memory_space<vmem>>, vector<1x1024xf32>
    %6 = vector.broadcast %5 : vector<1x1024xf32> to vector<8x1024xf32>
    %7 = arith.addf %4, %6 : vector<8x1024xf32>
    %8 = math.tanh %7 : vector<8x1024xf32>
    %9 = arith.truncf %8 : vector<8x1024xf32> to vector<8x1024xbf16>
    %c0_7 = arith.constant 0 : index
    %c0_8 = arith.constant 0 : index
    %10 = vector.load %arg5[%c0_7, %c0_8] : memref<1024x512xbf16, #tpu.memory_space<vmem>>, vector<1024x512xbf16>
    %cst_9 = arith.constant dense<0.000000e+00> : vector<8x512xf32>
    %11 = tpu.matmul %9, %10, %cst_9 {dimension_numbers = #tpu.dot_dimension_numbers<[1], [0], [0], [1], [0, 0, 1, 1], [], []>} : vector<8x1024xbf16>, vector<1024x512xbf16>, vector<8x512xf32> -> vector<8x512xf32>
    %c0_10 = arith.constant 0 : index
    %c0_11 = arith.constant 0 : index
    %12 = vector.load %arg6[%c0_10, %c0_11] : memref<1x512xf32, #tpu.memory_space<vmem>>, vector<1x512xf32>
    %13 = vector.broadcast %12 : vector<1x512xf32> to vector<8x512xf32>
    %14 = arith.addf %11, %13 : vector<8x512xf32>
    %15 = math.tanh %14 : vector<8x512xf32>
    %16 = arith.truncf %15 : vector<8x512xf32> to vector<8x512xbf16>
    %c0_12 = arith.constant 0 : index
    %c0_13 = arith.constant 0 : index
    %17 = vector.load %arg7[%c0_12, %c0_13] : memref<512x256xbf16, #tpu.memory_space<vmem>>, vector<512x256xbf16>
    %cst_14 = arith.constant dense<0.000000e+00> : vector<8x256xf32>
    %18 = tpu.matmul %16, %17, %cst_14 {dimension_numbers = #tpu.dot_dimension_numbers<[1], [0], [0], [1], [0, 0, 1, 1], [], []>} : vector<8x512xbf16>, vector<512x256xbf16>, vector<8x256xf32> -> vector<8x256xf32>
    %c0_15 = arith.constant 0 : index
    %c0_16 = arith.constant 0 : index
    %19 = vector.load %arg8[%c0_15, %c0_16] : memref<1x256xf32, #tpu.memory_space<vmem>>, vector<1x256xf32>
    %20 = vector.broadcast %19 : vector<1x256xf32> to vector<8x256xf32>
    %21 = arith.addf %18, %20 : vector<8x256xf32>
    %22 = arith.negf %21 : vector<8x256xf32>
    %23 = math.exp %22 : vector<8x256xf32>
    %cst_17 = arith.constant 1.000000e+00 : f32
    %24 = vector.broadcast %cst_17 : f32 to vector<8x256xf32>
    %25 = arith.addf %24, %23 : vector<8x256xf32>
    %26 = arith.divf %24, %25 : vector<8x256xf32>
    %27 = arith.truncf %26 : vector<8x256xf32> to vector<8x256xbf16>
    %c0_18 = arith.constant 0 : index
    %c0_19 = arith.constant 0 : index
    %28 = vector.load %arg9[%c0_18, %c0_19] : memref<256x256xbf16, #tpu.memory_space<vmem>>, vector<256x256xbf16>
    %cst_20 = arith.constant dense<0.000000e+00> : vector<8x256xf32>
    %29 = tpu.matmul %27, %28, %cst_20 {dimension_numbers = #tpu.dot_dimension_numbers<[1], [0], [0], [1], [0, 0, 1, 1], [], []>} : vector<8x256xbf16>, vector<256x256xbf16>, vector<8x256xf32> -> vector<8x256xf32>
    %c0_21 = arith.constant 0 : index
    %c0_22 = arith.constant 0 : index
    %30 = vector.load %arg10[%c0_21, %c0_22] : memref<1x256xf32, #tpu.memory_space<vmem>>, vector<1x256xf32>
    %31 = vector.broadcast %30 : vector<1x256xf32> to vector<8x256xf32>
    %32 = arith.addf %29, %31 : vector<8x256xf32>
    %c0_23 = arith.constant 0 : index
    %c0_24 = arith.constant 0 : index
    %33 = vector.load %arg11[%c0_23, %c0_24] : memref<8x256xf32, #tpu.memory_space<vmem>>, vector<8x256xf32>
    tpu.vector_store %arg11[%c0_23, %c0_24], %32 {strides = array<i32>} : memref<8x256xf32, #tpu.memory_space<vmem>>, vector<8x256xf32>,
    return
  }
  func.func @transform_0(%arg0: i32) -> (i32, i32) {
    %c0_i32 = arith.constant 0 : i32
    %c0_i32_0 = arith.constant 0 : i32
    return %arg0, %c0_i32 : i32, i32
  }
  func.func @transform_1(%arg0: i32) -> (i32, i32) {
    %c0_i32 = arith.constant 0 : i32
    %c0_i32_0 = arith.constant 0 : i32
    return %arg0, %c0_i32 : i32, i32
  }
  func.func @transform_2(%arg0: i32) -> (i32, i32) {
    %c0_i32 = arith.constant 0 : i32
    %c0_i32_0 = arith.constant 0 : i32
    %c0_i32_1 = arith.constant 0 : i32
    return %c0_i32, %c0_i32_0 : i32, i32
  }
  func.func @transform_3(%arg0: i32) -> (i32, i32) {
    %c0_i32 = arith.constant 0 : i32
    %c0_i32_0 = arith.constant 0 : i32
    %c0_i32_1 = arith.constant 0 : i32
    return %c0_i32, %c0_i32_0 : i32, i32
  }
  func.func @transform_4(%arg0: i32) -> (i32, i32) {
    %c0_i32 = arith.constant 0 : i32
    %c0_i32_0 = arith.constant 0 : i32
    %c0_i32_1 = arith.constant 0 : i32
    return %c0_i32, %c0_i32_0 : i32, i32
  }
  func.func @transform_5(%arg0: i32) -> (i32, i32) {
    %c0_i32 = arith.constant 0 : i32
    %c0_i32_0 = arith.constant 0 : i32
    %c0_i32_1 = arith.constant 0 : i32
    return %c0_i32, %c0_i32_0 : i32, i32
  }
  func.func @transform_6(%arg0: i32) -> (i32, i32) {
    %c0_i32 = arith.constant 0 : i32
    %c0_i32_0 = arith.constant 0 : i32
    %c0_i32_1 = arith.constant 0 : i32
    return %c0_i32, %c0_i32_0 : i32, i32
  }
  func.func @transform_7(%arg0: i32) -> (i32, i32) {
    %c0_i32 = arith.constant 0 : i32
    %c0_i32_0 = arith.constant 0 : i32
    %c0_i32_1 = arith.constant 0 : i32
    return %c0_i32, %c0_i32_0 : i32, i32
  }
  func.func @transform_8(%arg0: i32) -> (i32, i32) {
    %c0_i32 = arith.constant 0 : i32
    %c0_i32_0 = arith.constant 0 : i32
    %c0_i32_1 = arith.constant 0 : i32
    return %c0_i32, %c0_i32_0 : i32, i32
  }
  func.func @transform_9(%arg0: i32) -> (i32, i32) {
    %c0_i32 = arith.constant 0 : i32
    %c0_i32_0 = arith.constant 0 : i32
    %c0_i32_1 = arith.constant 0 : i32
    return %c0_i32, %c0_i32_0 : i32, i32
  }
  func.func @transform_10(%arg0: i32) -> (i32, i32) {
    %c0_i32 = arith.constant 0 : i32
    %c0_i32_0 = arith.constant 0 : i32
    return %arg0, %c0_i32 : i32, i32
  }
}

</mosaic_0001>

<llo_original>
// kernel: fwd.1
$region0: #{fwd.1}
  #allocation0 [shape = 'u32[]', space=smem, size = 0x4, offset = 0x4, fixed_abs, tag = 'smem constant byte address 0x4 - core index']
  #allocation1 [shape = 'u32[144,128]{1,0:T(1,128)}', space=vmem, size = 0x12000, scoped, tag = 'internal scratch']
  %s0 = inlined_call_operand.vmem [shape: bf16[8,128], index: 0, kind: input, shape index: {}]
  %s1 = inlined_call_operand.vmem [shape: bf16[8,128], index: 1, kind: input, shape index: {}]
  %s2 = inlined_call_operand.hbm [shape: bf16[256,1024], index: 2, kind: input, shape index: {}]
  %s3 = inlined_call_operand.vmem [shape: f32[1,1024], index: 3, kind: input, shape index: {}]
  %s4 = inlined_call_operand.hbm [shape: bf16[1024,512], index: 4, kind: input, shape index: {}]
  %s5 = inlined_call_operand.vmem [shape: f32[1,512], index: 5, kind: input, shape index: {}]
  %s6 = inlined_call_operand.hbm [shape: bf16[512,256], index: 6, kind: input, shape index: {}]
  %s7 = inlined_call_operand.vmem [shape: f32[1,256], index: 7, kind: input, shape index: {}]
  %s8 = inlined_call_operand.hbm [shape: bf16[256,256], index: 8, kind: input, shape index: {}]
  %s9 = inlined_call_operand.vmem [shape: f32[1,256], index: 9, kind: input, shape index: {}]
  %s10 = inlined_call_operand.vmem [shape: f32[8,256], index: 10, kind: output, shape index: {}]
  %s11 = sld [smem:[#allocation0]]
  $region66: #{fwd.1} parent=0
    _
  %s13 = ssub.s32 1, %s11
  %s14 = scalar_select 0, %s13, %s11
  $region1: #{fwd.1} parent=0
    #allocation2 [shape = 'u8[524288]{0}', space=vmem, size = 0x80000, scoped, tag = 'input window, operand 2, single buffered']
    #allocation3 [shape = 's32[1]{0}', space=sflag, size = 0x4, scoped, tag = 'scoped memory for fwd.1']
    #allocation4 [shape = 'u8[1048576]{0}', space=vmem, size = 0x100000, scoped, tag = 'input window, operand 4, single buffered']
    #allocation5 [shape = 's32[1]{0}', space=sflag, size = 0x4, scoped, tag = 'scoped memory for fwd.1']
    #allocation6 [shape = 'u8[262144]{0}', space=vmem, size = 0x40000, scoped, tag = 'input window, operand 6, single buffered']
    #allocation7 [shape = 'u8[131072]{0}', space=vmem, size = 0x20000, scoped, tag = 'input window, operand 8, single buffered']
    #allocation8 [shape = 's32[1]{0}', space=sflag, size = 0x4, scoped, tag = 'scoped memory for fwd.1']
    %15 = vsyncpa [#allocation3], 0
    %16 = vsyncpa [#allocation5], 0
    %17 = vsyncpa [#allocation8], 0
    // Predicated region
    $region2: #{fwd.1} parent=1 // pred_check
      _
    $region3: #{fwd.1} parent=1 // pred_check_branch
      %19 = sbr.rel (0) target = $region5
    $region4: #{fwd.1} parent=1 // pred_region
      _
    $region5: #{fwd.1} parent=1 // pred_fallthru
      _
    // Predicated region
    $region6: #{fwd.1} parent=1 // pred_check
      _
    $region7: #{fwd.1} parent=1 // pred_check_branch
      %21 = sbr.rel (0) target = $region9
    $region8: #{fwd.1} parent=1 // pred_region
      _
    $region9: #{fwd.1} parent=1 // pred_fallthru
      _
    // Predicated region
    $region10: #{fwd.1} parent=1 // pred_check
      _
    $region11: #{fwd.1} parent=1 // pred_check_branch
      %23 = sbr.rel (0) target = $region13
    $region12: #{fwd.1} parent=1 // pred_region
      %s25 = ssub.s32 16384, 16384
      %26 = vsyncadd [#allocation3], %s25
      %s27 = sshll.u32 [#allocation2], 4
      %s28 = int_to_ptr.vmem [resolvable:$true] %s27
      %33 = dma.hbm_to_vmem [thread:$0]  %s2, 16384, %s28, [#allocation3], 512, 512, 32
    $region13: #{fwd.1} parent=1 // pred_fallthru
      _
    // Predicated region
    $region14: #{fwd.1} parent=1 // pred_check
      _
    $region15: #{fwd.1} parent=1 // pred_check_branch
      %35 = sbr.rel (0) target = $region17
    $region16: #{fwd.1} parent=1 // pred_region
      _
    $region17: #{fwd.1} parent=1 // pred_fallthru
      _
    // Predicated region
    $region18: #{fwd.1} parent=1 // pred_check
      _
    $region19: #{fwd.1} parent=1 // pred_check_branch
      %37 = sbr.rel (0) target = $region21
    $region20: #{fwd.1} parent=1 // pred_region
      %s39 = ssub.s32 32768, 32768
      %40 = vsyncadd [#allocation5], %s39
      %s41 = sshll.u32 [#allocation4], 4
      %s42 = int_to_ptr.vmem [resolvable:$true] %s41
      %47 = dma.hbm_to_vmem [thread:$0]  %s4, 32768, %s42, [#allocation5], 256, 256, 16
    $region21: #{fwd.1} parent=1 // pred_fallthru
      _
    // Predicated region
    $region22: #{fwd.1} parent=1 // pred_check
      _
    $region23: #{fwd.1} parent=1 // pred_check_branch
      %49 = sbr.rel (0) target = $region25
    $region24: #{fwd.1} parent=1 // pred_region
      _
    $region25: #{fwd.1} parent=1 // pred_fallthru
      _
    // Predicated region
    $region26: #{fwd.1} parent=1 // pred_check
      _
    $region27: #{fwd.1} parent=1 // pred_check_branch
      %51 = sbr.rel (0) target = $region29
    $region28: #{fwd.1} parent=1 // pred_region
      %s53 = ssub.s32 8192, 8192
      %54 = vsyncadd [#allocation5], %s53
      %s55 = sshll.u32 [#allocation6], 4
      %s56 = int_to_ptr.vmem [resolvable:$true] %s55
      %61 = dma.hbm_to_vmem [thread:$0]  %s6, 8192, %s56, [#allocation5], 128, 128, 8
    $region29: #{fwd.1} parent=1 // pred_fallthru
      _
    // Predicated region
    $region30: #{fwd.1} parent=1 // pred_check
      _
    $region31: #{fwd.1} parent=1 // pred_check_branch
      %63 = sbr.rel (0) target = $region33
    $region32: #{fwd.1} parent=1 // pred_region
      _
    $region33: #{fwd.1} parent=1 // pred_fallthru
      _
    // Predicated region
    $region34: #{fwd.1} parent=1 // pred_check
      _
    $region35: #{fwd.1} parent=1 // pred_check_branch
      %65 = sbr.rel (0) target = $region37
    $region36: #{fwd.1} parent=1 // pred_region
      %s67 = ssub.s32 4096, 4096
      %68 = vsyncadd [#allocation8], %s67
      %s69 = sshll.u32 [#allocation7], 4
      %s70 = int_to_ptr.vmem [resolvable:$true] %s69
      %75 = dma.hbm_to_vmem [thread:$0]  %s8, 4096, %s70, [#allocation8], 128, 128, 8
    $region37: #{fwd.1} parent=1 // pred_fallthru
      _
    // Predicated region
    $region38: #{fwd.1} parent=1 // pred_check
      _
    $region39: #{fwd.1} parent=1 // pred_check_branch
      %77 = sbr.rel (0) target = $region41
    $region40: #{fwd.1} parent=1 // pred_region
      _
    $region41: #{fwd.1} parent=1 // pred_fallthru
      _
    // Predicated region
    $region42: #{fwd.1} parent=1 // pred_check
      _
    $region43: #{fwd.1} parent=1 // pred_check_branch
      %79 = sbr.rel (0) target = $region45
    $region44: #{fwd.1} parent=1 // pred_region
      %80 = dma.done [#allocation3], 16384
    $region45: #{fwd.1} parent=1 // pred_fallthru
      _
    // Predicated region
    $region46: #{fwd.1} parent=1 // pred_check
      _
    $region47: #{fwd.1} parent=1 // pred_check_branch
      %82 = sbr.rel (0) target = $region49
    $region48: #{fwd.1} parent=1 // pred_region
      %83 = dma.done [#allocation5], 32768
    $region49: #{fwd.1} parent=1 // pred_fallthru
      _
    // Predicated region
    $region50: #{fwd.1} parent=1 // pred_check
      _
    $region51: #{fwd.1} parent=1 // pred_check_branch
      %85 = sbr.rel (0) target = $region53
    $region52: #{fwd.1} parent=1 // pred_region
      %86 = dma.done [#allocation5], 8192
    $region53: #{fwd.1} parent=1 // pred_fallthru
      _
    // Predicated region
    $region54: #{fwd.1} parent=1 // pred_check
      _
    $region55: #{fwd.1} parent=1 // pred_check_branch
      %88 = sbr.rel (0) target = $region57
    $region56: #{fwd.1} parent=1 // pred_region
      %89 = dma.done [#allocation8], 4096
    $region57: #{fwd.1} parent=1 // pred_fallthru
      _
    %v90 = vld [vmem:[%s0] sm:$0xf]
    %v91 = vld [vmem:[%s1] sm:$0xf]
    %v92 = vld [vmem:[#allocation2] sm:$0xff]
    %v93 = vld [vmem:[#allocation2 + $0x8] sm:$0xff]
    %v94 = vld [vmem:[#allocation2 + $0x10] sm:$0xff]
    %v95 = vld [vmem:[#allocation2 + $0x18] sm:$0xff]
    %v96 = vld [vmem:[#allocation2 + $0x20] sm:$0xff]
    %v97 = vld [vmem:[#allocation2 + $0x28] sm:$0xff]
    %v98 = vld [vmem:[#allocation2 + $0x30] sm:$0xff]
    %v99 = vld [vmem:[#allocation2 + $0x38] sm:$0xff]
    %v100 = vld [vmem:[#allocation2 + $0x40] sm:$0xff]
    %v101 = vld [vmem:[#allocation2 + $0x48] sm:$0xff]
    %v102 = vld [vmem:[#allocation2 + $0x50] sm:$0xff]
    %v103 = vld [vmem:[#allocation2 + $0x58] sm:$0xff]
    %v104 = vld [vmem:[#allocation2 + $0x60] sm:$0xff]
    %v105 = vld [vmem:[#allocation2 + $0x68] sm:$0xff]
    %v106 = vld [vmem:[#allocation2 + $0x70] sm:$0xff]
    %v107 = vld [vmem:[#allocation2 + $0x78] sm:$0xff]
    %v108 = vld [vmem:[#allocation2 + $0x80] sm:$0xff]
    %v109 = vld [vmem:[#allocation2 + $0x88] sm:$0xff]
    %v110 = vld [vmem:[#allocation2 + $0x90] sm:$0xff]
    %v111 = vld [vmem:[#allocation2 + $0x98] sm:$0xff]
    %v112 = vld [vmem:[#allocation2 + $0xa0] sm:$0xff]
    %v113 = vld [vmem:[#allocation2 + $0xa8] sm:$0xff]
    %v114 = vld [vmem:[#allocation2 + $0xb0] sm:$0xff]
    %v115 = vld [vmem:[#allocation2 + $0xb8] sm:$0xff]
    %v116 = vld [vmem:[#allocation2 + $0xc0] sm:$0xff]
    %v117 = vld [vmem:[#allocation2 + $0xc8] sm:$0xff]
    %v118 = vld [vmem:[#allocation2 + $0xd0] sm:$0xff]
    %v119 = vld [vmem:[#allocation2 + $0xd8] sm:$0xff]
    %v120 = vld [vmem:[#allocation2 + $0xe0] sm:$0xff]
    %v121 = vld [vmem:[#allocation2 + $0xe8] sm:$0xff]
    %v122 = vld [vmem:[#allocation2 + $0xf0] sm:$0xff]
    %v123 = vld [vmem:[#allocation2 + $0xf8] sm:$0xff]
    %v124 = vld [vmem:[#allocation2 + $0x100] sm:$0xff]
    %v125 = vld [vmem:[#allocation2 + $0x108] sm:$0xff]
    %v126 = vld [vmem:[#allocation2 + $0x110] sm:$0xff]
    %v127 = vld [vmem:[#allocation2 + $0x118] sm:$0xff]
    %v128 = vld [vmem:[#allocation2 + $0x120] sm:$0xff]
    %v129 = vld [vmem:[#allocation2 + $0x128] sm:$0xff]
    %v130 = vld [vmem:[#allocation2 + $0x130] sm:$0xff]
    %v131 = vld [vmem:[#allocation2 + $0x138] sm:$0xff]
    %v132 = vld [vmem:[#allocation2 + $0x140] sm:$0xff]
    %v133 = vld [vmem:[#allocation2 + $0x148] sm:$0xff]
    %v134 = vld [vmem:[#allocation2 + $0x150] sm:$0xff]
    %v135 = vld [vmem:[#allocation2 + $0x158] sm:$0xff]
    %v136 = vld [vmem:[#allocation2 + $0x160] sm:$0xff]
    %v137 = vld [vmem:[#allocation2 + $0x168] sm:$0xff]
    %v138 = vld [vmem:[#allocation2 + $0x170] sm:$0xff]
    %v139 = vld [vmem:[#allocation2 + $0x178] sm:$0xff]
    %v140 = vld [vmem:[#allocation2 + $0x180] sm:$0xff]
    %v141 = vld [vmem:[#allocation2 + $0x188] sm:$0xff]
    %v142 = vld [vmem:[#allocation2 + $0x190] sm:$0xff]
    %v143 = vld [vmem:[#allocation2 + $0x198] sm:$0xff]
    %v144 = vld [vmem:[#allocation2 + $0x1a0] sm:$0xff]
    %v145 = vld [vmem:[#allocation2 + $0x1a8] sm:$0xff]
    %v146 = vld [vmem:[#allocation2 + $0x1b0] sm:$0xff]
    %v147 = vld [vmem:[#allocation2 + $0x1b8] sm:$0xff]
    %v148 = vld [vmem:[#allocation2 + $0x1c0] sm:$0xff]
    %v149 = vld [vmem:[#allocation2 + $0x1c8] sm:$0xff]
    %v150 = vld [vmem:[#allocation2 + $0x1d0] sm:$0xff]
    %v151 = vld [vmem:[#allocation2 + $0x1d8] sm:$0xff]
    %v152 = vld [vmem:[#allocation2 + $0x1e0] sm:$0xff]
    %v153 = vld [vmem:[#allocation2 + $0x1e8] sm:$0xff]
    %v154 = vld [vmem:[#allocation2 + $0x1f0] sm:$0xff]
    %v155 = vld [vmem:[#allocation2 + $0x1f8] sm:$0xff]
    %v156 = vld [vmem:[#allocation2 + $0x200] sm:$0xff]
    %v157 = vld [vmem:[#allocation2 + $0x208] sm:$0xff]
    %v158 = vld [vmem:[#allocation2 + $0x210] sm:$0xff]
    %v159 = vld [vmem:[#allocation2 + $0x218] sm:$0xff]
    %v160 = vld [vmem:[#allocation2 + $0x220] sm:$0xff]
    %v161 = vld [vmem:[#allocation2 + $0x228] sm:$0xff]
    %v162 = vld [vmem:[#allocation2 + $0x230] sm:$0xff]
    %v163 = vld [vmem:[#allocation2 + $0x238] sm:$0xff]
    %v164 = vld [vmem:[#allocation2 + $0x240] sm:$0xff]
    %v165 = vld [vmem:[#allocation2 + $0x248] sm:$0xff]
    %v166 = vld [vmem:[#allocation2 + $0x250] sm:$0xff]
    %v167 = vld [vmem:[#allocation2 + $0x258] sm:$0xff]
    %v168 = vld [vmem:[#allocation2 + $0x260] sm:$0xff]
    %v169 = vld [vmem:[#allocation2 + $0x268] sm:$0xff]
    %v170 = vld [vmem:[#allocation2 + $0x270] sm:$0xff]
    %v171 = vld [vmem:[#allocation2 + $0x278] sm:$0xff]
    %v172 = vld [vmem:[#allocation2 + $0x280] sm:$0xff]
    %v173 = vld [vmem:[#allocation2 + $0x288] sm:$0xff]
    %v174 = vld [vmem:[#allocation2 + $0x290] sm:$0xff]
    %v175 = vld [vmem:[#allocation2 + $0x298] sm:$0xff]
    %v176 = vld [vmem:[#allocation2 + $0x2a0] sm:$0xff]
    %v177 = vld [vmem:[#allocation2 + $0x2a8] sm:$0xff]
    %v178 = vld [vmem:[#allocation2 + $0x2b0] sm:$0xff]
    %v179 = vld [vmem:[#allocation2 + $0x2b8] sm:$0xff]
    %v180 = vld [vmem:[#allocation2 + $0x2c0] sm:$0xff]
    %v181 = vld [vmem:[#allocation2 + $0x2c8] sm:$0xff]
    %v182 = vld [vmem:[#allocation2 + $0x2d0] sm:$0xff]
    %v183 = vld [vmem:[#allocation2 + $0x2d8] sm:$0xff]
    %v184 = vld [vmem:[#allocation2 + $0x2e0] sm:$0xff]
    %v185 = vld [vmem:[#allocation2 + $0x2e8] sm:$0xff]
    %v186 = vld [vmem:[#allocation2 + $0x2f0] sm:$0xff]
    %v187 = vld [vmem:[#allocation2 + $0x2f8] sm:$0xff]
    %v188 = vld [vmem:[#allocation2 + $0x300] sm:$0xff]
    %v189 = vld [vmem:[#allocation2 + $0x308] sm:$0xff]
    %v190 = vld [vmem:[#allocation2 + $0x310] sm:$0xff]
    %v191 = vld [vmem:[#allocation2 + $0x318] sm:$0xff]
    %v192 = vld [vmem:[#allocation2 + $0x320] sm:$0xff]
    %v193 = vld [vmem:[#allocation2 + $0x328] sm:$0xff]
    %v194 = vld [vmem:[#allocation2 + $0x330] sm:$0xff]
    %v195 = vld [vmem:[#allocation2 + $0x338] sm:$0xff]
    %v196 = vld [vmem:[#allocation2 + $0x340] sm:$0xff]
    %v197 = vld [vmem:[#allocation2 + $0x348] sm:$0xff]
    %v198 = vld [vmem:[#allocation2 + $0x350] sm:$0xff]
    %v199 = vld [vmem:[#allocation2 + $0x358] sm:$0xff]
    %v200 = vld [vmem:[#allocation2 + $0x360] sm:$0xff]
    %v201 = vld [vmem:[#allocation2 + $0x368] sm:$0xff]
    %v202 = vld [vmem:[#allocation2 + $0x370] sm:$0xff]
    %v203 = vld [vmem:[#allocation2 + $0x378] sm:$0xff]
    %v204 = vld [vmem:[#allocation2 + $0x380] sm:$0xff]
    %v205 = vld [vmem:[#allocation2 + $0x388] sm:$0xff]
    %v206 = vld [vmem:[#allocation2 + $0x390] sm:$0xff]
    %v207 = vld [vmem:[#allocation2 + $0x398] sm:$0xff]
    %v208 = vld [vmem:[#allocation2 + $0x3a0] sm:$0xff]
    %v209 = vld [vmem:[#allocation2 + $0x3a8] sm:$0xff]
    %v210 = vld [vmem:[#allocation2 + $0x3b0] sm:$0xff]
    %v211 = vld [vmem:[#allocation2 + $0x3b8] sm:$0xff]
    %v212 = vld [vmem:[#allocation2 + $0x3c0] sm:$0xff]
    %v213 = vld [vmem:[#allocation2 + $0x3c8] sm:$0xff]
    %v214 = vld [vmem:[#allocation2 + $0x3d0] sm:$0xff]
    %v215 = vld [vmem:[#allocation2 + $0x3d8] sm:$0xff]
    %v216 = vld [vmem:[#allocation2 + $0x3e0] sm:$0xff]
    %v217 = vld [vmem:[#allocation2 + $0x3e8] sm:$0xff]
    %v218 = vld [vmem:[#allocation2 + $0x3f0] sm:$0xff]
    %v219 = vld [vmem:[#allocation2 + $0x3f8] sm:$0xff]
    %v220 = vld [vmem:[%s3] sm:$0xff]
    %v222 = vlaneseq
    %v223 = vshrl.u32 %v222, 7
    %v224 = vsub.s32 0, %v223
    %v225 = vrot.slane %v220, %v224
    %v226 = vlaneseq
    %v227 = vshrl.u32 %v226, 7
    %v228 = vsub.s32 1, %v227
    %v229 = vrot.slane %v220, %v228
    %v230 = vlaneseq
    %v231 = vshrl.u32 %v230, 7
    %v232 = vsub.s32 2, %v231
    %v233 = vrot.slane %v220, %v232
    %v234 = vlaneseq
    %v235 = vshrl.u32 %v234, 7
    %v236 = vsub.s32 3, %v235
    %v237 = vrot.slane %v220, %v236
    %v238 = vlaneseq
    %v239 = vshrl.u32 %v238, 7
    %v240 = vsub.s32 4, %v239
    %v241 = vrot.slane %v220, %v240
    %v242 = vlaneseq
    %v243 = vshrl.u32 %v242, 7
    %v244 = vsub.s32 5, %v243
    %v245 = vrot.slane %v220, %v244
    %v246 = vlaneseq
    %v247 = vshrl.u32 %v246, 7
    %v248 = vsub.s32 6, %v247
    %v249 = vrot.slane %v220, %v248
    %v250 = vlaneseq
    %v251 = vshrl.u32 %v250, 7
    %v252 = vsub.s32 7, %v251
    %v253 = vrot.slane %v220, %v252
    %v390 = vunpack.c.l.b16 %v92
    %v391 = vunpack.c.h.b16 %v92
    %v392 = vunpack.c.l.b16 %v93
    %v393 = vunpack.c.h.b16 %v93
    %v394 = vunpack.c.l.b16 %v94
    %v395 = vunpack.c.h.b16 %v94
    %v396 = vunpack.c.l.b16 %v95
    %v397 = vunpack.c.h.b16 %v95
    %v398 = vunpack.c.l.b16 %v96
    %v399 = vunpack.c.h.b16 %v96
    %v400 = vunpack.c.l.b16 %v97
    %v401 = vunpack.c.h.b16 %v97
    %v402 = vunpack.c.l.b16 %v98
    %v403 = vunpack.c.h.b16 %v98
    %v404 = vunpack.c.l.b16 %v99
    %v405 = vunpack.c.h.b16 %v99
    %v406 = vunpack.c.l.b16 %v100
    %v407 = vunpack.c.h.b16 %v100
    %v408 = vunpack.c.l.b16 %v101
    %v409 = vunpack.c.h.b16 %v101
    %v410 = vunpack.c.l.b16 %v102
    %v411 = vunpack.c.h.b16 %v102
    %v412 = vunpack.c.l.b16 %v103
    %v413 = vunpack.c.h.b16 %v103
    %v414 = vunpack.c.l.b16 %v104
    %v415 = vunpack.c.h.b16 %v104
    %v416 = vunpack.c.l.b16 %v105
    %v417 = vunpack.c.h.b16 %v105
    %v418 = vunpack.c.l.b16 %v106
    %v419 = vunpack.c.h.b16 %v106
    %v420 = vunpack.c.l.b16 %v107
    %v421 = vunpack.c.h.b16 %v107
    %v422 = vunpack.c.l.b16 %v108
    %v423 = vunpack.c.h.b16 %v108
    %v424 = vunpack.c.l.b16 %v109
    %v425 = vunpack.c.h.b16 %v109
    %v426 = vunpack.c.l.b16 %v110
    %v427 = vunpack.c.h.b16 %v110
    %v428 = vunpack.c.l.b16 %v111
    %v429 = vunpack.c.h.b16 %v111
    %v430 = vunpack.c.l.b16 %v112
    %v431 = vunpack.c.h.b16 %v112
    %v432 = vunpack.c.l.b16 %v113
    %v433 = vunpack.c.h.b16 %v113
    %v434 = vunpack.c.l.b16 %v114
    %v435 = vunpack.c.h.b16 %v114
    %v436 = vunpack.c.l.b16 %v115
    %v437 = vunpack.c.h.b16 %v115
    %v438 = vunpack.c.l.b16 %v116
    %v439 = vunpack.c.h.b16 %v116
    %v440 = vunpack.c.l.b16 %v117
    %v441 = vunpack.c.h.b16 %v117
    %v442 = vunpack.c.l.b16 %v118
    %v443 = vunpack.c.h.b16 %v118
    %v444 = vunpack.c.l.b16 %v119
    %v445 = vunpack.c.h.b16 %v119
    %v446 = vunpack.c.l.b16 %v120
    %v447 = vunpack.c.h.b16 %v120
    %v448 = vunpack.c.l.b16 %v121
    %v449 = vunpack.c.h.b16 %v121
    %v450 = vunpack.c.l.b16 %v122
    %v451 = vunpack.c.h.b16 %v122
    %v452 = vunpack.c.l.b16 %v123
    %v453 = vunpack.c.h.b16 %v123
    %v454 = vunpack.c.l.b16 %v124
    %v455 = vunpack.c.h.b16 %v124
    %v456 = vunpack.c.l.b16 %v125
    %v457 = vunpack.c.h.b16 %v125
    %v458 = vunpack.c.l.b16 %v126
    %v459 = vunpack.c.h.b16 %v126
    %v460 = vunpack.c.l.b16 %v127
    %v461 = vunpack.c.h.b16 %v127
    %v462 = vunpack.c.l.b16 %v128
    %v463 = vunpack.c.h.b16 %v128
    %v464 = vunpack.c.l.b16 %v129
    %v465 = vunpack.c.h.b16 %v129
    %v466 = vunpack.c.l.b16 %v130
    %v467 = vunpack.c.h.b16 %v130
    %v468 = vunpack.c.l.b16 %v131
    %v469 = vunpack.c.h.b16 %v131
    %v470 = vunpack.c.l.b16 %v132
    %v471 = vunpack.c.h.b16 %v132
    %v472 = vunpack.c.l.b16 %v133
    %v473 = vunpack.c.h.b16 %v133
    %v474 = vunpack.c.l.b16 %v134
    %v475 = vunpack.c.h.b16 %v134
    %v476 = vunpack.c.l.b16 %v135
    %v477 = vunpack.c.h.b16 %v135
    %v478 = vunpack.c.l.b16 %v136
    %v479 = vunpack.c.h.b16 %v136
    %v480 = vunpack.c.l.b16 %v137
    %v481 = vunpack.c.h.b16 %v137
    %v482 = vunpack.c.l.b16 %v138
    %v483 = vunpack.c.h.b16 %v138
    %v484 = vunpack.c.l.b16 %v139
    %v485 = vunpack.c.h.b16 %v139
    %v486 = vunpack.c.l.b16 %v140
    %v487 = vunpack.c.h.b16 %v140
    %v488 = vunpack.c.l.b16 %v141
    %v489 = vunpack.c.h.b16 %v141
    %v490 = vunpack.c.l.b16 %v142
    %v491 = vunpack.c.h.b16 %v142
    %v492 = vunpack.c.l.b16 %v143
    %v493 = vunpack.c.h.b16 %v143
    %v494 = vunpack.c.l.b16 %v144
    %v495 = vunpack.c.h.b16 %v144
    %v496 = vunpack.c.l.b16 %v145
    %v497 = vunpack.c.h.b16 %v145
    %v498 = vunpack.c.l.b16 %v146
    %v499 = vunpack.c.h.b16 %v146
    %v500 = vunpack.c.l.b16 %v147
    %v501 = vunpack.c.h.b16 %v147
    %v502 = vunpack.c.l.b16 %v148
    %v503 = vunpack.c.h.b16 %v148
    %v504 = vunpack.c.l.b16 %v149
    %v505 = vunpack.c.h.b16 %v149
    %v506 = vunpack.c.l.b16 %v150
    %v507 = vunpack.c.h.b16 %v150
    %v508 = vunpack.c.l.b16 %v151
    %v509 = vunpack.c.h.b16 %v151
    %v510 = vunpack.c.l.b16 %v152
    %v511 = vunpack.c.h.b16 %v152
    %v512 = vunpack.c.l.b16 %v153
    %v513 = vunpack.c.h.b16 %v153
    %v514 = vunpack.c.l.b16 %v154
    %v515 = vunpack.c.h.b16 %v154
    %v516 = vunpack.c.l.b16 %v155
    %v517 = vunpack.c.h.b16 %v155
    %v518 = vunpack.c.l.b16 %v156
    %v519 = vunpack.c.h.b16 %v156
    %v520 = vunpack.c.l.b16 %v157
    %v521 = vunpack.c.h.b16 %v157
    %v522 = vunpack.c.l.b16 %v158
    %v523 = vunpack.c.h.b16 %v158
    %v524 = vunpack.c.l.b16 %v159
    %v525 = vunpack.c.h.b16 %v159
    %v526 = vunpack.c.l.b16 %v160
    %v527 = vunpack.c.h.b16 %v160
    %v528 = vunpack.c.l.b16 %v161
    %v529 = vunpack.c.h.b16 %v161
    %v530 = vunpack.c.l.b16 %v162
    %v531 = vunpack.c.h.b16 %v162
    %v532 = vunpack.c.l.b16 %v163
    %v533 = vunpack.c.h.b16 %v163
    %v534 = vunpack.c.l.b16 %v164
    %v535 = vunpack.c.h.b16 %v164
    %v536 = vunpack.c.l.b16 %v165
    %v537 = vunpack.c.h.b16 %v165
    %v538 = vunpack.c.l.b16 %v166
    %v539 = vunpack.c.h.b16 %v166
    %v540 = vunpack.c.l.b16 %v167
    %v541 = vunpack.c.h.b16 %v167
    %v542 = vunpack.c.l.b16 %v168
    %v543 = vunpack.c.h.b16 %v168
    %v544 = vunpack.c.l.b16 %v169
    %v545 = vunpack.c.h.b16 %v169
    %v546 = vunpack.c.l.b16 %v170
    %v547 = vunpack.c.h.b16 %v170
    %v548 = vunpack.c.l.b16 %v171
    %v549 = vunpack.c.h.b16 %v171
    %v550 = vunpack.c.l.b16 %v172
    %v551 = vunpack.c.h.b16 %v172
    %v552 = vunpack.c.l.b16 %v173
    %v553 = vunpack.c.h.b16 %v173
    %v554 = vunpack.c.l.b16 %v174
    %v555 = vunpack.c.h.b16 %v174
    %v556 = vunpack.c.l.b16 %v175
    %v557 = vunpack.c.h.b16 %v175
    %v558 = vunpack.c.l.b16 %v176
    %v559 = vunpack.c.h.b16 %v176
    %v560 = vunpack.c.l.b16 %v177
    %v561 = vunpack.c.h.b16 %v177
    %v562 = vunpack.c.l.b16 %v178
    %v563 = vunpack.c.h.b16 %v178
    %v564 = vunpack.c.l.b16 %v179
    %v565 = vunpack.c.h.b16 %v179
    %v566 = vunpack.c.l.b16 %v180
    %v567 = vunpack.c.h.b16 %v180
    %v568 = vunpack.c.l.b16 %v181
    %v569 = vunpack.c.h.b16 %v181
    %v570 = vunpack.c.l.b16 %v182
    %v571 = vunpack.c.h.b16 %v182
    %v572 = vunpack.c.l.b16 %v183
    %v573 = vunpack.c.h.b16 %v183
    %v574 = vunpack.c.l.b16 %v184
    %v575 = vunpack.c.h.b16 %v184
    %v576 = vunpack.c.l.b16 %v185
    %v577 = vunpack.c.h.b16 %v185
    %v578 = vunpack.c.l.b16 %v186
    %v579 = vunpack.c.h.b16 %v186
    %v580 = vunpack.c.l.b16 %v187
    %v581 = vunpack.c.h.b16 %v187
    %v582 = vunpack.c.l.b16 %v188
    %v583 = vunpack.c.h.b16 %v188
    %v584 = vunpack.c.l.b16 %v189
    %v585 = vunpack.c.h.b16 %v189
    %v586 = vunpack.c.l.b16 %v190
    %v587 = vunpack.c.h.b16 %v190
    %v588 = vunpack.c.l.b16 %v191
    %v589 = vunpack.c.h.b16 %v191
    %v590 = vunpack.c.l.b16 %v192
    %v591 = vunpack.c.h.b16 %v192
    %v592 = vunpack.c.l.b16 %v193
    %v593 = vunpack.c.h.b16 %v193
    %v594 = vunpack.c.l.b16 %v194
    %v595 = vunpack.c.h.b16 %v194
    %v596 = vunpack.c.l.b16 %v195
    %v597 = vunpack.c.h.b16 %v195
    %v598 = vunpack.c.l.b16 %v196
    %v599 = vunpack.c.h.b16 %v196
    %v600 = vunpack.c.l.b16 %v197
    %v601 = vunpack.c.h.b16 %v197
    %v602 = vunpack.c.l.b16 %v198
    %v603 = vunpack.c.h.b16 %v198
    %v604 = vunpack.c.l.b16 %v199
    %v605 = vunpack.c.h.b16 %v199
    %v606 = vunpack.c.l.b16 %v200
    %v607 = vunpack.c.h.b16 %v200
    %v608 = vunpack.c.l.b16 %v201
    %v609 = vunpack.c.h.b16 %v201
    %v610 = vunpack.c.l.b16 %v202
    %v611 = vunpack.c.h.b16 %v202
    %v612 = vunpack.c.l.b16 %v203
    %v613 = vunpack.c.h.b16 %v203
    %v614 = vunpack.c.l.b16 %v204
    %v615 = vunpack.c.h.b16 %v204
    %v616 = vunpack.c.l.b16 %v205
    %v617 = vunpack.c.h.b16 %v205
    %v618 = vunpack.c.l.b16 %v206
    %v619 = vunpack.c.h.b16 %v206
    %v620 = vunpack.c.l.b16 %v207
    %v621 = vunpack.c.h.b16 %v207
    %v622 = vunpack.c.l.b16 %v208
    %v623 = vunpack.c.h.b16 %v208
    %v624 = vunpack.c.l.b16 %v209
    %v625 = vunpack.c.h.b16 %v209
    %v626 = vunpack.c.l.b16 %v210
    %v627 = vunpack.c.h.b16 %v210
    %v628 = vunpack.c.l.b16 %v211
    %v629 = vunpack.c.h.b16 %v211
    %v630 = vunpack.c.l.b16 %v212
    %v631 = vunpack.c.h.b16 %v212
    %v632 = vunpack.c.l.b16 %v213
    %v633 = vunpack.c.h.b16 %v213
    %v634 = vunpack.c.l.b16 %v214
    %v635 = vunpack.c.h.b16 %v214
    %v636 = vunpack.c.l.b16 %v215
    %v637 = vunpack.c.h.b16 %v215
    %v638 = vunpack.c.l.b16 %v216
    %v639 = vunpack.c.h.b16 %v216
    %v640 = vunpack.c.l.b16 %v217
    %v641 = vunpack.c.h.b16 %v217
    %v642 = vunpack.c.l.b16 %v218
    %v643 = vunpack.c.h.b16 %v218
    %v644 = vunpack.c.l.b16 %v219
    %v645 = vunpack.c.h.b16 %v219
    %v646 = vpack.c.b16 %v398, %v390
    %v647 = vpack.c.b16 %v399, %v391
    %v648 = vpack.c.b16 %v400, %v392
    %v649 = vpack.c.b16 %v401, %v393
    %v650 = vpack.c.b16 %v402, %v394
    %v651 = vpack.c.b16 %v403, %v395
    %v652 = vpack.c.b16 %v404, %v396
    %v653 = vpack.c.b16 %v405, %v397
    %v654 = vpack.c.b16 %v414, %v406
    %v655 = vpack.c.b16 %v415, %v407
    %v656 = vpack.c.b16 %v416, %v408
    %v657 = vpack.c.b16 %v417, %v409
    %v658 = vpack.c.b16 %v418, %v410
    %v659 = vpack.c.b16 %v419, %v411
    %v660 = vpack.c.b16 %v420, %v412
    %v661 = vpack.c.b16 %v421, %v413
    %v662 = vpack.c.b16 %v430, %v422
    %v663 = vpack.c.b16 %v431, %v423
    %v664 = vpack.c.b16 %v432, %v424
    %v665 = vpack.c.b16 %v433, %v425
    %v666 = vpack.c.b16 %v434, %v426
    %v667 = vpack.c.b16 %v435, %v427
    %v668 = vpack.c.b16 %v436, %v428
    %v669 = vpack.c.b16 %v437, %v429
    %v670 = vpack.c.b16 %v446, %v438
    %v671 = vpack.c.b16 %v447, %v439
    %v672 = vpack.c.b16 %v448, %v440
    %v673 = vpack.c.b16 %v449, %v441
    %v674 = vpack.c.b16 %v450, %v442
    %v675 = vpack.c.b16 %v451, %v443
    %v676 = vpack.c.b16 %v452, %v444
    %v677 = vpack.c.b16 %v453, %v445
    %v678 = vpack.c.b16 %v462, %v454
    %v679 = vpack.c.b16 %v463, %v455
    %v680 = vpack.c.b16 %v464, %v456
    %v681 = vpack.c.b16 %v465, %v457
    %v682 = vpack.c.b16 %v466, %v458
    %v683 = vpack.c.b16 %v467, %v459
    %v684 = vpack.c.b16 %v468, %v460
    %v685 = vpack.c.b16 %v469, %v461
    %v686 = vpack.c.b16 %v478, %v470
    %v687 = vpack.c.b16 %v479, %v471
    %v688 = vpack.c.b16 %v480, %v472
    %v689 = vpack.c.b16 %v481, %v473
    %v690 = vpack.c.b16 %v482, %v474
    %v691 = vpack.c.b16 %v483, %v475
    %v692 = vpack.c.b16 %v484, %v476
    %v693 = vpack.c.b16 %v485, %v477
    %v694 = vpack.c.b16 %v494, %v486
    %v695 = vpack.c.b16 %v495, %v487
    %v696 = vpack.c.b16 %v496, %v488
    %v697 = vpack.c.b16 %v497, %v489
    %v698 = vpack.c.b16 %v498, %v490
    %v699 = vpack.c.b16 %v499, %v491
    %v700 = vpack.c.b16 %v500, %v492
    %v701 = vpack.c.b16 %v501, %v493
    %v702 = vpack.c.b16 %v510, %v502
    %v703 = vpack.c.b16 %v511, %v503
    %v704 = vpack.c.b16 %v512, %v504
    %v705 = vpack.c.b16 %v513, %v505
    %v706 = vpack.c.b16 %v514, %v506
    %v707 = vpack.c.b16 %v515, %v507
    %v708 = vpack.c.b16 %v516, %v508
    %v709 = vpack.c.b16 %v517, %v509
    %v710 = vpack.c.b16 %v526, %v518
    %v711 = vpack.c.b16 %v527, %v519
    %v712 = vpack.c.b16 %v528, %v520
    %v713 = vpack.c.b16 %v529, %v521
    %v714 = vpack.c.b16 %v530, %v522
    %v715 = vpack.c.b16 %v531, %v523
    %v716 = vpack.c.b16 %v532, %v524
    %v717 = vpack.c.b16 %v533, %v525
    %v718 = vpack.c.b16 %v542, %v534
    %v719 = vpack.c.b16 %v543, %v535
    %v720 = vpack.c.b16 %v544, %v536
    %v721 = vpack.c.b16 %v545, %v537
    %v722 = vpack.c.b16 %v546, %v538
    %v723 = vpack.c.b16 %v547, %v539
    %v724 = vpack.c.b16 %v548, %v540
    %v725 = vpack.c.b16 %v549, %v541
    %v726 = vpack.c.b16 %v558, %v550
    %v727 = vpack.c.b16 %v559, %v551
    %v728 = vpack.c.b16 %v560, %v552
    %v729 = vpack.c.b16 %v561, %v553
    %v730 = vpack.c.b16 %v562, %v554
    %v731 = vpack.c.b16 %v563, %v555
    %v732 = vpack.c.b16 %v564, %v556
    %v733 = vpack.c.b16 %v565, %v557
    %v734 = vpack.c.b16 %v574, %v566
    %v735 = vpack.c.b16 %v575, %v567
    %v736 = vpack.c.b16 %v576, %v568
    %v737 = vpack.c.b16 %v577, %v569
    %v738 = vpack.c.b16 %v578, %v570
    %v739 = vpack.c.b16 %v579, %v571
    %v740 = vpack.c.b16 %v580, %v572
    %v741 = vpack.c.b16 %v581, %v573
    %v742 = vpack.c.b16 %v590, %v582
    %v743 = vpack.c.b16 %v591, %v583
    %v744 = vpack.c.b16 %v592, %v584
    %v745 = vpack.c.b16 %v593, %v585
    %v746 = vpack.c.b16 %v594, %v586
    %v747 = vpack.c.b16 %v595, %v587
    %v748 = vpack.c.b16 %v596, %v588
    %v749 = vpack.c.b16 %v597, %v589
    %v750 = vpack.c.b16 %v606, %v598
    %v751 = vpack.c.b16 %v607, %v599
    %v752 = vpack.c.b16 %v608, %v600
    %v753 = vpack.c.b16 %v609, %v601
    %v754 = vpack.c.b16 %v610, %v602
    %v755 = vpack.c.b16 %v611, %v603
    %v756 = vpack.c.b16 %v612, %v604
    %v757 = vpack.c.b16 %v613, %v605
    %v758 = vpack.c.b16 %v622, %v614
    %v759 = vpack.c.b16 %v623, %v615
    %v760 = vpack.c.b16 %v624, %v616
    %v761 = vpack.c.b16 %v625, %v617
    %v762 = vpack.c.b16 %v626, %v618
    %v763 = vpack.c.b16 %v627, %v619
    %v764 = vpack.c.b16 %v628, %v620
    %v765 = vpack.c.b16 %v629, %v621
    %v766 = vpack.c.b16 %v638, %v630
    %v767 = vpack.c.b16 %v639, %v631
    %v768 = vpack.c.b16 %v640, %v632
    %v769 = vpack.c.b16 %v641, %v633
    %v770 = vpack.c.b16 %v642, %v634
    %v771 = vpack.c.b16 %v643, %v635
    %v772 = vpack.c.b16 %v644, %v636
    %v773 = vpack.c.b16 %v645, %v637
    %902 = vmatprep.subr.bf16.mxu0 %v647
    %903 = vmatpush1.bf16.msra.mxu0 %v646
    %904 = vmatprep.subr.bf16.mxu0 %v655
    %905 = vmatpush1.bf16.msra.mxu0 %v654
    %906 = vmatprep.subr.bf16.mxu0 %v663
    %907 = vmatpush1.bf16.msra.mxu0 %v662
    %908 = vmatprep.subr.bf16.mxu0 %v671
    %909 = vmatpush1.bf16.msra.mxu0 %v670
    %910 = vmatprep.subr.bf16.mxu0 %v679
    %911 = vmatpush1.bf16.msra.mxu0 %v678
    %912 = vmatprep.subr.bf16.mxu0 %v687
    %913 = vmatpush1.bf16.msra.mxu0 %v686
    %914 = vmatprep.subr.bf16.mxu0 %v695
    %915 = vmatpush1.bf16.msra.mxu0 %v694
    %916 = vmatprep.subr.bf16.mxu0 %v703
    %917 = vmatpush1.bf16.msra.mxu0 %v702
    %918 = vmatprep.subr.bf16.mxu0 %v711
    %919 = vmatpush1.bf16.msra.mxu0 %v710
    %920 = vmatprep.subr.bf16.mxu0 %v719
    %921 = vmatpush1.bf16.msra.mxu0 %v718
    %922 = vmatprep.subr.bf16.mxu0 %v727
    %923 = vmatpush1.bf16.msra.mxu0 %v726
    %924 = vmatprep.subr.bf16.mxu0 %v735
    %925 = vmatpush1.bf16.msra.mxu0 %v734
    %926 = vmatprep.subr.bf16.mxu0 %v743
    %927 = vmatpush1.bf16.msra.mxu0 %v742
    %928 = vmatprep.subr.bf16.mxu0 %v751
    %929 = vmatpush1.bf16.msra.mxu0 %v750
    %930 = vmatprep.subr.bf16.mxu0 %v759
    %931 = vmatpush1.bf16.msra.mxu0 %v758
    %932 = vmatprep.subr.bf16.mxu0 %v767
    %933 = vmatpush1.bf16.msra.mxu0 %v766
    %934 = vmatprep.mubr.bf16.mxu0 %v91
    %935 = vmatmul.mubr.bf16.gmra.mrb[0].mxu0 %v90
    %v936 = vpop.f32.mrb[0].mxu0
    %v937 = vadd.f32 %v225, %v936
    %v938 = vpop.f32.mrb[0].mxu0
    %v939 = vadd.f32 %v229, %v938
    %v940 = vpop.f32.mrb[0].mxu0
    %v941 = vpop.f32.mrb[0].mxu0
    %942 = vdwg.mxu0
    %943 = vmatprep.subr.bf16.mxu0 %v649
    %944 = vmatpush1.bf16.msra.mxu0 %v648
    %945 = vmatprep.subr.bf16.mxu0 %v657
    %946 = vmatpush1.bf16.msra.mxu0 %v656
    %947 = vmatprep.subr.bf16.mxu0 %v665
    %948 = vmatpush1.bf16.msra.mxu0 %v664
    %949 = vmatprep.subr.bf16.mxu0 %v673
    %950 = vmatpush1.bf16.msra.mxu0 %v672
    %951 = vmatprep.subr.bf16.mxu0 %v681
    %952 = vmatpush1.bf16.msra.mxu0 %v680
    %953 = vmatprep.subr.bf16.mxu0 %v689
    %954 = vmatpush1.bf16.msra.mxu0 %v688
    %955 = vmatprep.subr.bf16.mxu0 %v697
    %956 = vmatpush1.bf16.msra.mxu0 %v696
    %957 = vmatprep.subr.bf16.mxu0 %v705
    %958 = vmatpush1.bf16.msra.mxu0 %v704
    %959 = vmatprep.subr.bf16.mxu0 %v713
    %960 = vmatpush1.bf16.msra.mxu0 %v712
    %961 = vmatprep.subr.bf16.mxu0 %v721
    %962 = vmatpush1.bf16.msra.mxu0 %v720
    %963 = vmatprep.subr.bf16.mxu0 %v729
    %964 = vmatpush1.bf16.msra.mxu0 %v728
    %965 = vmatprep.subr.bf16.mxu0 %v737
    %966 = vmatpush1.bf16.msra.mxu0 %v736
    %967 = vmatprep.subr.bf16.mxu0 %v745
    %968 = vmatpush1.bf16.msra.mxu0 %v744
    %969 = vmatprep.subr.bf16.mxu0 %v753
    %970 = vmatpush1.bf16.msra.mxu0 %v752
    %971 = vmatprep.subr.bf16.mxu0 %v761
    %972 = vmatpush1.bf16.msra.mxu0 %v760
    %973 = vmatprep.subr.bf16.mxu0 %v769
    %974 = vmatpush1.bf16.msra.mxu0 %v768
    %975 = vmatprep.mubr.bf16.mxu0 %v91
    %976 = vmatmul.mubr.bf16.gmra.mrb[0].mxu0 %v90
    %v977 = vpop.f32.mrb[0].mxu0
    %v978 = vadd.f32 %v233, %v977
    %v979 = vpop.f32.mrb[0].mxu0
    %v980 = vadd.f32 %v237, %v979
    %v981 = vpop.f32.mrb[0].mxu0
    %v982 = vpop.f32.mrb[0].mxu0
    %983 = vdwg.mxu0
    %984 = vmatprep.subr.bf16.mxu0 %v651
    %985 = vmatpush1.bf16.msra.mxu0 %v650
    %986 = vmatprep.subr.bf16.mxu0 %v659
    %987 = vmatpush1.bf16.msra.mxu0 %v658
    %988 = vmatprep.subr.bf16.mxu0 %v667
    %989 = vmatpush1.bf16.msra.mxu0 %v666
    %990 = vmatprep.subr.bf16.mxu0 %v675
    %991 = vmatpush1.bf16.msra.mxu0 %v674
    %992 = vmatprep.subr.bf16.mxu0 %v683
    %993 = vmatpush1.bf16.msra.mxu0 %v682
    %994 = vmatprep.subr.bf16.mxu0 %v691
    %995 = vmatpush1.bf16.msra.mxu0 %v690
    %996 = vmatprep.subr.bf16.mxu0 %v699
    %997 = vmatpush1.bf16.msra.mxu0 %v698
    %998 = vmatprep.subr.bf16.mxu0 %v707
    %999 = vmatpush1.bf16.msra.mxu0 %v706
    %1000 = vmatprep.subr.bf16.mxu0 %v715
    %1001 = vmatpush1.bf16.msra.mxu0 %v714
    %1002 = vmatprep.subr.bf16.mxu0 %v723
    %1003 = vmatpush1.bf16.msra.mxu0 %v722
    %1004 = vmatprep.subr.bf16.mxu0 %v731
    %1005 = vmatpush1.bf16.msra.mxu0 %v730
    %1006 = vmatprep.subr.bf16.mxu0 %v739
    %1007 = vmatpush1.bf16.msra.mxu0 %v738
    %1008 = vmatprep.subr.bf16.mxu0 %v747
    %1009 = vmatpush1.bf16.msra.mxu0 %v746
    %1010 = vmatprep.subr.bf16.mxu0 %v755
    %1011 = vmatpush1.bf16.msra.mxu0 %v754
    %1012 = vmatprep.subr.bf16.mxu0 %v763
    %1013 = vmatpush1.bf16.msra.mxu0 %v762
    %1014 = vmatprep.subr.bf16.mxu0 %v771
    %1015 = vmatpush1.bf16.msra.mxu0 %v770
    %1016 = vmatprep.mubr.bf16.mxu0 %v91
    %1017 = vmatmul.mubr.bf16.gmra.mrb[0].mxu0 %v90
    %v1018 = vpop.f32.mrb[0].mxu0
    %v1019 = vadd.f32 %v241, %v1018
    %v1020 = vpop.f32.mrb[0].mxu0
    %v1021 = vadd.f32 %v245, %v1020
    %v1022 = vpop.f32.mrb[0].mxu0
    %v1023 = vpop.f32.mrb[0].mxu0
    %1024 = vdwg.mxu0
    %1025 = vmatprep.subr.bf16.mxu0 %v653
    %1026 = vmatpush1.bf16.msra.mxu0 %v652
    %1027 = vmatprep.subr.bf16.mxu0 %v661
    %1028 = vmatpush1.bf16.msra.mxu0 %v660
    %1029 = vmatprep.subr.bf16.mxu0 %v669
    %1030 = vmatpush1.bf16.msra.mxu0 %v668
    %1031 = vmatprep.subr.bf16.mxu0 %v677
    %1032 = vmatpush1.bf16.msra.mxu0 %v676
    %1033 = vmatprep.subr.bf16.mxu0 %v685
    %1034 = vmatpush1.bf16.msra.mxu0 %v684
    %1035 = vmatprep.subr.bf16.mxu0 %v693
    %1036 = vmatpush1.bf16.msra.mxu0 %v692
    %1037 = vmatprep.subr.bf16.mxu0 %v701
    %1038 = vmatpush1.bf16.msra.mxu0 %v700
    %1039 = vmatprep.subr.bf16.mxu0 %v709
    %1040 = vmatpush1.bf16.msra.mxu0 %v708
    %1041 = vmatprep.subr.bf16.mxu0 %v717
    %1042 = vmatpush1.bf16.msra.mxu0 %v716
    %1043 = vmatprep.subr.bf16.mxu0 %v725
    %1044 = vmatpush1.bf16.msra.mxu0 %v724
    %1045 = vmatprep.subr.bf16.mxu0 %v733
    %1046 = vmatpush1.bf16.msra.mxu0 %v732
    %1047 = vmatprep.subr.bf16.mxu0 %v741
    %1048 = vmatpush1.bf16.msra.mxu0 %v740
    %1049 = vmatprep.subr.bf16.mxu0 %v749
    %1050 = vmatpush1.bf16.msra.mxu0 %v748
    %1051 = vmatprep.subr.bf16.mxu0 %v757
    %1052 = vmatpush1.bf16.msra.mxu0 %v756
    %1053 = vmatprep.subr.bf16.mxu0 %v765
    %1054 = vmatpush1.bf16.msra.mxu0 %v764
    %1055 = vmatprep.subr.bf16.mxu0 %v773
    %1056 = vmatpush1.bf16.msra.mxu0 %v772
    %1057 = vmatprep.mubr.bf16.mxu0 %v91
    %1058 = vmatmul.mubr.bf16.gmra.mrb[0].mxu0 %v90
    %v1059 = vpop.f32.mrb[0].mxu0
    %v1060 = vadd.f32 %v249, %v1059
    %v1061 = vpop.f32.mrb[0].mxu0
    %v1062 = vadd.f32 %v253, %v1061
    %v1063 = vpop.f32.mrb[0].mxu0
    %v1064 = vpop.f32.mrb[0].mxu0
    %1065 = vdwg.mxu0
    %v1066 = vtanh.pop %v937
    %v1067 = vtanh.pop %v939
    %v1068 = vtanh.pop %v978
    %v1069 = vtanh.pop %v980
    %v1070 = vtanh.pop %v1019
    %v1071 = vtanh.pop %v1021
    %v1072 = vtanh.pop %v1060
    %v1073 = vtanh.pop %v1062
    %v1074 = vpack.c.bf16 %v1066, %v1066
    %v1075 = vpack.c.bf16 %v1067, %v1067
    %v1076 = vpack.c.bf16 %v1068, %v1068
    %v1077 = vpack.c.bf16 %v1069, %v1069
    %v1078 = vpack.c.bf16 %v1070, %v1070
    %v1079 = vpack.c.bf16 %v1071, %v1071
    %v1080 = vpack.c.bf16 %v1072, %v1072
    %v1081 = vpack.c.bf16 %v1073, %v1073
    %v1082 = vld [vmem:[#allocation4] sm:$0xff]
    %v1083 = vld [vmem:[#allocation4 + $0x8] sm:$0xff]
    %v1084 = vld [vmem:[#allocation4 + $0x10] sm:$0xff]
    %v1085 = vld [vmem:[#allocation4 + $0x18] sm:$0xff]
    %v1086 = vld [vmem:[#allocation4 + $0x20] sm:$0xff]
    %v1087 = vld [vmem:[#allocation4 + $0x28] sm:$0xff]
    %v1088 = vld [vmem:[#allocation4 + $0x30] sm:$0xff]
    %v1089 = vld [vmem:[#allocation4 + $0x38] sm:$0xff]
    %v1090 = vld [vmem:[#allocation4 + $0x40] sm:$0xff]
    %v1091 = vld [vmem:[#allocation4 + $0x48] sm:$0xff]
    %v1092 = vld [vmem:[#allocation4 + $0x50] sm:$0xff]
    %v1093 = vld [vmem:[#allocation4 + $0x58] sm:$0xff]
    %v1094 = vld [vmem:[#allocation4 + $0x60] sm:$0xff]
    %v1095 = vld [vmem:[#allocation4 + $0x68] sm:$0xff]
    %v1096 = vld [vmem:[#allocation4 + $0x70] sm:$0xff]
    %v1097 = vld [vmem:[#allocation4 + $0x78] sm:$0xff]
    %v1098 = vld [vmem:[#allocation4 + $0x80] sm:$0xff]
    %v1099 = vld [vmem:[#allocation4 + $0x88] sm:$0xff]
    %v1100 = vld [vmem:[#allocation4 + $0x90] sm:$0xff]
    %v1101 = vld [vmem:[#allocation4 + $0x98] sm:$0xff]
    %v1102 = vld [vmem:[#allocation4 + $0xa0] sm:$0xff]
    %v1103 = vld [vmem:[#allocation4 + $0xa8] sm:$0xff]
    %v1104 = vld [vmem:[#allocation4 + $0xb0] sm:$0xff]
    %v1105 = vld [vmem:[#allocation4 + $0xb8] sm:$0xff]
    %v1106 = vld [vmem:[#allocation4 + $0xc0] sm:$0xff]
    %v1107 = vld [vmem:[#allocation4 + $0xc8] sm:$0xff]
    %v1108 = vld [vmem:[#allocation4 + $0xd0] sm:$0xff]
    %v1109 = vld [vmem:[#allocation4 + $0xd8] sm:$0xff]
    %v1110 = vld [vmem:[#allocation4 + $0xe0] sm:$0xff]
    %v1111 = vld [vmem:[#allocation4 + $0xe8] sm:$0xff]
    %v1112 = vld [vmem:[#allocation4 + $0xf0] sm:$0xff]
    %v1113 = vld [vmem:[#allocation4 + $0xf8] sm:$0xff]
    %v1114 = vld [vmem:[#allocation4 + $0x100] sm:$0xff]
    %v1115 = vld [vmem:[#allocation4 + $0x108] sm:$0xff]
    %v1116 = vld [vmem:[#allocation4 + $0x110] sm:$0xff]
    %v1117 = vld [vmem:[#allocation4 + $0x118] sm:$0xff]
    %v1118 = vld [vmem:[#allocation4 + $0x120] sm:$0xff]
    %v1119 = vld [vmem:[#allocation4 + $0x128] sm:$0xff]
    %v1120 = vld [vmem:[#allocation4 + $0x130] sm:$0xff]
    %v1121 = vld [vmem:[#allocation4 + $0x138] sm:$0xff]
    %v1122 = vld [vmem:[#allocation4 + $0x140] sm:$0xff]
    %v1123 = vld [vmem:[#allocation4 + $0x148] sm:$0xff]
    %v1124 = vld [vmem:[#allocation4 + $0x150] sm:$0xff]
    %v1125 = vld [vmem:[#allocation4 + $0x158] sm:$0xff]
    %v1126 = vld [vmem:[#allocation4 + $0x160] sm:$0xff]
    %v1127 = vld [vmem:[#allocation4 + $0x168] sm:$0xff]
    %v1128 = vld [vmem:[#allocation4 + $0x170] sm:$0xff]
    %v1129 = vld [vmem:[#allocation4 + $0x178] sm:$0xff]
    %v1130 = vld [vmem:[#allocation4 + $0x180] sm:$0xff]
    %v1131 = vld [vmem:[#allocation4 + $0x188] sm:$0xff]
    %v1132 = vld [vmem:[#allocation4 + $0x190] sm:$0xff]
    %v1133 = vld [vmem:[#allocation4 + $0x198] sm:$0xff]
    %v1134 = vld [vmem:[#allocation4 + $0x1a0] sm:$0xff]
    %v1135 = vld [vmem:[#allocation4 + $0x1a8] sm:$0xff]
    %v1136 = vld [vmem:[#allocation4 + $0x1b0] sm:$0xff]
    %v1137 = vld [vmem:[#allocation4 + $0x1b8] sm:$0xff]
    %v1138 = vld [vmem:[#allocation4 + $0x1c0] sm:$0xff]
    %v1139 = vld [vmem:[#allocation4 + $0x1c8] sm:$0xff]
    %v1140 = vld [vmem:[#allocation4 + $0x1d0] sm:$0xff]
    %v1141 = vld [vmem:[#allocation4 + $0x1d8] sm:$0xff]
    %v1142 = vld [vmem:[#allocation4 + $0x1e0] sm:$0xff]
    %v1143 = vld [vmem:[#allocation4 + $0x1e8] sm:$0xff]
    %v1144 = vld [vmem:[#allocation4 + $0x1f0] sm:$0xff]
    %v1145 = vld [vmem:[#allocation4 + $0x1f8] sm:$0xff]
    %v1146 = vld [vmem:[#allocation4 + $0x200] sm:$0xff]
    %v1147 = vld [vmem:[#allocation4 + $0x208] sm:$0xff]
    %v1148 = vld [vmem:[#allocation4 + $0x210] sm:$0xff]
    %v1149 = vld [vmem:[#allocation4 + $0x218] sm:$0xff]
    %v1150 = vld [vmem:[#allocation4 + $0x220] sm:$0xff]
    %v1151 = vld [vmem:[#allocation4 + $0x228] sm:$0xff]
    %v1152 = vld [vmem:[#allocation4 + $0x230] sm:$0xff]
    %v1153 = vld [vmem:[#allocation4 + $0x238] sm:$0xff]
    %v1154 = vld [vmem:[#allocation4 + $0x240] sm:$0xff]
    %v1155 = vld [vmem:[#allocation4 + $0x248] sm:$0xff]
    %v1156 = vld [vmem:[#allocation4 + $0x250] sm:$0xff]
    %v1157 = vld [vmem:[#allocation4 + $0x258] sm:$0xff]
    %v1158 = vld [vmem:[#allocation4 + $0x260] sm:$0xff]
    %v1159 = vld [vmem:[#allocation4 + $0x268] sm:$0xff]
    %v1160 = vld [vmem:[#allocation4 + $0x270] sm:$0xff]
    %v1161 = vld [vmem:[#allocation4 + $0x278] sm:$0xff]
    %v1162 = vld [vmem:[#allocation4 + $0x280] sm:$0xff]
    %v1163 = vld [vmem:[#allocation4 + $0x288] sm:$0xff]
    %v1164 = vld [vmem:[#allocation4 + $0x290] sm:$0xff]
    %v1165 = vld [vmem:[#allocation4 + $0x298] sm:$0xff]
    %v1166 = vld [vmem:[#allocation4 + $0x2a0] sm:$0xff]
    %v1167 = vld [vmem:[#allocation4 + $0x2a8] sm:$0xff]
    %v1168 = vld [vmem:[#allocation4 + $0x2b0] sm:$0xff]
    %v1169 = vld [vmem:[#allocation4 + $0x2b8] sm:$0xff]
    %v1170 = vld [vmem:[#allocation4 + $0x2c0] sm:$0xff]
    %v1171 = vld [vmem:[#allocation4 + $0x2c8] sm:$0xff]
    %v1172 = vld [vmem:[#allocation4 + $0x2d0] sm:$0xff]
    %v1173 = vld [vmem:[#allocation4 + $0x2d8] sm:$0xff]
    %v1174 = vld [vmem:[#allocation4 + $0x2e0] sm:$0xff]
    %v1175 = vld [vmem:[#allocation4 + $0x2e8] sm:$0xff]
    %v1176 = vld [vmem:[#allocation4 + $0x2f0] sm:$0xff]
    %v1177 = vld [vmem:[#allocation4 + $0x2f8] sm:$0xff]
    %v1178 = vld [vmem:[#allocation4 + $0x300] sm:$0xff]
    %v1179 = vld [vmem:[#allocation4 + $0x308] sm:$0xff]
    %v1180 = vld [vmem:[#allocation4 + $0x310] sm:$0xff]
    %v1181 = vld [vmem:[#allocation4 + $0x318] sm:$0xff]
    %v1182 = vld [vmem:[#allocation4 + $0x320] sm:$0xff]
    %v1183 = vld [vmem:[#allocation4 + $0x328] sm:$0xff]
    %v1184 = vld [vmem:[#allocation4 + $0x330] sm:$0xff]
    %v1185 = vld [vmem:[#allocation4 + $0x338] sm:$0xff]
    %v1186 = vld [vmem:[#allocation4 + $0x340] sm:$0xff]
    %v1187 = vld [vmem:[#allocation4 + $0x348] sm:$0xff]
    %v1188 = vld [vmem:[#allocation4 + $0x350] sm:$0xff]
    %v1189 = vld [vmem:[#allocation4 + $0x358] sm:$0xff]
    %v1190 = vld [vmem:[#allocation4 + $0x360] sm:$0xff]
    %v1191 = vld [vmem:[#allocation4 + $0x368] sm:$0xff]
    %v1192 = vld [vmem:[#allocation4 + $0x370] sm:$0xff]
    %v1193 = vld [vmem:[#allocation4 + $0x378] sm:$0xff]
    %v1194 = vld [vmem:[#allocation4 + $0x380] sm:$0xff]
    %v1195 = vld [vmem:[#allocation4 + $0x388] sm:$0xff]
    %v1196 = vld [vmem:[#allocation4 + $0x390] sm:$0xff]
    %v1197 = vld [vmem:[#allocation4 + $0x398] sm:$0xff]
    %v1198 = vld [vmem:[#allocation4 + $0x3a0] sm:$0xff]
    %v1199 = vld [vmem:[#allocation4 + $0x3a8] sm:$0xff]
    %v1200 = vld [vmem:[#allocation4 + $0x3b0] sm:$0xff]
    %v1201 = vld [vmem:[#allocation4 + $0x3b8] sm:$0xff]
    %v1202 = vld [vmem:[#allocation4 + $0x3c0] sm:$0xff]
    %v1203 = vld [vmem:[#allocation4 + $0x3c8] sm:$0xff]
    %v1204 = vld [vmem:[#allocation4 + $0x3d0] sm:$0xff]
    %v1205 = vld [vmem:[#allocation4 + $0x3d8] sm:$0xff]
    %v1206 = vld [vmem:[#allocation4 + $0x3e0] sm:$0xff]
    %v1207 = vld [vmem:[#allocation4 + $0x3e8] sm:$0xff]
    %v1208 = vld [vmem:[#allocation4 + $0x3f0] sm:$0xff]
    %v1209 = vld [vmem:[#allocation4 + $0x3f8] sm:$0xff]
    %v1210 = vld [vmem:[#allocation4 + $0x400] sm:$0xff]
    %v1211 = vld [vmem:[#allocation4 + $0x408] sm:$0xff]
    %v1212 = vld [vmem:[#allocation4 + $0x410] sm:$0xff]
    %v1213 = vld [vmem:[#allocation4 + $0x418] sm:$0xff]
    %v1214 = vld [vmem:[#allocation4 + $0x420] sm:$0xff]
    %v1215 = vld [vmem:[#allocation4 + $0x428] sm:$0xff]
    %v1216 = vld [vmem:[#allocation4 + $0x430] sm:$0xff]
    %v1217 = vld [vmem:[#allocation4 + $0x438] sm:$0xff]
    %v1218 = vld [vmem:[#allocation4 + $0x440] sm:$0xff]
    %v1219 = vld [vmem:[#allocation4 + $0x448] sm:$0xff]
    %v1220 = vld [vmem:[#allocation4 + $0x450] sm:$0xff]
    %v1221 = vld [vmem:[#allocation4 + $0x458] sm:$0xff]
    %v1222 = vld [vmem:[#allocation4 + $0x460] sm:$0xff]
    %v1223 = vld [vmem:[#allocation4 + $0x468] sm:$0xff]
    %v1224 = vld [vmem:[#allocation4 + $0x470] sm:$0xff]
    %v1225 = vld [vmem:[#allocation4 + $0x478] sm:$0xff]
    %v1226 = vld [vmem:[#allocation4 + $0x480] sm:$0xff]
    %v1227 = vld [vmem:[#allocation4 + $0x488] sm:$0xff]
    %v1228 = vld [vmem:[#allocation4 + $0x490] sm:$0xff]
    %v1229 = vld [vmem:[#allocation4 + $0x498] sm:$0xff]
    %v1230 = vld [vmem:[#allocation4 + $0x4a0] sm:$0xff]
    %v1231 = vld [vmem:[#allocation4 + $0x4a8] sm:$0xff]
    %v1232 = vld [vmem:[#allocation4 + $0x4b0] sm:$0xff]
    %v1233 = vld [vmem:[#allocation4 + $0x4b8] sm:$0xff]
    %v1234 = vld [vmem:[#allocation4 + $0x4c0] sm:$0xff]
    %v1235 = vld [vmem:[#allocation4 + $0x4c8] sm:$0xff]
    %v1236 = vld [vmem:[#allocation4 + $0x4d0] sm:$0xff]
    %v1237 = vld [vmem:[#allocation4 + $0x4d8] sm:$0xff]
    %v1238 = vld [vmem:[#allocation4 + $0x4e0] sm:$0xff]
    %v1239 = vld [vmem:[#allocation4 + $0x4e8] sm:$0xff]
    %v1240 = vld [vmem:[#allocation4 + $0x4f0] sm:$0xff]
    %v1241 = vld [vmem:[#allocation4 + $0x4f8] sm:$0xff]
    %v1242 = vld [vmem:[#allocation4 + $0x500] sm:$0xff]
    %v1243 = vld [vmem:[#allocation4 + $0x508] sm:$0xff]
    %v1244 = vld [vmem:[#allocation4 + $0x510] sm:$0xff]
    %v1245 = vld [vmem:[#allocation4 + $0x518] sm:$0xff]
    %v1246 = vld [vmem:[#allocation4 + $0x520] sm:$0xff]
    %v1247 = vld [vmem:[#allocation4 + $0x528] sm:$0xff]
    %v1248 = vld [vmem:[#allocation4 + $0x530] sm:$0xff]
    %v1249 = vld [vmem:[#allocation4 + $0x538] sm:$0xff]
    %v1250 = vld [vmem:[#allocation4 + $0x540] sm:$0xff]
    %v1251 = vld [vmem:[#allocation4 + $0x548] sm:$0xff]
    %v1252 = vld [vmem:[#allocation4 + $0x550] sm:$0xff]
    %v1253 = vld [vmem:[#allocation4 + $0x558] sm:$0xff]
    %v1254 = vld [vmem:[#allocation4 + $0x560] sm:$0xff]
    %v1255 = vld [vmem:[#allocation4 + $0x568] sm:$0xff]
    %v1256 = vld [vmem:[#allocation4 + $0x570] sm:$0xff]
    %v1257 = vld [vmem:[#allocation4 + $0x578] sm:$0xff]
    %v1258 = vld [vmem:[#allocation4 + $0x580] sm:$0xff]
    %v1259 = vld [vmem:[#allocation4 + $0x588] sm:$0xff]
    %v1260 = vld [vmem:[#allocation4 + $0x590] sm:$0xff]
    %v1261 = vld [vmem:[#allocation4 + $0x598] sm:$0xff]
    %v1262 = vld [vmem:[#allocation4 + $0x5a0] sm:$0xff]
    %v1263 = vld [vmem:[#allocation4 + $0x5a8] sm:$0xff]
    %v1264 = vld [vmem:[#allocation4 + $0x5b0] sm:$0xff]
    %v1265 = vld [vmem:[#allocation4 + $0x5b8] sm:$0xff]
    %v1266 = vld [vmem:[#allocation4 + $0x5c0] sm:$0xff]
    %v1267 = vld [vmem:[#allocation4 + $0x5c8] sm:$0xff]
    %v1268 = vld [vmem:[#allocation4 + $0x5d0] sm:$0xff]
    %v1269 = vld [vmem:[#allocation4 + $0x5d8] sm:$0xff]
    %v1270 = vld [vmem:[#allocation4 + $0x5e0] sm:$0xff]
    %v1271 = vld [vmem:[#allocation4 + $0x5e8] sm:$0xff]
    %v1272 = vld [vmem:[#allocation4 + $0x5f0] sm:$0xff]
    %v1273 = vld [vmem:[#allocation4 + $0x5f8] sm:$0xff]
    %v1274 = vld [vmem:[#allocation4 + $0x600] sm:$0xff]
    %v1275 = vld [vmem:[#allocation4 + $0x608] sm:$0xff]
    %v1276 = vld [vmem:[#allocation4 + $0x610] sm:$0xff]
    %v1277 = vld [vmem:[#allocation4 + $0x618] sm:$0xff]
    %v1278 = vld [vmem:[#allocation4 + $0x620] sm:$0xff]
    %v1279 = vld [vmem:[#allocation4 + $0x628] sm:$0xff]
    %v1280 = vld [vmem:[#allocation4 + $0x630] sm:$0xff]
    %v1281 = vld [vmem:[#allocation4 + $0x638] sm:$0xff]
    %v1282 = vld [vmem:[#allocation4 + $0x640] sm:$0xff]
    %v1283 = vld [vmem:[#allocation4 + $0x648] sm:$0xff]
    %v1284 = vld [vmem:[#allocation4 + $0x650] sm:$0xff]
    %v1285 = vld [vmem:[#allocation4 + $0x658] sm:$0xff]
    %v1286 = vld [vmem:[#allocation4 + $0x660] sm:$0xff]
    %v1287 = vld [vmem:[#allocation4 + $0x668] sm:$0xff]
    %v1288 = vld [vmem:[#allocation4 + $0x670] sm:$0xff]
    %v1289 = vld [vmem:[#allocation4 + $0x678] sm:$0xff]
    %v1290 = vld [vmem:[#allocation4 + $0x680] sm:$0xff]
    %v1291 = vld [vmem:[#allocation4 + $0x688] sm:$0xff]
    %v1292 = vld [vmem:[#allocation4 + $0x690] sm:$0xff]
    %v1293 = vld [vmem:[#allocation4 + $0x698] sm:$0xff]
    %v1294 = vld [vmem:[#allocation4 + $0x6a0] sm:$0xff]
    %v1295 = vld [vmem:[#allocation4 + $0x6a8] sm:$0xff]
    %v1296 = vld [vmem:[#allocation4 + $0x6b0] sm:$0xff]
    %v1297 = vld [vmem:[#allocation4 + $0x6b8] sm:$0xff]
    %v1298 = vld [vmem:[#allocation4 + $0x6c0] sm:$0xff]
    %v1299 = vld [vmem:[#allocation4 + $0x6c8] sm:$0xff]
    %v1300 = vld [vmem:[#allocation4 + $0x6d0] sm:$0xff]
    %v1301 = vld [vmem:[#allocation4 + $0x6d8] sm:$0xff]
    %v1302 = vld [vmem:[#allocation4 + $0x6e0] sm:$0xff]
    %v1303 = vld [vmem:[#allocation4 + $0x6e8] sm:$0xff]
    %v1304 = vld [vmem:[#allocation4 + $0x6f0] sm:$0xff]
    %v1305 = vld [vmem:[#allocation4 + $0x6f8] sm:$0xff]
    %v1306 = vld [vmem:[#allocation4 + $0x700] sm:$0xff]
    %v1307 = vld [vmem:[#allocation4 + $0x708] sm:$0xff]
    %v1308 = vld [vmem:[#allocation4 + $0x710] sm:$0xff]
    %v1309 = vld [vmem:[#allocation4 + $0x718] sm:$0xff]
    %v1310 = vld [vmem:[#allocation4 + $0x720] sm:$0xff]
    %v1311 = vld [vmem:[#allocation4 + $0x728] sm:$0xff]
    %v1312 = vld [vmem:[#allocation4 + $0x730] sm:$0xff]
    %v1313 = vld [vmem:[#allocation4 + $0x738] sm:$0xff]
    %v1314 = vld [vmem:[#allocation4 + $0x740] sm:$0xff]
    %v1315 = vld [vmem:[#allocation4 + $0x748] sm:$0xff]
    %v1316 = vld [vmem:[#allocation4 + $0x750] sm:$0xff]
    %v1317 = vld [vmem:[#allocation4 + $0x758] sm:$0xff]
    %v1318 = vld [vmem:[#allocation4 + $0x760] sm:$0xff]
    %v1319 = vld [vmem:[#allocation4 + $0x768] sm:$0xff]
    %v1320 = vld [vmem:[#allocation4 + $0x770] sm:$0xff]
    %v1321 = vld [vmem:[#allocation4 + $0x778] sm:$0xff]
    %v1322 = vld [vmem:[#allocation4 + $0x780] sm:$0xff]
    %v1323 = vld [vmem:[#allocation4 + $0x788] sm:$0xff]
    %v1324 = vld [vmem:[#allocation4 + $0x790] sm:$0xff]
    %v1325 = vld [vmem:[#allocation4 + $0x798] sm:$0xff]
    %v1326 = vld [vmem:[#allocation4 + $0x7a0] sm:$0xff]
    %v1327 = vld [vmem:[#allocation4 + $0x7a8] sm:$0xff]
    %v1328 = vld [vmem:[#allocation4 + $0x7b0] sm:$0xff]
    %v1329 = vld [vmem:[#allocation4 + $0x7b8] sm:$0xff]
    %v1330 = vld [vmem:[#allocation4 + $0x7c0] sm:$0xff]
    %v1331 = vld [vmem:[#allocation4 + $0x7c8] sm:$0xff]
    %v1332 = vld [vmem:[#allocation4 + $0x7d0] sm:$0xff]
    %v1333 = vld [vmem:[#allocation4 + $0x7d8] sm:$0xff]
    %v1334 = vld [vmem:[#allocation4 + $0x7e0] sm:$0xff]
    %v1335 = vld [vmem:[#allocation4 + $0x7e8] sm:$0xff]
    %v1336 = vld [vmem:[#allocation4 + $0x7f0] sm:$0xff]
    %v1337 = vld [vmem:[#allocation4 + $0x7f8] sm:$0xff]
    %v1338 = vld [vmem:[%s5] sm:$0xf]
    %v1340 = vlaneseq
    %v1341 = vshrl.u32 %v1340, 7
    %v1342 = vsub.s32 0, %v1341
    %v1343 = vrot.slane %v1338, %v1342
    %v1344 = vlaneseq
    %v1345 = vshrl.u32 %v1344, 7
    %v1346 = vsub.s32 1, %v1345
    %v1347 = vrot.slane %v1338, %v1346
    %v1348 = vlaneseq
    %v1349 = vshrl.u32 %v1348, 7
    %v1350 = vsub.s32 2, %v1349
    %v1351 = vrot.slane %v1338, %v1350
    %v1352 = vlaneseq
    %v1353 = vshrl.u32 %v1352, 7
    %v1354 = vsub.s32 3, %v1353
    %v1355 = vrot.slane %v1338, %v1354
    %v1616 = vunpack.c.l.b16 %v1082
    %v1617 = vunpack.c.h.b16 %v1082
    %v1618 = vunpack.c.l.b16 %v1083
    %v1619 = vunpack.c.h.b16 %v1083
    %v1620 = vunpack.c.l.b16 %v1084
    %v1621 = vunpack.c.h.b16 %v1084
    %v1622 = vunpack.c.l.b16 %v1085
    %v1623 = vunpack.c.h.b16 %v1085
    %v1624 = vunpack.c.l.b16 %v1086
    %v1625 = vunpack.c.h.b16 %v1086
    %v1626 = vunpack.c.l.b16 %v1087
    %v1627 = vunpack.c.h.b16 %v1087
    %v1628 = vunpack.c.l.b16 %v1088
    %v1629 = vunpack.c.h.b16 %v1088
    %v1630 = vunpack.c.l.b16 %v1089
    %v1631 = vunpack.c.h.b16 %v1089
    %v1632 = vunpack.c.l.b16 %v1090
    %v1633 = vunpack.c.h.b16 %v1090
    %v1634 = vunpack.c.l.b16 %v1091
    %v1635 = vunpack.c.h.b16 %v1091
    %v1636 = vunpack.c.l.b16 %v1092
    %v1637 = vunpack.c.h.b16 %v1092
    %v1638 = vunpack.c.l.b16 %v1093
    %v1639 = vunpack.c.h.b16 %v1093
    %v1640 = vunpack.c.l.b16 %v1094
    %v1641 = vunpack.c.h.b16 %v1094
    %v1642 = vunpack.c.l.b16 %v1095
    %v1643 = vunpack.c.h.b16 %v1095
    %v1644 = vunpack.c.l.b16 %v1096
    %v1645 = vunpack.c.h.b16 %v1096
    %v1646 = vunpack.c.l.b16 %v1097
    %v1647 = vunpack.c.h.b16 %v1097
    %v1648 = vunpack.c.l.b16 %v1098
    %v1649 = vunpack.c.h.b16 %v1098
    %v1650 = vunpack.c.l.b16 %v1099
    %v1651 = vunpack.c.h.b16 %v1099
    %v1652 = vunpack.c.l.b16 %v1100
    %v1653 = vunpack.c.h.b16 %v1100
    %v1654 = vunpack.c.l.b16 %v1101
    %v1655 = vunpack.c.h.b16 %v1101
    %v1656 = vunpack.c.l.b16 %v1102
    %v1657 = vunpack.c.h.b16 %v1102
    %v1658 = vunpack.c.l.b16 %v1103
    %v1659 = vunpack.c.h.b16 %v1103
    %v1660 = vunpack.c.l.b16 %v1104
    %v1661 = vunpack.c.h.b16 %v1104
    %v1662 = vunpack.c.l.b16 %v1105
    %v1663 = vunpack.c.h.b16 %v1105
    %v1664 = vunpack.c.l.b16 %v1106
    %v1665 = vunpack.c.h.b16 %v1106
    %v1666 = vunpack.c.l.b16 %v1107
    %v1667 = vunpack.c.h.b16 %v1107
    %v1668 = vunpack.c.l.b16 %v1108
    %v1669 = vunpack.c.h.b16 %v1108
    %v1670 = vunpack.c.l.b16 %v1109
    %v1671 = vunpack.c.h.b16 %v1109
    %v1672 = vunpack.c.l.b16 %v1110
    %v1673 = vunpack.c.h.b16 %v1110
    %v1674 = vunpack.c.l.b16 %v1111
    %v1675 = vunpack.c.h.b16 %v1111
    %v1676 = vunpack.c.l.b16 %v1112
    %v1677 = vunpack.c.h.b16 %v1112
    %v1678 = vunpack.c.l.b16 %v1113
    %v1679 = vunpack.c.h.b16 %v1113
    %v1680 = vunpack.c.l.b16 %v1114
    %v1681 = vunpack.c.h.b16 %v1114
    %v1682 = vunpack.c.l.b16 %v1115
    %v1683 = vunpack.c.h.b16 %v1115
    %v1684 = vunpack.c.l.b16 %v1116
    %v1685 = vunpack.c.h.b16 %v1116
    %v1686 = vunpack.c.l.b16 %v1117
    %v1687 = vunpack.c.h.b16 %v1117
    %v1688 = vunpack.c.l.b16 %v1118
    %v1689 = vunpack.c.h.b16 %v1118
    %v1690 = vunpack.c.l.b16 %v1119
    %v1691 = vunpack.c.h.b16 %v1119
    %v1692 = vunpack.c.l.b16 %v1120
    %v1693 = vunpack.c.h.b16 %v1120
    %v1694 = vunpack.c.l.b16 %v1121
    %v1695 = vunpack.c.h.b16 %v1121
    %v1696 = vunpack.c.l.b16 %v1122
    %v1697 = vunpack.c.h.b16 %v1122
    %v1698 = vunpack.c.l.b16 %v1123
    %v1699 = vunpack.c.h.b16 %v1123
    %v1700 = vunpack.c.l.b16 %v1124
    %v1701 = vunpack.c.h.b16 %v1124
    %v1702 = vunpack.c.l.b16 %v1125
    %v1703 = vunpack.c.h.b16 %v1125
    %v1704 = vunpack.c.l.b16 %v1126
    %v1705 = vunpack.c.h.b16 %v1126
    %v1706 = vunpack.c.l.b16 %v1127
    %v1707 = vunpack.c.h.b16 %v1127
    %v1708 = vunpack.c.l.b16 %v1128
    %v1709 = vunpack.c.h.b16 %v1128
    %v1710 = vunpack.c.l.b16 %v1129
    %v1711 = vunpack.c.h.b16 %v1129
    %v1712 = vunpack.c.l.b16 %v1130
    %v1713 = vunpack.c.h.b16 %v1130
    %v1714 = vunpack.c.l.b16 %v1131
    %v1715 = vunpack.c.h.b16 %v1131
    %v1716 = vunpack.c.l.b16 %v1132
    %v1717 = vunpack.c.h.b16 %v1132
    %v1718 = vunpack.c.l.b16 %v1133
    %v1719 = vunpack.c.h.b16 %v1133
    %v1720 = vunpack.c.l.b16 %v1134
    %v1721 = vunpack.c.h.b16 %v1134
    %v1722 = vunpack.c.l.b16 %v1135
    %v1723 = vunpack.c.h.b16 %v1135
    %v1724 = vunpack.c.l.b16 %v1136
    %v1725 = vunpack.c.h.b16 %v1136
    %v1726 = vunpack.c.l.b16 %v1137
    %v1727 = vunpack.c.h.b16 %v1137
    %v1728 = vunpack.c.l.b16 %v1138
    %v1729 = vunpack.c.h.b16 %v1138
    %v1730 = vunpack.c.l.b16 %v1139
    %v1731 = vunpack.c.h.b16 %v1139
    %v1732 = vunpack.c.l.b16 %v1140
    %v1733 = vunpack.c.h.b16 %v1140
    %v1734 = vunpack.c.l.b16 %v1141
    %v1735 = vunpack.c.h.b16 %v1141
    %v1736 = vunpack.c.l.b16 %v1142
    %v1737 = vunpack.c.h.b16 %v1142
    %v1738 = vunpack.c.l.b16 %v1143
    %v1739 = vunpack.c.h.b16 %v1143
    %v1740 = vunpack.c.l.b16 %v1144
    %v1741 = vunpack.c.h.b16 %v1144
    %v1742 = vunpack.c.l.b16 %v1145
    %v1743 = vunpack.c.h.b16 %v1145
    %v1744 = vunpack.c.l.b16 %v1146
    %v1745 = vunpack.c.h.b16 %v1146
    %v1746 = vunpack.c.l.b16 %v1147
    %v1747 = vunpack.c.h.b16 %v1147
    %v1748 = vunpack.c.l.b16 %v1148
    %v1749 = vunpack.c.h.b16 %v1148
    %v1750 = vunpack.c.l.b16 %v1149
    %v1751 = vunpack.c.h.b16 %v1149
    %v1752 = vunpack.c.l.b16 %v1150
    %v1753 = vunpack.c.h.b16 %v1150
    %v1754 = vunpack.c.l.b16 %v1151
    %v1755 = vunpack.c.h.b16 %v1151
    %v1756 = vunpack.c.l.b16 %v1152
    %v1757 = vunpack.c.h.b16 %v1152
    %v1758 = vunpack.c.l.b16 %v1153
    %v1759 = vunpack.c.h.b16 %v1153
    %v1760 = vunpack.c.l.b16 %v1154
    %v1761 = vunpack.c.h.b16 %v1154
    %v1762 = vunpack.c.l.b16 %v1155
    %v1763 = vunpack.c.h.b16 %v1155
    %v1764 = vunpack.c.l.b16 %v1156
    %v1765 = vunpack.c.h.b16 %v1156
    %v1766 = vunpack.c.l.b16 %v1157
    %v1767 = vunpack.c.h.b16 %v1157
    %v1768 = vunpack.c.l.b16 %v1158
    %v1769 = vunpack.c.h.b16 %v1158
    %v1770 = vunpack.c.l.b16 %v1159
    %v1771 = vunpack.c.h.b16 %v1159
    %v1772 = vunpack.c.l.b16 %v1160
    %v1773 = vunpack.c.h.b16 %v1160
    %v1774 = vunpack.c.l.b16 %v1161
    %v1775 = vunpack.c.h.b16 %v1161
    %v1776 = vunpack.c.l.b16 %v1162
    %v1777 = vunpack.c.h.b16 %v1162
    %v1778 = vunpack.c.l.b16 %v1163
    %v1779 = vunpack.c.h.b16 %v1163
    %v1780 = vunpack.c.l.b16 %v1164
    %v1781 = vunpack.c.h.b16 %v1164
    %v1782 = vunpack.c.l.b16 %v1165
    %v1783 = vunpack.c.h.b16 %v1165
    %v1784 = vunpack.c.l.b16 %v1166
    %v1785 = vunpack.c.h.b16 %v1166
    %v1786 = vunpack.c.l.b16 %v1167
    %v1787 = vunpack.c.h.b16 %v1167
    %v1788 = vunpack.c.l.b16 %v1168
    %v1789 = vunpack.c.h.b16 %v1168
    %v1790 = vunpack.c.l.b16 %v1169
    %v1791 = vunpack.c.h.b16 %v1169
    %v1792 = vunpack.c.l.b16 %v1170
    %v1793 = vunpack.c.h.b16 %v1170
    %v1794 = vunpack.c.l.b16 %v1171
    %v1795 = vunpack.c.h.b16 %v1171
    %v1796 = vunpack.c.l.b16 %v1172
    %v1797 = vunpack.c.h.b16 %v1172
    %v1798 = vunpack.c.l.b16 %v1173
    %v1799 = vunpack.c.h.b16 %v1173
    %v1800 = vunpack.c.l.b16 %v1174
    %v1801 = vunpack.c.h.b16 %v1174
    %v1802 = vunpack.c.l.b16 %v1175
    %v1803 = vunpack.c.h.b16 %v1175
    %v1804 = vunpack.c.l.b16 %v1176
    %v1805 = vunpack.c.h.b16 %v1176
    %v1806 = vunpack.c.l.b16 %v1177
    %v1807 = vunpack.c.h.b16 %v1177
    %v1808 = vunpack.c.l.b16 %v1178
    %v1809 = vunpack.c.h.b16 %v1178
    %v1810 = vunpack.c.l.b16 %v1179
    %v1811 = vunpack.c.h.b16 %v1179
    %v1812 = vunpack.c.l.b16 %v1180
    %v1813 = vunpack.c.h.b16 %v1180
    %v1814 = vunpack.c.l.b16 %v1181
    %v1815 = vunpack.c.h.b16 %v1181
    %v1816 = vunpack.c.l.b16 %v1182
    %v1817 = vunpack.c.h.b16 %v1182
    %v1818 = vunpack.c.l.b16 %v1183
    %v1819 = vunpack.c.h.b16 %v1183
    %v1820 = vunpack.c.l.b16 %v1184
    %v1821 = vunpack.c.h.b16 %v1184
    %v1822 = vunpack.c.l.b16 %v1185
    %v1823 = vunpack.c.h.b16 %v1185
    %v1824 = vunpack.c.l.b16 %v1186
    %v1825 = vunpack.c.h.b16 %v1186
    %v1826 = vunpack.c.l.b16 %v1187
    %v1827 = vunpack.c.h.b16 %v1187
    %v1828 = vunpack.c.l.b16 %v1188
    %v1829 = vunpack.c.h.b16 %v1188
    %v1830 = vunpack.c.l.b16 %v1189
    %v1831 = vunpack.c.h.b16 %v1189
    %v1832 = vunpack.c.l.b16 %v1190
    %v1833 = vunpack.c.h.b16 %v1190
    %v1834 = vunpack.c.l.b16 %v1191
    %v1835 = vunpack.c.h.b16 %v1191
    %v1836 = vunpack.c.l.b16 %v1192
    %v1837 = vunpack.c.h.b16 %v1192
    %v1838 = vunpack.c.l.b16 %v1193
    %v1839 = vunpack.c.h.b16 %v1193
    %v1840 = vunpack.c.l.b16 %v1194
    %v1841 = vunpack.c.h.b16 %v1194
    %v1842 = vunpack.c.l.b16 %v1195
    %v1843 = vunpack.c.h.b16 %v1195
    %v1844 = vunpack.c.l.b16 %v1196
    %v1845 = vunpack.c.h.b16 %v1196
    %v1846 = vunpack.c.l.b16 %v1197
    %v1847 = vunpack.c.h.b16 %v1197
    %v1848 = vunpack.c.l.b16 %v1198
    %v1849 = vunpack.c.h.b16 %v1198
    %v1850 = vunpack.c.l.b16 %v1199
    %v1851 = vunpack.c.h.b16 %v1199
    %v1852 = vunpack.c.l.b16 %v1200
    %v1853 = vunpack.c.h.b16 %v1200
    %v1854 = vunpack.c.l.b16 %v1201
    %v1855 = vunpack.c.h.b16 %v1201
    %v1856 = vunpack.c.l.b16 %v1202
    %v1857 = vunpack.c.h.b16 %v1202
    %v1858 = vunpack.c.l.b16 %v1203
    %v1859 = vunpack.c.h.b16 %v1203
    %v1860 = vunpack.c.l.b16 %v1204
    %v1861 = vunpack.c.h.b16 %v1204
    %v1862 = vunpack.c.l.b16 %v1205
    %v1863 = vunpack.c.h.b16 %v1205
    %v1864 = vunpack.c.l.b16 %v1206
    %v1865 = vunpack.c.h.b16 %v1206
    %v1866 = vunpack.c.l.b16 %v1207
    %v1867 = vunpack.c.h.b16 %v1207
    %v1868 = vunpack.c.l.b16 %v1208
    %v1869 = vunpack.c.h.b16 %v1208
    %v1870 = vunpack.c.l.b16 %v1209
    %v1871 = vunpack.c.h.b16 %v1209
    %v1872 = vunpack.c.l.b16 %v1210
    %v1873 = vunpack.c.h.b16 %v1210
    %v1874 = vunpack.c.l.b16 %v1211
    %v1875 = vunpack.c.h.b16 %v1211
    %v1876 = vunpack.c.l.b16 %v1212
    %v1877 = vunpack.c.h.b16 %v1212
    %v1878 = vunpack.c.l.b16 %v1213
    %v1879 = vunpack.c.h.b16 %v1213
    %v1880 = vunpack.c.l.b16 %v1214
    %v1881 = vunpack.c.h.b16 %v1214
    %v1882 = vunpack.c.l.b16 %v1215
    %v1883 = vunpack.c.h.b16 %v1215
    %v1884 = vunpack.c.l.b16 %v1216
    %v1885 = vunpack.c.h.b16 %v1216
    %v1886 = vunpack.c.l.b16 %v1217
    %v1887 = vunpack.c.h.b16 %v1217
    %v1888 = vunpack.c.l.b16 %v1218
    %v1889 = vunpack.c.h.b16 %v1218
    %v1890 = vunpack.c.l.b16 %v1219
    %v1891 = vunpack.c.h.b16 %v1219
    %v1892 = vunpack.c.l.b16 %v1220
    %v1893 = vunpack.c.h.b16 %v1220
    %v1894 = vunpack.c.l.b16 %v1221
    %v1895 = vunpack.c.h.b16 %v1221
    %v1896 = vunpack.c.l.b16 %v1222
    %v1897 = vunpack.c.h.b16 %v1222
    %v1898 = vunpack.c.l.b16 %v1223
    %v1899 = vunpack.c.h.b16 %v1223
    %v1900 = vunpack.c.l.b16 %v1224
    %v1901 = vunpack.c.h.b16 %v1224
    %v1902 = vunpack.c.l.b16 %v1225
    %v1903 = vunpack.c.h.b16 %v1225
    %v1904 = vunpack.c.l.b16 %v1226
    %v1905 = vunpack.c.h.b16 %v1226
    %v1906 = vunpack.c.l.b16 %v1227
    %v1907 = vunpack.c.h.b16 %v1227
    %v1908 = vunpack.c.l.b16 %v1228
    %v1909 = vunpack.c.h.b16 %v1228
    %v1910 = vunpack.c.l.b16 %v1229
    %v1911 = vunpack.c.h.b16 %v1229
    %v1912 = vunpack.c.l.b16 %v1230
    %v1913 = vunpack.c.h.b16 %v1230
    %v1914 = vunpack.c.l.b16 %v1231
    %v1915 = vunpack.c.h.b16 %v1231
    %v1916 = vunpack.c.l.b16 %v1232
    %v1917 = vunpack.c.h.b16 %v1232
    %v1918 = vunpack.c.l.b16 %v1233
    %v1919 = vunpack.c.h.b16 %v1233
    %v1920 = vunpack.c.l.b16 %v1234
    %v1921 = vunpack.c.h.b16 %v1234
    %v1922 = vunpack.c.l.b16 %v1235
    %v1923 = vunpack.c.h.b16 %v1235
    %v1924 = vunpack.c.l.b16 %v1236
    %v1925 = vunpack.c.h.b16 %v1236
    %v1926 = vunpack.c.l.b16 %v1237
    %v1927 = vunpack.c.h.b16 %v1237
    %v1928 = vunpack.c.l.b16 %v1238
    %v1929 = vunpack.c.h.b16 %v1238
    %v1930 = vunpack.c.l.b16 %v1239
    %v1931 = vunpack.c.h.b16 %v1239
    %v1932 = vunpack.c.l.b16 %v1240
    %v1933 = vunpack.c.h.b16 %v1240
    %v1934 = vunpack.c.l.b16 %v1241
    %v1935 = vunpack.c.h.b16 %v1241
    %v1936 = vunpack.c.l.b16 %v1242
    %v1937 = vunpack.c.h.b16 %v1242
    %v1938 = vunpack.c.l.b16 %v1243
    %v1939 = vunpack.c.h.b16 %v1243
    %v1940 = vunpack.c.l.b16 %v1244
    %v1941 = vunpack.c.h.b16 %v1244
    %v1942 = vunpack.c.l.b16 %v1245
    %v1943 = vunpack.c.h.b16 %v1245
    %v1944 = vunpack.c.l.b16 %v1246
    %v1945 = vunpack.c.h.b16 %v1246
    %v1946 = vunpack.c.l.b16 %v1247
    %v1947 = vunpack.c.h.b16 %v1247
    %v1948 = vunpack.c.l.b16 %v1248
    %v1949 = vunpack.c.h.b16 %v1248
    %v1950 = vunpack.c.l.b16 %v1249
    %v1951 = vunpack.c.h.b16 %v1249
    %v1952 = vunpack.c.l.b16 %v1250
    %v1953 = vunpack.c.h.b16 %v1250
    %v1954 = vunpack.c.l.b16 %v1251
    %v1955 = vunpack.c.h.b16 %v1251
    %v1956 = vunpack.c.l.b16 %v1252
    %v1957 = vunpack.c.h.b16 %v1252
    %v1958 = vunpack.c.l.b16 %v1253
    %v1959 = vunpack.c.h.b16 %v1253
    %v1960 = vunpack.c.l.b16 %v1254
    %v1961 = vunpack.c.h.b16 %v1254
    %v1962 = vunpack.c.l.b16 %v1255
    %v1963 = vunpack.c.h.b16 %v1255
    %v1964 = vunpack.c.l.b16 %v1256
    %v1965 = vunpack.c.h.b16 %v1256
    %v1966 = vunpack.c.l.b16 %v1257
    %v1967 = vunpack.c.h.b16 %v1257
    %v1968 = vunpack.c.l.b16 %v1258
    %v1969 = vunpack.c.h.b16 %v1258
    %v1970 = vunpack.c.l.b16 %v1259
    %v1971 = vunpack.c.h.b16 %v1259
    %v1972 = vunpack.c.l.b16 %v1260
    %v1973 = vunpack.c.h.b16 %v1260
    %v1974 = vunpack.c.l.b16 %v1261
    %v1975 = vunpack.c.h.b16 %v1261
    %v1976 = vunpack.c.l.b16 %v1262
    %v1977 = vunpack.c.h.b16 %v1262
    %v1978 = vunpack.c.l.b16 %v1263
    %v1979 = vunpack.c.h.b16 %v1263
    %v1980 = vunpack.c.l.b16 %v1264
    %v1981 = vunpack.c.h.b16 %v1264
    %v1982 = vunpack.c.l.b16 %v1265
    %v1983 = vunpack.c.h.b16 %v1265
    %v1984 = vunpack.c.l.b16 %v1266
    %v1985 = vunpack.c.h.b16 %v1266
    %v1986 = vunpack.c.l.b16 %v1267
    %v1987 = vunpack.c.h.b16 %v1267
    %v1988 = vunpack.c.l.b16 %v1268
    %v1989 = vunpack.c.h.b16 %v1268
    %v1990 = vunpack.c.l.b16 %v1269
    %v1991 = vunpack.c.h.b16 %v1269
    %v1992 = vunpack.c.l.b16 %v1270
    %v1993 = vunpack.c.h.b16 %v1270
    %v1994 = vunpack.c.l.b16 %v1271
    %v1995 = vunpack.c.h.b16 %v1271
    %v1996 = vunpack.c.l.b16 %v1272
    %v1997 = vunpack.c.h.b16 %v1272
    %v1998 = vunpack.c.l.b16 %v1273
    %v1999 = vunpack.c.h.b16 %v1273
    %v2000 = vunpack.c.l.b16 %v1274
    %v2001 = vunpack.c.h.b16 %v1274
    %v2002 = vunpack.c.l.b16 %v1275
    %v2003 = vunpack.c.h.b16 %v1275
    %v2004 = vunpack.c.l.b16 %v1276
    %v2005 = vunpack.c.h.b16 %v1276
    %v2006 = vunpack.c.l.b16 %v1277
    %v2007 = vunpack.c.h.b16 %v1277
    %v2008 = vunpack.c.l.b16 %v1278
    %v2009 = vunpack.c.h.b16 %v1278
    %v2010 = vunpack.c.l.b16 %v1279
    %v2011 = vunpack.c.h.b16 %v1279
    %v2012 = vunpack.c.l.b16 %v1280
    %v2013 = vunpack.c.h.b16 %v1280
    %v2014 = vunpack.c.l.b16 %v1281
    %v2015 = vunpack.c.h.b16 %v1281
    %v2016 = vunpack.c.l.b16 %v1282
    %v2017 = vunpack.c.h.b16 %v1282
    %v2018 = vunpack.c.l.b16 %v1283
    %v2019 = vunpack.c.h.b16 %v1283
    %v2020 = vunpack.c.l.b16 %v1284
    %v2021 = vunpack.c.h.b16 %v1284
    %v2022 = vunpack.c.l.b16 %v1285
    %v2023 = vunpack.c.h.b16 %v1285
    %v2024 = vunpack.c.l.b16 %v1286
    %v2025 = vunpack.c.h.b16 %v1286
    %v2026 = vunpack.c.l.b16 %v1287
    %v2027 = vunpack.c.h.b16 %v1287
    %v2028 = vunpack.c.l.b16 %v1288
    %v2029 = vunpack.c.h.b16 %v1288
    %v2030 = vunpack.c.l.b16 %v1289
    %v2031 = vunpack.c.h.b16 %v1289
    %v2032 = vunpack.c.l.b16 %v1290
    %v2033 = vunpack.c.h.b16 %v1290
    %v2034 = vunpack.c.l.b16 %v1291
    %v2035 = vunpack.c.h.b16 %v1291
    %v2036 = vunpack.c.l.b16 %v1292
    %v2037 = vunpack.c.h.b16 %v1292
    %v2038 = vunpack.c.l.b16 %v1293
    %v2039 = vunpack.c.h.b16 %v1293
    %v2040 = vunpack.c.l.b16 %v1294
    %v2041 = vunpack.c.h.b16 %v1294
    %v2042 = vunpack.c.l.b16 %v1295
    %v2043 = vunpack.c.h.b16 %v1295
    %v2044 = vunpack.c.l.b16 %v1296
    %v2045 = vunpack.c.h.b16 %v1296
    %v2046 = vunpack.c.l.b16 %v1297
    %v2047 = vunpack.c.h.b16 %v1297
    %v2048 = vunpack.c.l.b16 %v1298
    %v2049 = vunpack.c.h.b16 %v1298
    %v2050 = vunpack.c.l.b16 %v1299
    %v2051 = vunpack.c.h.b16 %v1299
    %v2052 = vunpack.c.l.b16 %v1300
    %v2053 = vunpack.c.h.b16 %v1300
    %v2054 = vunpack.c.l.b16 %v1301
    %v2055 = vunpack.c.h.b16 %v1301
    %v2056 = vunpack.c.l.b16 %v1302
    %v2057 = vunpack.c.h.b16 %v1302
    %v2058 = vunpack.c.l.b16 %v1303
    %v2059 = vunpack.c.h.b16 %v1303
    %v2060 = vunpack.c.l.b16 %v1304
    %v2061 = vunpack.c.h.b16 %v1304
    %v2062 = vunpack.c.l.b16 %v1305
    %v2063 = vunpack.c.h.b16 %v1305
    %v2064 = vunpack.c.l.b16 %v1306
    %v2065 = vunpack.c.h.b16 %v1306
    %v2066 = vunpack.c.l.b16 %v1307
    %v2067 = vunpack.c.h.b16 %v1307
    %v2068 = vunpack.c.l.b16 %v1308
    %v2069 = vunpack.c.h.b16 %v1308
    %v2070 = vunpack.c.l.b16 %v1309
    %v2071 = vunpack.c.h.b16 %v1309
    %v2072 = vunpack.c.l.b16 %v1310
    %v2073 = vunpack.c.h.b16 %v1310
    %v2074 = vunpack.c.l.b16 %v1311
    %v2075 = vunpack.c.h.b16 %v1311
    %v2076 = vunpack.c.l.b16 %v1312
    %v2077 = vunpack.c.h.b16 %v1312
    %v2078 = vunpack.c.l.b16 %v1313
    %v2079 = vunpack.c.h.b16 %v1313
    %v2080 = vunpack.c.l.b16 %v1314
    %v2081 = vunpack.c.h.b16 %v1314
    %v2082 = vunpack.c.l.b16 %v1315
    %v2083 = vunpack.c.h.b16 %v1315
    %v2084 = vunpack.c.l.b16 %v1316
    %v2085 = vunpack.c.h.b16 %v1316
    %v2086 = vunpack.c.l.b16 %v1317
    %v2087 = vunpack.c.h.b16 %v1317
    %v2088 = vunpack.c.l.b16 %v1318
    %v2089 = vunpack.c.h.b16 %v1318
    %v2090 = vunpack.c.l.b16 %v1319
    %v2091 = vunpack.c.h.b16 %v1319
    %v2092 = vunpack.c.l.b16 %v1320
    %v2093 = vunpack.c.h.b16 %v1320
    %v2094 = vunpack.c.l.b16 %v1321
    %v2095 = vunpack.c.h.b16 %v1321
    %v2096 = vunpack.c.l.b16 %v1322
    %v2097 = vunpack.c.h.b16 %v1322
    %v2098 = vunpack.c.l.b16 %v1323
    %v2099 = vunpack.c.h.b16 %v1323
    %v2100 = vunpack.c.l.b16 %v1324
    %v2101 = vunpack.c.h.b16 %v1324
    %v2102 = vunpack.c.l.b16 %v1325
    %v2103 = vunpack.c.h.b16 %v1325
    %v2104 = vunpack.c.l.b16 %v1326
    %v2105 = vunpack.c.h.b16 %v1326
    %v2106 = vunpack.c.l.b16 %v1327
    %v2107 = vunpack.c.h.b16 %v1327
    %v2108 = vunpack.c.l.b16 %v1328
    %v2109 = vunpack.c.h.b16 %v1328
    %v2110 = vunpack.c.l.b16 %v1329
    %v2111 = vunpack.c.h.b16 %v1329
    %v2112 = vunpack.c.l.b16 %v1330
    %v2113 = vunpack.c.h.b16 %v1330
    %v2114 = vunpack.c.l.b16 %v1331
    %v2115 = vunpack.c.h.b16 %v1331
    %v2116 = vunpack.c.l.b16 %v1332
    %v2117 = vunpack.c.h.b16 %v1332
    %v2118 = vunpack.c.l.b16 %v1333
    %v2119 = vunpack.c.h.b16 %v1333
    %v2120 = vunpack.c.l.b16 %v1334
    %v2121 = vunpack.c.h.b16 %v1334
    %v2122 = vunpack.c.l.b16 %v1335
    %v2123 = vunpack.c.h.b16 %v1335
    %v2124 = vunpack.c.l.b16 %v1336
    %v2125 = vunpack.c.h.b16 %v1336
    %v2126 = vunpack.c.l.b16 %v1337
    %v2127 = vunpack.c.h.b16 %v1337
    %v2128 = vpack.c.b16 %v1620, %v1616
    %v2129 = vpack.c.b16 %v1621, %v1617
    %v2130 = vpack.c.b16 %v1622, %v1618
    %v2131 = vpack.c.b16 %v1623, %v1619
    %v2132 = vpack.c.b16 %v1628, %v1624
    %v2133 = vpack.c.b16 %v1629, %v1625
    %v2134 = vpack.c.b16 %v1630, %v1626
    %v2135 = vpack.c.b16 %v1631, %v1627
    %v2136 = vpack.c.b16 %v1636, %v1632
    %v2137 = vpack.c.b16 %v1637, %v1633
    %v2138 = vpack.c.b16 %v1638, %v1634
    %v2139 = vpack.c.b16 %v1639, %v1635
    %v2140 = vpack.c.b16 %v1644, %v1640
    %v2141 = vpack.c.b16 %v1645, %v1641
    %v2142 = vpack.c.b16 %v1646, %v1642
    %v2143 = vpack.c.b16 %v1647, %v1643
    %v2144 = vpack.c.b16 %v1652, %v1648
    %v2145 = vpack.c.b16 %v1653, %v1649
    %v2146 = vpack.c.b16 %v1654, %v1650
    %v2147 = vpack.c.b16 %v1655, %v1651
    %v2148 = vpack.c.b16 %v1660, %v1656
    %v2149 = vpack.c.b16 %v1661, %v1657
    %v2150 = vpack.c.b16 %v1662, %v1658
    %v2151 = vpack.c.b16 %v1663, %v1659
    %v2152 = vpack.c.b16 %v1668, %v1664
    %v2153 = vpack.c.b16 %v1669, %v1665
    %v2154 = vpack.c.b16 %v1670, %v1666
    %v2155 = vpack.c.b16 %v1671, %v1667
    %v2156 = vpack.c.b16 %v1676, %v1672
    %v2157 = vpack.c.b16 %v1677, %v1673
    %v2158 = vpack.c.b16 %v1678, %v1674
    %v2159 = vpack.c.b16 %v1679, %v1675
    %v2160 = vpack.c.b16 %v1684, %v1680
    %v2161 = vpack.c.b16 %v1685, %v1681
    %v2162 = vpack.c.b16 %v1686, %v1682
    %v2163 = vpack.c.b16 %v1687, %v1683
    %v2164 = vpack.c.b16 %v1692, %v1688
    %v2165 = vpack.c.b16 %v1693, %v1689
    %v2166 = vpack.c.b16 %v1694, %v1690
    %v2167 = vpack.c.b16 %v1695, %v1691
    %v2168 = vpack.c.b16 %v1700, %v1696
    %v2169 = vpack.c.b16 %v1701, %v1697
    %v2170 = vpack.c.b16 %v1702, %v1698
    %v2171 = vpack.c.b16 %v1703, %v1699
    %v2172 = vpack.c.b16 %v1708, %v1704
    %v2173 = vpack.c.b16 %v1709, %v1705
    %v2174 = vpack.c.b16 %v1710, %v1706
    %v2175 = vpack.c.b16 %v1711, %v1707
    %v2176 = vpack.c.b16 %v1716, %v1712
    %v2177 = vpack.c.b16 %v1717, %v1713
    %v2178 = vpack.c.b16 %v1718, %v1714
    %v2179 = vpack.c.b16 %v1719, %v1715
    %v2180 = vpack.c.b16 %v1724, %v1720
    %v2181 = vpack.c.b16 %v1725, %v1721
    %v2182 = vpack.c.b16 %v1726, %v1722
    %v2183 = vpack.c.b16 %v1727, %v1723
    %v2184 = vpack.c.b16 %v1732, %v1728
    %v2185 = vpack.c.b16 %v1733, %v1729
    %v2186 = vpack.c.b16 %v1734, %v1730
    %v2187 = vpack.c.b16 %v1735, %v1731
    %v2188 = vpack.c.b16 %v1740, %v1736
    %v2189 = vpack.c.b16 %v1741, %v1737
    %v2190 = vpack.c.b16 %v1742, %v1738
    %v2191 = vpack.c.b16 %v1743, %v1739
    %v2192 = vpack.c.b16 %v1748, %v1744
    %v2193 = vpack.c.b16 %v1749, %v1745
    %v2194 = vpack.c.b16 %v1750, %v1746
    %v2195 = vpack.c.b16 %v1751, %v1747
    %v2196 = vpack.c.b16 %v1756, %v1752
    %v2197 = vpack.c.b16 %v1757, %v1753
    %v2198 = vpack.c.b16 %v1758, %v1754
    %v2199 = vpack.c.b16 %v1759, %v1755
    %v2200 = vpack.c.b16 %v1764, %v1760
    %v2201 = vpack.c.b16 %v1765, %v1761
    %v2202 = vpack.c.b16 %v1766, %v1762
    %v2203 = vpack.c.b16 %v1767, %v1763
    %v2204 = vpack.c.b16 %v1772, %v1768
    %v2205 = vpack.c.b16 %v1773, %v1769
    %v2206 = vpack.c.b16 %v1774, %v1770
    %v2207 = vpack.c.b16 %v1775, %v1771
    %v2208 = vpack.c.b16 %v1780, %v1776
    %v2209 = vpack.c.b16 %v1781, %v1777
    %v2210 = vpack.c.b16 %v1782, %v1778
    %v2211 = vpack.c.b16 %v1783, %v1779
    %v2212 = vpack.c.b16 %v1788, %v1784
    %v2213 = vpack.c.b16 %v1789, %v1785
    %v2214 = vpack.c.b16 %v1790, %v1786
    %v2215 = vpack.c.b16 %v1791, %v1787
    %v2216 = vpack.c.b16 %v1796, %v1792
    %v2217 = vpack.c.b16 %v1797, %v1793
    %v2218 = vpack.c.b16 %v1798, %v1794
    %v2219 = vpack.c.b16 %v1799, %v1795
    %v2220 = vpack.c.b16 %v1804, %v1800
    %v2221 = vpack.c.b16 %v1805, %v1801
    %v2222 = vpack.c.b16 %v1806, %v1802
    %v2223 = vpack.c.b16 %v1807, %v1803
    %v2224 = vpack.c.b16 %v1812, %v1808
    %v2225 = vpack.c.b16 %v1813, %v1809
    %v2226 = vpack.c.b16 %v1814, %v1810
    %v2227 = vpack.c.b16 %v1815, %v1811
    %v2228 = vpack.c.b16 %v1820, %v1816
    %v2229 = vpack.c.b16 %v1821, %v1817
    %v2230 = vpack.c.b16 %v1822, %v1818
    %v2231 = vpack.c.b16 %v1823, %v1819
    %v2232 = vpack.c.b16 %v1828, %v1824
    %v2233 = vpack.c.b16 %v1829, %v1825
    %v2234 = vpack.c.b16 %v1830, %v1826
    %v2235 = vpack.c.b16 %v1831, %v1827
    %v2236 = vpack.c.b16 %v1836, %v1832
    %v2237 = vpack.c.b16 %v1837, %v1833
    %v2238 = vpack.c.b16 %v1838, %v1834
    %v2239 = vpack.c.b16 %v1839, %v1835
    %v2240 = vpack.c.b16 %v1844, %v1840
    %v2241 = vpack.c.b16 %v1845, %v1841
    %v2242 = vpack.c.b16 %v1846, %v1842
    %v2243 = vpack.c.b16 %v1847, %v1843
    %v2244 = vpack.c.b16 %v1852, %v1848
    %v2245 = vpack.c.b16 %v1853, %v1849
    %v2246 = vpack.c.b16 %v1854, %v1850
    %v2247 = vpack.c.b16 %v1855, %v1851
    %v2248 = vpack.c.b16 %v1860, %v1856
    %v2249 = vpack.c.b16 %v1861, %v1857
    %v2250 = vpack.c.b16 %v1862, %v1858
    %v2251 = vpack.c.b16 %v1863, %v1859
    %v2252 = vpack.c.b16 %v1868, %v1864
    %v2253 = vpack.c.b16 %v1869, %v1865
    %v2254 = vpack.c.b16 %v1870, %v1866
    %v2255 = vpack.c.b16 %v1871, %v1867
    %v2256 = vpack.c.b16 %v1876, %v1872
    %v2257 = vpack.c.b16 %v1877, %v1873
    %v2258 = vpack.c.b16 %v1878, %v1874
    %v2259 = vpack.c.b16 %v1879, %v1875
    %v2260 = vpack.c.b16 %v1884, %v1880
    %v2261 = vpack.c.b16 %v1885, %v1881
    %v2262 = vpack.c.b16 %v1886, %v1882
    %v2263 = vpack.c.b16 %v1887, %v1883
    %v2264 = vpack.c.b16 %v1892, %v1888
    %v2265 = vpack.c.b16 %v1893, %v1889
    %v2266 = vpack.c.b16 %v1894, %v1890
    %v2267 = vpack.c.b16 %v1895, %v1891
    %v2268 = vpack.c.b16 %v1900, %v1896
    %v2269 = vpack.c.b16 %v1901, %v1897
    %v2270 = vpack.c.b16 %v1902, %v1898
    %v2271 = vpack.c.b16 %v1903, %v1899
    %v2272 = vpack.c.b16 %v1908, %v1904
    %v2273 = vpack.c.b16 %v1909, %v1905
    %v2274 = vpack.c.b16 %v1910, %v1906
    %v2275 = vpack.c.b16 %v1911, %v1907
    %v2276 = vpack.c.b16 %v1916, %v1912
    %v2277 = vpack.c.b16 %v1917, %v1913
    %v2278 = vpack.c.b16 %v1918, %v1914
    %v2279 = vpack.c.b16 %v1919, %v1915
    %v2280 = vpack.c.b16 %v1924, %v1920
    %v2281 = vpack.c.b16 %v1925, %v1921
    %v2282 = vpack.c.b16 %v1926, %v1922
    %v2283 = vpack.c.b16 %v1927, %v1923
    %v2284 = vpack.c.b16 %v1932, %v1928
    %v2285 = vpack.c.b16 %v1933, %v1929
    %v2286 = vpack.c.b16 %v1934, %v1930
    %v2287 = vpack.c.b16 %v1935, %v1931
    %v2288 = vpack.c.b16 %v1940, %v1936
    %v2289 = vpack.c.b16 %v1941, %v1937
    %v2290 = vpack.c.b16 %v1942, %v1938
    %v2291 = vpack.c.b16 %v1943, %v1939
    %v2292 = vpack.c.b16 %v1948, %v1944
    %v2293 = vpack.c.b16 %v1949, %v1945
    %v2294 = vpack.c.b16 %v1950, %v1946
    %v2295 = vpack.c.b16 %v1951, %v1947
    %v2296 = vpack.c.b16 %v1956, %v1952
    %v2297 = vpack.c.b16 %v1957, %v1953
    %v2298 = vpack.c.b16 %v1958, %v1954
    %v2299 = vpack.c.b16 %v1959, %v1955
    %v2300 = vpack.c.b16 %v1964, %v1960
    %v2301 = vpack.c.b16 %v1965, %v1961
    %v2302 = vpack.c.b16 %v1966, %v1962
    %v2303 = vpack.c.b16 %v1967, %v1963
    %v2304 = vpack.c.b16 %v1972, %v1968
    %v2305 = vpack.c.b16 %v1973, %v1969
    %v2306 = vpack.c.b16 %v1974, %v1970
    %v2307 = vpack.c.b16 %v1975, %v1971
    %v2308 = vpack.c.b16 %v1980, %v1976
    %v2309 = vpack.c.b16 %v1981, %v1977
    %v2310 = vpack.c.b16 %v1982, %v1978
    %v2311 = vpack.c.b16 %v1983, %v1979
    %v2312 = vpack.c.b16 %v1988, %v1984
    %v2313 = vpack.c.b16 %v1989, %v1985
    %v2314 = vpack.c.b16 %v1990, %v1986
    %v2315 = vpack.c.b16 %v1991, %v1987
    %v2316 = vpack.c.b16 %v1996, %v1992
    %v2317 = vpack.c.b16 %v1997, %v1993
    %v2318 = vpack.c.b16 %v1998, %v1994
    %v2319 = vpack.c.b16 %v1999, %v1995
    %v2320 = vpack.c.b16 %v2004, %v2000
    %v2321 = vpack.c.b16 %v2005, %v2001
    %v2322 = vpack.c.b16 %v2006, %v2002
    %v2323 = vpack.c.b16 %v2007, %v2003
    %v2324 = vpack.c.b16 %v2012, %v2008
    %v2325 = vpack.c.b16 %v2013, %v2009
    %v2326 = vpack.c.b16 %v2014, %v2010
    %v2327 = vpack.c.b16 %v2015, %v2011
    %v2328 = vpack.c.b16 %v2020, %v2016
    %v2329 = vpack.c.b16 %v2021, %v2017
    %v2330 = vpack.c.b16 %v2022, %v2018
    %v2331 = vpack.c.b16 %v2023, %v2019
    %v2332 = vpack.c.b16 %v2028, %v2024
    %v2333 = vpack.c.b16 %v2029, %v2025
    %v2334 = vpack.c.b16 %v2030, %v2026
    %v2335 = vpack.c.b16 %v2031, %v2027
    %v2336 = vpack.c.b16 %v2036, %v2032
    %v2337 = vpack.c.b16 %v2037, %v2033
    %v2338 = vpack.c.b16 %v2038, %v2034
    %v2339 = vpack.c.b16 %v2039, %v2035
    %v2340 = vpack.c.b16 %v2044, %v2040
    %v2341 = vpack.c.b16 %v2045, %v2041
    %v2342 = vpack.c.b16 %v2046, %v2042
    %v2343 = vpack.c.b16 %v2047, %v2043
    %v2344 = vpack.c.b16 %v2052, %v2048
    %v2345 = vpack.c.b16 %v2053, %v2049
    %v2346 = vpack.c.b16 %v2054, %v2050
    %v2347 = vpack.c.b16 %v2055, %v2051
    %v2348 = vpack.c.b16 %v2060, %v2056
    %v2349 = vpack.c.b16 %v2061, %v2057
    %v2350 = vpack.c.b16 %v2062, %v2058
    %v2351 = vpack.c.b16 %v2063, %v2059
    %v2352 = vpack.c.b16 %v2068, %v2064
    %v2353 = vpack.c.b16 %v2069, %v2065
    %v2354 = vpack.c.b16 %v2070, %v2066
    %v2355 = vpack.c.b16 %v2071, %v2067
    %v2356 = vpack.c.b16 %v2076, %v2072
    %v2357 = vpack.c.b16 %v2077, %v2073
    %v2358 = vpack.c.b16 %v2078, %v2074
    %v2359 = vpack.c.b16 %v2079, %v2075
    %v2360 = vpack.c.b16 %v2084, %v2080
    %v2361 = vpack.c.b16 %v2085, %v2081
    %v2362 = vpack.c.b16 %v2086, %v2082
    %v2363 = vpack.c.b16 %v2087, %v2083
    %v2364 = vpack.c.b16 %v2092, %v2088
    %v2365 = vpack.c.b16 %v2093, %v2089
    %v2366 = vpack.c.b16 %v2094, %v2090
    %v2367 = vpack.c.b16 %v2095, %v2091
    %v2368 = vpack.c.b16 %v2100, %v2096
    %v2369 = vpack.c.b16 %v2101, %v2097
    %v2370 = vpack.c.b16 %v2102, %v2098
    %v2371 = vpack.c.b16 %v2103, %v2099
    %v2372 = vpack.c.b16 %v2108, %v2104
    %v2373 = vpack.c.b16 %v2109, %v2105
    %v2374 = vpack.c.b16 %v2110, %v2106
    %v2375 = vpack.c.b16 %v2111, %v2107
    %v2376 = vpack.c.b16 %v2116, %v2112
    %v2377 = vpack.c.b16 %v2117, %v2113
    %v2378 = vpack.c.b16 %v2118, %v2114
    %v2379 = vpack.c.b16 %v2119, %v2115
    %v2380 = vpack.c.b16 %v2124, %v2120
    %v2381 = vpack.c.b16 %v2125, %v2121
    %v2382 = vpack.c.b16 %v2126, %v2122
    %v2383 = vpack.c.b16 %v2127, %v2123
    %2640 = vmatprep.subr.bf16.mxu0 %v2129
    %2641 = vmatpush1.bf16.msra.mxu0 %v2128
    %2642 = vmatprep.subr.bf16.mxu0 %v2133
    %2643 = vmatpush1.bf16.msra.mxu0 %v2132
    %2644 = vmatprep.subr.bf16.mxu0 %v2137
    %2645 = vmatpush1.bf16.msra.mxu0 %v2136
    %2646 = vmatprep.subr.bf16.mxu0 %v2141
    %2647 = vmatpush1.bf16.msra.mxu0 %v2140
    %2648 = vmatprep.subr.bf16.mxu0 %v2145
    %2649 = vmatpush1.bf16.msra.mxu0 %v2144
    %2650 = vmatprep.subr.bf16.mxu0 %v2149
    %2651 = vmatpush1.bf16.msra.mxu0 %v2148
    %2652 = vmatprep.subr.bf16.mxu0 %v2153
    %2653 = vmatpush1.bf16.msra.mxu0 %v2152
    %2654 = vmatprep.subr.bf16.mxu0 %v2157
    %2655 = vmatpush1.bf16.msra.mxu0 %v2156
    %2656 = vmatprep.subr.bf16.mxu0 %v2161
    %2657 = vmatpush1.bf16.msra.mxu0 %v2160
    %2658 = vmatprep.subr.bf16.mxu0 %v2165
    %2659 = vmatpush1.bf16.msra.mxu0 %v2164
    %2660 = vmatprep.subr.bf16.mxu0 %v2169
    %2661 = vmatpush1.bf16.msra.mxu0 %v2168
    %2662 = vmatprep.subr.bf16.mxu0 %v2173
    %2663 = vmatpush1.bf16.msra.mxu0 %v2172
    %2664 = vmatprep.subr.bf16.mxu0 %v2177
    %2665 = vmatpush1.bf16.msra.mxu0 %v2176
    %2666 = vmatprep.subr.bf16.mxu0 %v2181
    %2667 = vmatpush1.bf16.msra.mxu0 %v2180
    %2668 = vmatprep.subr.bf16.mxu0 %v2185
    %2669 = vmatpush1.bf16.msra.mxu0 %v2184
    %2670 = vmatprep.subr.bf16.mxu0 %v2189
    %2671 = vmatpush1.bf16.msra.mxu0 %v2188
    %2672 = vmatprep.mubr.bf16.mxu0 %v1075
    %2673 = vmatmul.mubr.bf16.gmra.mrb[0].mxu0 %v1074
    %v2674 = vpop.f32.mrb[0].mxu0
    %v2675 = vadd.f32 %v1343, %v2674
    %v2676 = vpop.f32.mrb[0].mxu0
    %v2677 = vadd.f32 %v1347, %v2676
    %v2678 = vpop.f32.mrb[0].mxu0
    %v2679 = vpop.f32.mrb[0].mxu0
    %2680 = vdwg.mxu0
    %2681 = vmatprep.subr.bf16.mxu0 %v2193
    %2682 = vmatpush1.bf16.msra.mxu0 %v2192
    %2683 = vmatprep.subr.bf16.mxu0 %v2197
    %2684 = vmatpush1.bf16.msra.mxu0 %v2196
    %2685 = vmatprep.subr.bf16.mxu0 %v2201
    %2686 = vmatpush1.bf16.msra.mxu0 %v2200
    %2687 = vmatprep.subr.bf16.mxu0 %v2205
    %2688 = vmatpush1.bf16.msra.mxu0 %v2204
    %2689 = vmatprep.subr.bf16.mxu0 %v2209
    %2690 = vmatpush1.bf16.msra.mxu0 %v2208
    %2691 = vmatprep.subr.bf16.mxu0 %v2213
    %2692 = vmatpush1.bf16.msra.mxu0 %v2212
    %2693 = vmatprep.subr.bf16.mxu0 %v2217
    %2694 = vmatpush1.bf16.msra.mxu0 %v2216
    %2695 = vmatprep.subr.bf16.mxu0 %v2221
    %2696 = vmatpush1.bf16.msra.mxu0 %v2220
    %2697 = vmatprep.subr.bf16.mxu0 %v2225
    %2698 = vmatpush1.bf16.msra.mxu0 %v2224
    %2699 = vmatprep.subr.bf16.mxu0 %v2229
    %2700 = vmatpush1.bf16.msra.mxu0 %v2228
    %2701 = vmatprep.subr.bf16.mxu0 %v2233
    %2702 = vmatpush1.bf16.msra.mxu0 %v2232
    %2703 = vmatprep.subr.bf16.mxu0 %v2237
    %2704 = vmatpush1.bf16.msra.mxu0 %v2236
    %2705 = vmatprep.subr.bf16.mxu0 %v2241
    %2706 = vmatpush1.bf16.msra.mxu0 %v2240
    %2707 = vmatprep.subr.bf16.mxu0 %v2245
    %2708 = vmatpush1.bf16.msra.mxu0 %v2244
    %2709 = vmatprep.subr.bf16.mxu0 %v2249
    %2710 = vmatpush1.bf16.msra.mxu0 %v2248
    %2711 = vmatprep.subr.bf16.mxu0 %v2253
    %2712 = vmatpush1.bf16.msra.mxu0 %v2252
    %2713 = vmatprep.mubr.bf16.mxu0 %v1077
    %2714 = vmatmul.mubr.bf16.gmra.mrb[0].mxu0 %v1076
    %v2715 = vpop.f32.mrb[0].mxu0
    %v2716 = vadd.f32 %v2675, %v2715
    %v2717 = vpop.f32.mrb[0].mxu0
    %v2718 = vadd.f32 %v2677, %v2717
    %v2719 = vpop.f32.mrb[0].mxu0
    %v2720 = vpop.f32.mrb[0].mxu0
    %2721 = vdwg.mxu0
    %2722 = vmatprep.subr.bf16.mxu0 %v2257
    %2723 = vmatpush1.bf16.msra.mxu0 %v2256
    %2724 = vmatprep.subr.bf16.mxu0 %v2261
    %2725 = vmatpush1.bf16.msra.mxu0 %v2260
    %2726 = vmatprep.subr.bf16.mxu0 %v2265
    %2727 = vmatpush1.bf16.msra.mxu0 %v2264
    %2728 = vmatprep.subr.bf16.mxu0 %v2269
    %2729 = vmatpush1.bf16.msra.mxu0 %v2268
    %2730 = vmatprep.subr.bf16.mxu0 %v2273
    %2731 = vmatpush1.bf16.msra.mxu0 %v2272
    %2732 = vmatprep.subr.bf16.mxu0 %v2277
    %2733 = vmatpush1.bf16.msra.mxu0 %v2276
    %2734 = vmatprep.subr.bf16.mxu0 %v2281
    %2735 = vmatpush1.bf16.msra.mxu0 %v2280
    %2736 = vmatprep.subr.bf16.mxu0 %v2285
    %2737 = vmatpush1.bf16.msra.mxu0 %v2284
    %2738 = vmatprep.subr.bf16.mxu0 %v2289
    %2739 = vmatpush1.bf16.msra.mxu0 %v2288
    %2740 = vmatprep.subr.bf16.mxu0 %v2293
    %2741 = vmatpush1.bf16.msra.mxu0 %v2292
    %2742 = vmatprep.subr.bf16.mxu0 %v2297
    %2743 = vmatpush1.bf16.msra.mxu0 %v2296
    %2744 = vmatprep.subr.bf16.mxu0 %v2301
    %2745 = vmatpush1.bf16.msra.mxu0 %v2300
    %2746 = vmatprep.subr.bf16.mxu0 %v2305
    %2747 = vmatpush1.bf16.msra.mxu0 %v2304
    %2748 = vmatprep.subr.bf16.mxu0 %v2309
    %2749 = vmatpush1.bf16.msra.mxu0 %v2308
    %2750 = vmatprep.subr.bf16.mxu0 %v2313
    %2751 = vmatpush1.bf16.msra.mxu0 %v2312
    %2752 = vmatprep.subr.bf16.mxu0 %v2317
    %2753 = vmatpush1.bf16.msra.mxu0 %v2316
    %2754 = vmatprep.mubr.bf16.mxu0 %v1079
    %2755 = vmatmul.mubr.bf16.gmra.mrb[0].mxu0 %v1078
    %v2756 = vpop.f32.mrb[0].mxu0
    %v2757 = vadd.f32 %v2716, %v2756
    %v2758 = vpop.f32.mrb[0].mxu0
    %v2759 = vadd.f32 %v2718, %v2758
    %v2760 = vpop.f32.mrb[0].mxu0
    %v2761 = vpop.f32.mrb[0].mxu0
    %2762 = vdwg.mxu0
    %2763 = vmatprep.subr.bf16.mxu0 %v2321
    %2764 = vmatpush1.bf16.msra.mxu0 %v2320
    %2765 = vmatprep.subr.bf16.mxu0 %v2325
    %2766 = vmatpush1.bf16.msra.mxu0 %v2324
    %2767 = vmatprep.subr.bf16.mxu0 %v2329
    %2768 = vmatpush1.bf16.msra.mxu0 %v2328
    %2769 = vmatprep.subr.bf16.mxu0 %v2333
    %2770 = vmatpush1.bf16.msra.mxu0 %v2332
    %2771 = vmatprep.subr.bf16.mxu0 %v2337
    %2772 = vmatpush1.bf16.msra.mxu0 %v2336
    %2773 = vmatprep.subr.bf16.mxu0 %v2341
    %2774 = vmatpush1.bf16.msra.mxu0 %v2340
    %2775 = vmatprep.subr.bf16.mxu0 %v2345
    %2776 = vmatpush1.bf16.msra.mxu0 %v2344
    %2777 = vmatprep.subr.bf16.mxu0 %v2349
    %2778 = vmatpush1.bf16.msra.mxu0 %v2348
    %2779 = vmatprep.subr.bf16.mxu0 %v2353
    %2780 = vmatpush1.bf16.msra.mxu0 %v2352
    %2781 = vmatprep.subr.bf16.mxu0 %v2357
    %2782 = vmatpush1.bf16.msra.mxu0 %v2356
    %2783 = vmatprep.subr.bf16.mxu0 %v2361
    %2784 = vmatpush1.bf16.msra.mxu0 %v2360
    %2785 = vmatprep.subr.bf16.mxu0 %v2365
    %2786 = vmatpush1.bf16.msra.mxu0 %v2364
    %2787 = vmatprep.subr.bf16.mxu0 %v2369
    %2788 = vmatpush1.bf16.msra.mxu0 %v2368
    %2789 = vmatprep.subr.bf16.mxu0 %v2373
    %2790 = vmatpush1.bf16.msra.mxu0 %v2372
    %2791 = vmatprep.subr.bf16.mxu0 %v2377
    %2792 = vmatpush1.bf16.msra.mxu0 %v2376
    %2793 = vmatprep.subr.bf16.mxu0 %v2381
    %2794 = vmatpush1.bf16.msra.mxu0 %v2380
    %2795 = vmatprep.mubr.bf16.mxu0 %v1081
    %2796 = vmatmul.mubr.bf16.gmra.mrb[0].mxu0 %v1080
    %v2797 = vpop.f32.mrb[0].mxu0
    %v2798 = vadd.f32 %v2757, %v2797
    %v2799 = vpop.f32.mrb[0].mxu0
    %v2800 = vadd.f32 %v2759, %v2799
    %v2801 = vpop.f32.mrb[0].mxu0
    %v2802 = vpop.f32.mrb[0].mxu0
    %2803 = vdwg.mxu0
    %2804 = vmatprep.subr.bf16.mxu0 %v2131
    %2805 = vmatpush1.bf16.msra.mxu0 %v2130
    %2806 = vmatprep.subr.bf16.mxu0 %v2135
    %2807 = vmatpush1.bf16.msra.mxu0 %v2134
    %2808 = vmatprep.subr.bf16.mxu0 %v2139
    %2809 = vmatpush1.bf16.msra.mxu0 %v2138
    %2810 = vmatprep.subr.bf16.mxu0 %v2143
    %2811 = vmatpush1.bf16.msra.mxu0 %v2142
    %2812 = vmatprep.subr.bf16.mxu0 %v2147
    %2813 = vmatpush1.bf16.msra.mxu0 %v2146
    %2814 = vmatprep.subr.bf16.mxu0 %v2151
    %2815 = vmatpush1.bf16.msra.mxu0 %v2150
    %2816 = vmatprep.subr.bf16.mxu0 %v2155
    %2817 = vmatpush1.bf16.msra.mxu0 %v2154
    %2818 = vmatprep.subr.bf16.mxu0 %v2159
    %2819 = vmatpush1.bf16.msra.mxu0 %v2158
    %2820 = vmatprep.subr.bf16.mxu0 %v2163
    %2821 = vmatpush1.bf16.msra.mxu0 %v2162
    %2822 = vmatprep.subr.bf16.mxu0 %v2167
    %2823 = vmatpush1.bf16.msra.mxu0 %v2166
    %2824 = vmatprep.subr.bf16.mxu0 %v2171
    %2825 = vmatpush1.bf16.msra.mxu0 %v2170
    %2826 = vmatprep.subr.bf16.mxu0 %v2175
    %2827 = vmatpush1.bf16.msra.mxu0 %v2174
    %2828 = vmatprep.subr.bf16.mxu0 %v2179
    %2829 = vmatpush1.bf16.msra.mxu0 %v2178
    %2830 = vmatprep.subr.bf16.mxu0 %v2183
    %2831 = vmatpush1.bf16.msra.mxu0 %v2182
    %2832 = vmatprep.subr.bf16.mxu0 %v2187
    %2833 = vmatpush1.bf16.msra.mxu0 %v2186
    %2834 = vmatprep.subr.bf16.mxu0 %v2191
    %2835 = vmatpush1.bf16.msra.mxu0 %v2190
    %2836 = vmatprep.mubr.bf16.mxu0 %v1075
    %2837 = vmatmul.mubr.bf16.gmra.mrb[0].mxu0 %v1074
    %v2838 = vpop.f32.mrb[0].mxu0
    %v2839 = vadd.f32 %v1351, %v2838
    %v2840 = vpop.f32.mrb[0].mxu0
    %v2841 = vadd.f32 %v1355, %v2840
    %v2842 = vpop.f32.mrb[0].mxu0
    %v2843 = vpop.f32.mrb[0].mxu0
    %2844 = vdwg.mxu0
    %2845 = vmatprep.subr.bf16.mxu0 %v2195
    %2846 = vmatpush1.bf16.msra.mxu0 %v2194
    %2847 = vmatprep.subr.bf16.mxu0 %v2199
    %2848 = vmatpush1.bf16.msra.mxu0 %v2198
    %2849 = vmatprep.subr.bf16.mxu0 %v2203
    %2850 = vmatpush1.bf16.msra.mxu0 %v2202
    %2851 = vmatprep.subr.bf16.mxu0 %v2207
    %2852 = vmatpush1.bf16.msra.mxu0 %v2206
    %2853 = vmatprep.subr.bf16.mxu0 %v2211
    %2854 = vmatpush1.bf16.msra.mxu0 %v2210
    %2855 = vmatprep.subr.bf16.mxu0 %v2215
    %2856 = vmatpush1.bf16.msra.mxu0 %v2214
    %2857 = vmatprep.subr.bf16.mxu0 %v2219
    %2858 = vmatpush1.bf16.msra.mxu0 %v2218
    %2859 = vmatprep.subr.bf16.mxu0 %v2223
    %2860 = vmatpush1.bf16.msra.mxu0 %v2222
    %2861 = vmatprep.subr.bf16.mxu0 %v2227
    %2862 = vmatpush1.bf16.msra.mxu0 %v2226
    %2863 = vmatprep.subr.bf16.mxu0 %v2231
    %2864 = vmatpush1.bf16.msra.mxu0 %v2230
    %2865 = vmatprep.subr.bf16.mxu0 %v2235
    %2866 = vmatpush1.bf16.msra.mxu0 %v2234
    %2867 = vmatprep.subr.bf16.mxu0 %v2239
    %2868 = vmatpush1.bf16.msra.mxu0 %v2238
    %2869 = vmatprep.subr.bf16.mxu0 %v2243
    %2870 = vmatpush1.bf16.msra.mxu0 %v2242
    %2871 = vmatprep.subr.bf16.mxu0 %v2247
    %2872 = vmatpush1.bf16.msra.mxu0 %v2246
    %2873 = vmatprep.subr.bf16.mxu0 %v2251
    %2874 = vmatpush1.bf16.msra.mxu0 %v2250
    %2875 = vmatprep.subr.bf16.mxu0 %v2255
    %2876 = vmatpush1.bf16.msra.mxu0 %v2254
    %2877 = vmatprep.mubr.bf16.mxu0 %v1077
    %2878 = vmatmul.mubr.bf16.gmra.mrb[0].mxu0 %v1076
    %v2879 = vpop.f32.mrb[0].mxu0
    %v2880 = vadd.f32 %v2839, %v2879
    %v2881 = vpop.f32.mrb[0].mxu0
    %v2882 = vadd.f32 %v2841, %v2881
    %v2883 = vpop.f32.mrb[0].mxu0
    %v2884 = vpop.f32.mrb[0].mxu0
    %2885 = vdwg.mxu0
    %2886 = vmatprep.subr.bf16.mxu0 %v2259
    %2887 = vmatpush1.bf16.msra.mxu0 %v2258
    %2888 = vmatprep.subr.bf16.mxu0 %v2263
    %2889 = vmatpush1.bf16.msra.mxu0 %v2262
    %2890 = vmatprep.subr.bf16.mxu0 %v2267
    %2891 = vmatpush1.bf16.msra.mxu0 %v2266
    %2892 = vmatprep.subr.bf16.mxu0 %v2271
    %2893 = vmatpush1.bf16.msra.mxu0 %v2270
    %2894 = vmatprep.subr.bf16.mxu0 %v2275
    %2895 = vmatpush1.bf16.msra.mxu0 %v2274
    %2896 = vmatprep.subr.bf16.mxu0 %v2279
    %2897 = vmatpush1.bf16.msra.mxu0 %v2278
    %2898 = vmatprep.subr.bf16.mxu0 %v2283
    %2899 = vmatpush1.bf16.msra.mxu0 %v2282
    %2900 = vmatprep.subr.bf16.mxu0 %v2287
    %2901 = vmatpush1.bf16.msra.mxu0 %v2286
    %2902 = vmatprep.subr.bf16.mxu0 %v2291
    %2903 = vmatpush1.bf16.msra.mxu0 %v2290
    %2904 = vmatprep.subr.bf16.mxu0 %v2295
    %2905 = vmatpush1.bf16.msra.mxu0 %v2294
    %2906 = vmatprep.subr.bf16.mxu0 %v2299
    %2907 = vmatpush1.bf16.msra.mxu0 %v2298
    %2908 = vmatprep.subr.bf16.mxu0 %v2303
    %2909 = vmatpush1.bf16.msra.mxu0 %v2302
    %2910 = vmatprep.subr.bf16.mxu0 %v2307
    %2911 = vmatpush1.bf16.msra.mxu0 %v2306
    %2912 = vmatprep.subr.bf16.mxu0 %v2311
    %2913 = vmatpush1.bf16.msra.mxu0 %v2310
    %2914 = vmatprep.subr.bf16.mxu0 %v2315
    %2915 = vmatpush1.bf16.msra.mxu0 %v2314
    %2916 = vmatprep.subr.bf16.mxu0 %v2319
    %2917 = vmatpush1.bf16.msra.mxu0 %v2318
    %2918 = vmatprep.mubr.bf16.mxu0 %v1079
    %2919 = vmatmul.mubr.bf16.gmra.mrb[0].mxu0 %v1078
    %v2920 = vpop.f32.mrb[0].mxu0
    %v2921 = vadd.f32 %v2880, %v2920
    %v2922 = vpop.f32.mrb[0].mxu0
    %v2923 = vadd.f32 %v2882, %v2922
    %v2924 = vpop.f32.mrb[0].mxu0
    %v2925 = vpop.f32.mrb[0].mxu0
    %2926 = vdwg.mxu0
    %2927 = vmatprep.subr.bf16.mxu0 %v2323
    %2928 = vmatpush1.bf16.msra.mxu0 %v2322
    %2929 = vmatprep.subr.bf16.mxu0 %v2327
    %2930 = vmatpush1.bf16.msra.mxu0 %v2326
    %2931 = vmatprep.subr.bf16.mxu0 %v2331
    %2932 = vmatpush1.bf16.msra.mxu0 %v2330
    %2933 = vmatprep.subr.bf16.mxu0 %v2335
    %2934 = vmatpush1.bf16.msra.mxu0 %v2334
    %2935 = vmatprep.subr.bf16.mxu0 %v2339
    %2936 = vmatpush1.bf16.msra.mxu0 %v2338
    %2937 = vmatprep.subr.bf16.mxu0 %v2343
    %2938 = vmatpush1.bf16.msra.mxu0 %v2342
    %2939 = vmatprep.subr.bf16.mxu0 %v2347
    %2940 = vmatpush1.bf16.msra.mxu0 %v2346
    %2941 = vmatprep.subr.bf16.mxu0 %v2351
    %2942 = vmatpush1.bf16.msra.mxu0 %v2350
    %2943 = vmatprep.subr.bf16.mxu0 %v2355
    %2944 = vmatpush1.bf16.msra.mxu0 %v2354
    %2945 = vmatprep.subr.bf16.mxu0 %v2359
    %2946 = vmatpush1.bf16.msra.mxu0 %v2358
    %2947 = vmatprep.subr.bf16.mxu0 %v2363
    %2948 = vmatpush1.bf16.msra.mxu0 %v2362
    %2949 = vmatprep.subr.bf16.mxu0 %v2367
    %2950 = vmatpush1.bf16.msra.mxu0 %v2366
    %2951 = vmatprep.subr.bf16.mxu0 %v2371
    %2952 = vmatpush1.bf16.msra.mxu0 %v2370
    %2953 = vmatprep.subr.bf16.mxu0 %v2375
    %2954 = vmatpush1.bf16.msra.mxu0 %v2374
    %2955 = vmatprep.subr.bf16.mxu0 %v2379
    %2956 = vmatpush1.bf16.msra.mxu0 %v2378
    %2957 = vmatprep.subr.bf16.mxu0 %v2383
    %2958 = vmatpush1.bf16.msra.mxu0 %v2382
    %2959 = vmatprep.mubr.bf16.mxu0 %v1081
    %2960 = vmatmul.mubr.bf16.gmra.mrb[0].mxu0 %v1080
    %v2961 = vpop.f32.mrb[0].mxu0
    %v2962 = vadd.f32 %v2921, %v2961
    %v2963 = vpop.f32.mrb[0].mxu0
    %v2964 = vadd.f32 %v2923, %v2963
    %v2965 = vpop.f32.mrb[0].mxu0
    %v2966 = vpop.f32.mrb[0].mxu0
    %2967 = vdwg.mxu0
    %v2968 = vtanh.pop %v2798
    %v2969 = vtanh.pop %v2800
    %v2970 = vtanh.pop %v2962
    %v2971 = vtanh.pop %v2964
    %v2972 = vpack.c.bf16 %v2968, %v2968
    %v2973 = vpack.c.bf16 %v2969, %v2969
    %v2974 = vpack.c.bf16 %v2970, %v2970
    %v2975 = vpack.c.bf16 %v2971, %v2971
    %v2976 = vld [vmem:[#allocation6] sm:$0xff]
    %v2977 = vld [vmem:[#allocation6 + $0x8] sm:$0xff]
    %v2978 = vld [vmem:[#allocation6 + $0x10] sm:$0xff]
    %v2979 = vld [vmem:[#allocation6 + $0x18] sm:$0xff]
    %v2980 = vld [vmem:[#allocation6 + $0x20] sm:$0xff]
    %v2981 = vld [vmem:[#allocation6 + $0x28] sm:$0xff]
    %v2982 = vld [vmem:[#allocation6 + $0x30] sm:$0xff]
    %v2983 = vld [vmem:[#allocation6 + $0x38] sm:$0xff]
    %v2984 = vld [vmem:[#allocation6 + $0x40] sm:$0xff]
    %v2985 = vld [vmem:[#allocation6 + $0x48] sm:$0xff]
    %v2986 = vld [vmem:[#allocation6 + $0x50] sm:$0xff]
    %v2987 = vld [vmem:[#allocation6 + $0x58] sm:$0xff]
    %v2988 = vld [vmem:[#allocation6 + $0x60] sm:$0xff]
    %v2989 = vld [vmem:[#allocation6 + $0x68] sm:$0xff]
    %v2990 = vld [vmem:[#allocation6 + $0x70] sm:$0xff]
    %v2991 = vld [vmem:[#allocation6 + $0x78] sm:$0xff]
    %v2992 = vld [vmem:[#allocation6 + $0x80] sm:$0xff]
    %v2993 = vld [vmem:[#allocation6 + $0x88] sm:$0xff]
    %v2994 = vld [vmem:[#allocation6 + $0x90] sm:$0xff]
    %v2995 = vld [vmem:[#allocation6 + $0x98] sm:$0xff]
    %v2996 = vld [vmem:[#allocation6 + $0xa0] sm:$0xff]
    %v2997 = vld [vmem:[#allocation6 + $0xa8] sm:$0xff]
    %v2998 = vld [vmem:[#allocation6 + $0xb0] sm:$0xff]
    %v2999 = vld [vmem:[#allocation6 + $0xb8] sm:$0xff]
    %v3000 = vld [vmem:[#allocation6 + $0xc0] sm:$0xff]
    %v3001 = vld [vmem:[#allocation6 + $0xc8] sm:$0xff]
    %v3002 = vld [vmem:[#allocation6 + $0xd0] sm:$0xff]
    %v3003 = vld [vmem:[#allocation6 + $0xd8] sm:$0xff]
    %v3004 = vld [vmem:[#allocation6 + $0xe0] sm:$0xff]
    %v3005 = vld [vmem:[#allocation6 + $0xe8] sm:$0xff]
    %v3006 = vld [vmem:[#allocation6 + $0xf0] sm:$0xff]
    %v3007 = vld [vmem:[#allocation6 + $0xf8] sm:$0xff]
    %v3008 = vld [vmem:[#allocation6 + $0x100] sm:$0xff]
    %v3009 = vld [vmem:[#allocation6 + $0x108] sm:$0xff]
    %v3010 = vld [vmem:[#allocation6 + $0x110] sm:$0xff]
    %v3011 = vld [vmem:[#allocation6 + $0x118] sm:$0xff]
    %v3012 = vld [vmem:[#allocation6 + $0x120] sm:$0xff]
    %v3013 = vld [vmem:[#allocation6 + $0x128] sm:$0xff]
    %v3014 = vld [vmem:[#allocation6 + $0x130] sm:$0xff]
    %v3015 = vld [vmem:[#allocation6 + $0x138] sm:$0xff]
    %v3016 = vld [vmem:[#allocation6 + $0x140] sm:$0xff]
    %v3017 = vld [vmem:[#allocation6 + $0x148] sm:$0xff]
    %v3018 = vld [vmem:[#allocation6 + $0x150] sm:$0xff]
    %v3019 = vld [vmem:[#allocation6 + $0x158] sm:$0xff]
    %v3020 = vld [vmem:[#allocation6 + $0x160] sm:$0xff]
    %v3021 = vld [vmem:[#allocation6 + $0x168] sm:$0xff]
    %v3022 = vld [vmem:[#allocation6 + $0x170] sm:$0xff]
    %v3023 = vld [vmem:[#allocation6 + $0x178] sm:$0xff]
    %v3024 = vld [vmem:[#allocation6 + $0x180] sm:$0xff]
    %v3025 = vld [vmem:[#allocation6 + $0x188] sm:$0xff]
    %v3026 = vld [vmem:[#allocation6 + $0x190] sm:$0xff]
    %v3027 = vld [vmem:[#allocation6 + $0x198] sm:$0xff]
    %v3028 = vld [vmem:[#allocation6 + $0x1a0] sm:$0xff]
    %v3029 = vld [vmem:[#allocation6 + $0x1a8] sm:$0xff]
    %v3030 = vld [vmem:[#allocation6 + $0x1b0] sm:$0xff]
    %v3031 = vld [vmem:[#allocation6 + $0x1b8] sm:$0xff]
    %v3032 = vld [vmem:[#allocation6 + $0x1c0] sm:$0xff]
    %v3033 = vld [vmem:[#allocation6 + $0x1c8] sm:$0xff]
    %v3034 = vld [vmem:[#allocation6 + $0x1d0] sm:$0xff]
    %v3035 = vld [vmem:[#allocation6 + $0x1d8] sm:$0xff]
    %v3036 = vld [vmem:[#allocation6 + $0x1e0] sm:$0xff]
    %v3037 = vld [vmem:[#allocation6 + $0x1e8] sm:$0xff]
    %v3038 = vld [vmem:[#allocation6 + $0x1f0] sm:$0xff]
    %v3039 = vld [vmem:[#allocation6 + $0x1f8] sm:$0xff]
    %v3040 = vld [vmem:[%s7] sm:$0x3]
    %v3042 = vlaneseq
    %v3043 = vshrl.u32 %v3042, 7
    %v3044 = vsub.s32 0, %v3043
    %v3045 = vrot.slane %v3040, %v3044
    %v3046 = vlaneseq
    %v3047 = vshrl.u32 %v3046, 7
    %v3048 = vsub.s32 1, %v3047
    %v3049 = vrot.slane %v3040, %v3048
    %v3116 = vunpack.c.l.b16 %v2976
    %v3117 = vunpack.c.h.b16 %v2976
    %v3118 = vunpack.c.l.b16 %v2977
    %v3119 = vunpack.c.h.b16 %v2977
    %v3120 = vunpack.c.l.b16 %v2978
    %v3121 = vunpack.c.h.b16 %v2978
    %v3122 = vunpack.c.l.b16 %v2979
    %v3123 = vunpack.c.h.b16 %v2979
    %v3124 = vunpack.c.l.b16 %v2980
    %v3125 = vunpack.c.h.b16 %v2980
    %v3126 = vunpack.c.l.b16 %v2981
    %v3127 = vunpack.c.h.b16 %v2981
    %v3128 = vunpack.c.l.b16 %v2982
    %v3129 = vunpack.c.h.b16 %v2982
    %v3130 = vunpack.c.l.b16 %v2983
    %v3131 = vunpack.c.h.b16 %v2983
    %v3132 = vunpack.c.l.b16 %v2984
    %v3133 = vunpack.c.h.b16 %v2984
    %v3134 = vunpack.c.l.b16 %v2985
    %v3135 = vunpack.c.h.b16 %v2985
    %v3136 = vunpack.c.l.b16 %v2986
    %v3137 = vunpack.c.h.b16 %v2986
    %v3138 = vunpack.c.l.b16 %v2987
    %v3139 = vunpack.c.h.b16 %v2987
    %v3140 = vunpack.c.l.b16 %v2988
    %v3141 = vunpack.c.h.b16 %v2988
    %v3142 = vunpack.c.l.b16 %v2989
    %v3143 = vunpack.c.h.b16 %v2989
    %v3144 = vunpack.c.l.b16 %v2990
    %v3145 = vunpack.c.h.b16 %v2990
    %v3146 = vunpack.c.l.b16 %v2991
    %v3147 = vunpack.c.h.b16 %v2991
    %v3148 = vunpack.c.l.b16 %v2992
    %v3149 = vunpack.c.h.b16 %v2992
    %v3150 = vunpack.c.l.b16 %v2993
    %v3151 = vunpack.c.h.b16 %v2993
    %v3152 = vunpack.c.l.b16 %v2994
    %v3153 = vunpack.c.h.b16 %v2994
    %v3154 = vunpack.c.l.b16 %v2995
    %v3155 = vunpack.c.h.b16 %v2995
    %v3156 = vunpack.c.l.b16 %v2996
    %v3157 = vunpack.c.h.b16 %v2996
    %v3158 = vunpack.c.l.b16 %v2997
    %v3159 = vunpack.c.h.b16 %v2997
    %v3160 = vunpack.c.l.b16 %v2998
    %v3161 = vunpack.c.h.b16 %v2998
    %v3162 = vunpack.c.l.b16 %v2999
    %v3163 = vunpack.c.h.b16 %v2999
    %v3164 = vunpack.c.l.b16 %v3000
    %v3165 = vunpack.c.h.b16 %v3000
    %v3166 = vunpack.c.l.b16 %v3001
    %v3167 = vunpack.c.h.b16 %v3001
    %v3168 = vunpack.c.l.b16 %v3002
    %v3169 = vunpack.c.h.b16 %v3002
    %v3170 = vunpack.c.l.b16 %v3003
    %v3171 = vunpack.c.h.b16 %v3003
    %v3172 = vunpack.c.l.b16 %v3004
    %v3173 = vunpack.c.h.b16 %v3004
    %v3174 = vunpack.c.l.b16 %v3005
    %v3175 = vunpack.c.h.b16 %v3005
    %v3176 = vunpack.c.l.b16 %v3006
    %v3177 = vunpack.c.h.b16 %v3006
    %v3178 = vunpack.c.l.b16 %v3007
    %v3179 = vunpack.c.h.b16 %v3007
    %v3180 = vunpack.c.l.b16 %v3008
    %v3181 = vunpack.c.h.b16 %v3008
    %v3182 = vunpack.c.l.b16 %v3009
    %v3183 = vunpack.c.h.b16 %v3009
    %v3184 = vunpack.c.l.b16 %v3010
    %v3185 = vunpack.c.h.b16 %v3010
    %v3186 = vunpack.c.l.b16 %v3011
    %v3187 = vunpack.c.h.b16 %v3011
    %v3188 = vunpack.c.l.b16 %v3012
    %v3189 = vunpack.c.h.b16 %v3012
    %v3190 = vunpack.c.l.b16 %v3013
    %v3191 = vunpack.c.h.b16 %v3013
    %v3192 = vunpack.c.l.b16 %v3014
    %v3193 = vunpack.c.h.b16 %v3014
    %v3194 = vunpack.c.l.b16 %v3015
    %v3195 = vunpack.c.h.b16 %v3015
    %v3196 = vunpack.c.l.b16 %v3016
    %v3197 = vunpack.c.h.b16 %v3016
    %v3198 = vunpack.c.l.b16 %v3017
    %v3199 = vunpack.c.h.b16 %v3017
    %v3200 = vunpack.c.l.b16 %v3018
    %v3201 = vunpack.c.h.b16 %v3018
    %v3202 = vunpack.c.l.b16 %v3019
    %v3203 = vunpack.c.h.b16 %v3019
    %v3204 = vunpack.c.l.b16 %v3020
    %v3205 = vunpack.c.h.b16 %v3020
    %v3206 = vunpack.c.l.b16 %v3021
    %v3207 = vunpack.c.h.b16 %v3021
    %v3208 = vunpack.c.l.b16 %v3022
    %v3209 = vunpack.c.h.b16 %v3022
    %v3210 = vunpack.c.l.b16 %v3023
    %v3211 = vunpack.c.h.b16 %v3023
    %v3212 = vunpack.c.l.b16 %v3024
    %v3213 = vunpack.c.h.b16 %v3024
    %v3214 = vunpack.c.l.b16 %v3025
    %v3215 = vunpack.c.h.b16 %v3025
    %v3216 = vunpack.c.l.b16 %v3026
    %v3217 = vunpack.c.h.b16 %v3026
    %v3218 = vunpack.c.l.b16 %v3027
    %v3219 = vunpack.c.h.b16 %v3027
    %v3220 = vunpack.c.l.b16 %v3028
    %v3221 = vunpack.c.h.b16 %v3028
    %v3222 = vunpack.c.l.b16 %v3029
    %v3223 = vunpack.c.h.b16 %v3029
    %v3224 = vunpack.c.l.b16 %v3030
    %v3225 = vunpack.c.h.b16 %v3030
    %v3226 = vunpack.c.l.b16 %v3031
    %v3227 = vunpack.c.h.b16 %v3031
    %v3228 = vunpack.c.l.b16 %v3032
    %v3229 = vunpack.c.h.b16 %v3032
    %v3230 = vunpack.c.l.b16 %v3033
    %v3231 = vunpack.c.h.b16 %v3033
    %v3232 = vunpack.c.l.b16 %v3034
    %v3233 = vunpack.c.h.b16 %v3034
    %v3234 = vunpack.c.l.b16 %v3035
    %v3235 = vunpack.c.h.b16 %v3035
    %v3236 = vunpack.c.l.b16 %v3036
    %v3237 = vunpack.c.h.b16 %v3036
    %v3238 = vunpack.c.l.b16 %v3037
    %v3239 = vunpack.c.h.b16 %v3037
    %v3240 = vunpack.c.l.b16 %v3038
    %v3241 = vunpack.c.h.b16 %v3038
    %v3242 = vunpack.c.l.b16 %v3039
    %v3243 = vunpack.c.h.b16 %v3039
    %v3244 = vpack.c.b16 %v3118, %v3116
    %v3245 = vpack.c.b16 %v3119, %v3117
    %v3246 = vpack.c.b16 %v3122, %v3120
    %v3247 = vpack.c.b16 %v3123, %v3121
    %v3248 = vpack.c.b16 %v3126, %v3124
    %v3249 = vpack.c.b16 %v3127, %v3125
    %v3250 = vpack.c.b16 %v3130, %v3128
    %v3251 = vpack.c.b16 %v3131, %v3129
    %v3252 = vpack.c.b16 %v3134, %v3132
    %v3253 = vpack.c.b16 %v3135, %v3133
    %v3254 = vpack.c.b16 %v3138, %v3136
    %v3255 = vpack.c.b16 %v3139, %v3137
    %v3256 = vpack.c.b16 %v3142, %v3140
    %v3257 = vpack.c.b16 %v3143, %v3141
    %v3258 = vpack.c.b16 %v3146, %v3144
    %v3259 = vpack.c.b16 %v3147, %v3145
    %v3260 = vpack.c.b16 %v3150, %v3148
    %v3261 = vpack.c.b16 %v3151, %v3149
    %v3262 = vpack.c.b16 %v3154, %v3152
    %v3263 = vpack.c.b16 %v3155, %v3153
    %v3264 = vpack.c.b16 %v3158, %v3156
    %v3265 = vpack.c.b16 %v3159, %v3157
    %v3266 = vpack.c.b16 %v3162, %v3160
    %v3267 = vpack.c.b16 %v3163, %v3161
    %v3268 = vpack.c.b16 %v3166, %v3164
    %v3269 = vpack.c.b16 %v3167, %v3165
    %v3270 = vpack.c.b16 %v3170, %v3168
    %v3271 = vpack.c.b16 %v3171, %v3169
    %v3272 = vpack.c.b16 %v3174, %v3172
    %v3273 = vpack.c.b16 %v3175, %v3173
    %v3274 = vpack.c.b16 %v3178, %v3176
    %v3275 = vpack.c.b16 %v3179, %v3177
    %v3276 = vpack.c.b16 %v3182, %v3180
    %v3277 = vpack.c.b16 %v3183, %v3181
    %v3278 = vpack.c.b16 %v3186, %v3184
    %v3279 = vpack.c.b16 %v3187, %v3185
    %v3280 = vpack.c.b16 %v3190, %v3188
    %v3281 = vpack.c.b16 %v3191, %v3189
    %v3282 = vpack.c.b16 %v3194, %v3192
    %v3283 = vpack.c.b16 %v3195, %v3193
    %v3284 = vpack.c.b16 %v3198, %v3196
    %v3285 = vpack.c.b16 %v3199, %v3197
    %v3286 = vpack.c.b16 %v3202, %v3200
    %v3287 = vpack.c.b16 %v3203, %v3201
    %v3288 = vpack.c.b16 %v3206, %v3204
    %v3289 = vpack.c.b16 %v3207, %v3205
    %v3290 = vpack.c.b16 %v3210, %v3208
    %v3291 = vpack.c.b16 %v3211, %v3209
    %v3292 = vpack.c.b16 %v3214, %v3212
    %v3293 = vpack.c.b16 %v3215, %v3213
    %v3294 = vpack.c.b16 %v3218, %v3216
    %v3295 = vpack.c.b16 %v3219, %v3217
    %v3296 = vpack.c.b16 %v3222, %v3220
    %v3297 = vpack.c.b16 %v3223, %v3221
    %v3298 = vpack.c.b16 %v3226, %v3224
    %v3299 = vpack.c.b16 %v3227, %v3225
    %v3300 = vpack.c.b16 %v3230, %v3228
    %v3301 = vpack.c.b16 %v3231, %v3229
    %v3302 = vpack.c.b16 %v3234, %v3232
    %v3303 = vpack.c.b16 %v3235, %v3233
    %v3304 = vpack.c.b16 %v3238, %v3236
    %v3305 = vpack.c.b16 %v3239, %v3237
    %v3306 = vpack.c.b16 %v3242, %v3240
    %v3307 = vpack.c.b16 %v3243, %v3241
    %3372 = vmatprep.subr.bf16.mxu0 %v3245
    %3373 = vmatpush1.bf16.msra.mxu0 %v3244
    %3374 = vmatprep.subr.bf16.mxu0 %v3247
    %3375 = vmatpush1.bf16.msra.mxu0 %v3246
    %3376 = vmatprep.subr.bf16.mxu0 %v3249
    %3377 = vmatpush1.bf16.msra.mxu0 %v3248
    %3378 = vmatprep.subr.bf16.mxu0 %v3251
    %3379 = vmatpush1.bf16.msra.mxu0 %v3250
    %3380 = vmatprep.subr.bf16.mxu0 %v3253
    %3381 = vmatpush1.bf16.msra.mxu0 %v3252
    %3382 = vmatprep.subr.bf16.mxu0 %v3255
    %3383 = vmatpush1.bf16.msra.mxu0 %v3254
    %3384 = vmatprep.subr.bf16.mxu0 %v3257
    %3385 = vmatpush1.bf16.msra.mxu0 %v3256
    %3386 = vmatprep.subr.bf16.mxu0 %v3259
    %3387 = vmatpush1.bf16.msra.mxu0 %v3258
    %3388 = vmatprep.subr.bf16.mxu0 %v3261
    %3389 = vmatpush1.bf16.msra.mxu0 %v3260
    %3390 = vmatprep.subr.bf16.mxu0 %v3263
    %3391 = vmatpush1.bf16.msra.mxu0 %v3262
    %3392 = vmatprep.subr.bf16.mxu0 %v3265
    %3393 = vmatpush1.bf16.msra.mxu0 %v3264
    %3394 = vmatprep.subr.bf16.mxu0 %v3267
    %3395 = vmatpush1.bf16.msra.mxu0 %v3266
    %3396 = vmatprep.subr.bf16.mxu0 %v3269
    %3397 = vmatpush1.bf16.msra.mxu0 %v3268
    %3398 = vmatprep.subr.bf16.mxu0 %v3271
    %3399 = vmatpush1.bf16.msra.mxu0 %v3270
    %3400 = vmatprep.subr.bf16.mxu0 %v3273
    %3401 = vmatpush1.bf16.msra.mxu0 %v3272
    %3402 = vmatprep.subr.bf16.mxu0 %v3275
    %3403 = vmatpush1.bf16.msra.mxu0 %v3274
    %3404 = vmatprep.mubr.bf16.mxu0 %v2973
    %3405 = vmatmul.mubr.bf16.gmra.mrb[0].mxu0 %v2972
    %v3406 = vpop.f32.mrb[0].mxu0
    %v3407 = vadd.f32 %v3045, %v3406
    %v3408 = vpop.f32.mrb[0].mxu0
    %v3409 = vadd.f32 %v3049, %v3408
    %v3410 = vpop.f32.mrb[0].mxu0
    %v3411 = vpop.f32.mrb[0].mxu0
    %3412 = vdwg.mxu0
    %3413 = vmatprep.subr.bf16.mxu0 %v3277
    %3414 = vmatpush1.bf16.msra.mxu0 %v3276
    %3415 = vmatprep.subr.bf16.mxu0 %v3279
    %3416 = vmatpush1.bf16.msra.mxu0 %v3278
    %3417 = vmatprep.subr.bf16.mxu0 %v3281
    %3418 = vmatpush1.bf16.msra.mxu0 %v3280
    %3419 = vmatprep.subr.bf16.mxu0 %v3283
    %3420 = vmatpush1.bf16.msra.mxu0 %v3282
    %3421 = vmatprep.subr.bf16.mxu0 %v3285
    %3422 = vmatpush1.bf16.msra.mxu0 %v3284
    %3423 = vmatprep.subr.bf16.mxu0 %v3287
    %3424 = vmatpush1.bf16.msra.mxu0 %v3286
    %3425 = vmatprep.subr.bf16.mxu0 %v3289
    %3426 = vmatpush1.bf16.msra.mxu0 %v3288
    %3427 = vmatprep.subr.bf16.mxu0 %v3291
    %3428 = vmatpush1.bf16.msra.mxu0 %v3290
    %3429 = vmatprep.subr.bf16.mxu0 %v3293
    %3430 = vmatpush1.bf16.msra.mxu0 %v3292
    %3431 = vmatprep.subr.bf16.mxu0 %v3295
    %3432 = vmatpush1.bf16.msra.mxu0 %v3294
    %3433 = vmatprep.subr.bf16.mxu0 %v3297
    %3434 = vmatpush1.bf16.msra.mxu0 %v3296
    %3435 = vmatprep.subr.bf16.mxu0 %v3299
    %3436 = vmatpush1.bf16.msra.mxu0 %v3298
    %3437 = vmatprep.subr.bf16.mxu0 %v3301
    %3438 = vmatpush1.bf16.msra.mxu0 %v3300
    %3439 = vmatprep.subr.bf16.mxu0 %v3303
    %3440 = vmatpush1.bf16.msra.mxu0 %v3302
    %3441 = vmatprep.subr.bf16.mxu0 %v3305
    %3442 = vmatpush1.bf16.msra.mxu0 %v3304
    %3443 = vmatprep.subr.bf16.mxu0 %v3307
    %3444 = vmatpush1.bf16.msra.mxu0 %v3306
    %3445 = vmatprep.mubr.bf16.mxu0 %v2975
    %3446 = vmatmul.mubr.bf16.gmra.mrb[0].mxu0 %v2974
    %v3447 = vpop.f32.mrb[0].mxu0
    %v3448 = vadd.f32 %v3407, %v3447
    %v3449 = vpop.f32.mrb[0].mxu0
    %v3450 = vadd.f32 %v3409, %v3449
    %v3451 = vpop.f32.mrb[0].mxu0
    %v3452 = vpop.f32.mrb[0].mxu0
    %3453 = vdwg.mxu0
    %v3454 = vxor.u32 %v3448, 2147483648
    %v3455 = vxor.u32 %v3450, 2147483648
    %v3456 = vmul.f32 %v3454, 1.442695
    %v3457 = vpow.pop %v3456
    %v3458 = vmul.f32 %v3455, 1.442695
    %v3459 = vpow.pop %v3458
    %v3460 = vadd.f32 %v3457, 1.0
    %v3461 = vadd.f32 %v3459, 1.0
    %v3462 = vrcp.pop %v3460
    %v3463 = vmul.f32 1.0, %v3462
    %v3464 = vrcp.pop %v3461
    %v3465 = vmul.f32 1.0, %v3464
    %v3466 = vpack.c.bf16 %v3463, %v3463
    %v3467 = vpack.c.bf16 %v3465, %v3465
    %v3468 = vld [vmem:[#allocation7] sm:$0xff]
    %v3469 = vld [vmem:[#allocation7 + $0x8] sm:$0xff]
    %v3470 = vld [vmem:[#allocation7 + $0x10] sm:$0xff]
    %v3471 = vld [vmem:[#allocation7 + $0x18] sm:$0xff]
    %v3472 = vld [vmem:[#allocation7 + $0x20] sm:$0xff]
    %v3473 = vld [vmem:[#allocation7 + $0x28] sm:$0xff]
    %v3474 = vld [vmem:[#allocation7 + $0x30] sm:$0xff]
    %v3475 = vld [vmem:[#allocation7 + $0x38] sm:$0xff]
    %v3476 = vld [vmem:[#allocation7 + $0x40] sm:$0xff]
    %v3477 = vld [vmem:[#allocation7 + $0x48] sm:$0xff]
    %v3478 = vld [vmem:[#allocation7 + $0x50] sm:$0xff]
    %v3479 = vld [vmem:[#allocation7 + $0x58] sm:$0xff]
    %v3480 = vld [vmem:[#allocation7 + $0x60] sm:$0xff]
    %v3481 = vld [vmem:[#allocation7 + $0x68] sm:$0xff]
    %v3482 = vld [vmem:[#allocation7 + $0x70] sm:$0xff]
    %v3483 = vld [vmem:[#allocation7 + $0x78] sm:$0xff]
    %v3484 = vld [vmem:[#allocation7 + $0x80] sm:$0xff]
    %v3485 = vld [vmem:[#allocation7 + $0x88] sm:$0xff]
    %v3486 = vld [vmem:[#allocation7 + $0x90] sm:$0xff]
    %v3487 = vld [vmem:[#allocation7 + $0x98] sm:$0xff]
    %v3488 = vld [vmem:[#allocation7 + $0xa0] sm:$0xff]
    %v3489 = vld [vmem:[#allocation7 + $0xa8] sm:$0xff]
    %v3490 = vld [vmem:[#allocation7 + $0xb0] sm:$0xff]
    %v3491 = vld [vmem:[#allocation7 + $0xb8] sm:$0xff]
    %v3492 = vld [vmem:[#allocation7 + $0xc0] sm:$0xff]
    %v3493 = vld [vmem:[#allocation7 + $0xc8] sm:$0xff]
    %v3494 = vld [vmem:[#allocation7 + $0xd0] sm:$0xff]
    %v3495 = vld [vmem:[#allocation7 + $0xd8] sm:$0xff]
    %v3496 = vld [vmem:[#allocation7 + $0xe0] sm:$0xff]
    %v3497 = vld [vmem:[#allocation7 + $0xe8] sm:$0xff]
    %v3498 = vld [vmem:[#allocation7 + $0xf0] sm:$0xff]
    %v3499 = vld [vmem:[#allocation7 + $0xf8] sm:$0xff]
    %v3500 = vld [vmem:[%s9] sm:$0x3]
    %v3502 = vlaneseq
    %v3503 = vshrl.u32 %v3502, 7
    %v3504 = vsub.s32 0, %v3503
    %v3505 = vrot.slane %v3500, %v3504
    %v3506 = vlaneseq
    %v3507 = vshrl.u32 %v3506, 7
    %v3508 = vsub.s32 1, %v3507
    %v3509 = vrot.slane %v3500, %v3508
    %v3544 = vunpack.c.l.b16 %v3468
    %v3545 = vunpack.c.h.b16 %v3468
    %v3546 = vunpack.c.l.b16 %v3469
    %v3547 = vunpack.c.h.b16 %v3469
    %v3548 = vunpack.c.l.b16 %v3470
    %v3549 = vunpack.c.h.b16 %v3470
    %v3550 = vunpack.c.l.b16 %v3471
    %v3551 = vunpack.c.h.b16 %v3471
    %v3552 = vunpack.c.l.b16 %v3472
    %v3553 = vunpack.c.h.b16 %v3472
    %v3554 = vunpack.c.l.b16 %v3473
    %v3555 = vunpack.c.h.b16 %v3473
    %v3556 = vunpack.c.l.b16 %v3474
    %v3557 = vunpack.c.h.b16 %v3474
    %v3558 = vunpack.c.l.b16 %v3475
    %v3559 = vunpack.c.h.b16 %v3475
    %v3560 = vunpack.c.l.b16 %v3476
    %v3561 = vunpack.c.h.b16 %v3476
    %v3562 = vunpack.c.l.b16 %v3477
    %v3563 = vunpack.c.h.b16 %v3477
    %v3564 = vunpack.c.l.b16 %v3478
    %v3565 = vunpack.c.h.b16 %v3478
    %v3566 = vunpack.c.l.b16 %v3479
    %v3567 = vunpack.c.h.b16 %v3479
    %v3568 = vunpack.c.l.b16 %v3480
    %v3569 = vunpack.c.h.b16 %v3480
    %v3570 = vunpack.c.l.b16 %v3481
    %v3571 = vunpack.c.h.b16 %v3481
    %v3572 = vunpack.c.l.b16 %v3482
    %v3573 = vunpack.c.h.b16 %v3482
    %v3574 = vunpack.c.l.b16 %v3483
    %v3575 = vunpack.c.h.b16 %v3483
    %v3576 = vunpack.c.l.b16 %v3484
    %v3577 = vunpack.c.h.b16 %v3484
    %v3578 = vunpack.c.l.b16 %v3485
    %v3579 = vunpack.c.h.b16 %v3485
    %v3580 = vunpack.c.l.b16 %v3486
    %v3581 = vunpack.c.h.b16 %v3486
    %v3582 = vunpack.c.l.b16 %v3487
    %v3583 = vunpack.c.h.b16 %v3487
    %v3584 = vunpack.c.l.b16 %v3488
    %v3585 = vunpack.c.h.b16 %v3488
    %v3586 = vunpack.c.l.b16 %v3489
    %v3587 = vunpack.c.h.b16 %v3489
    %v3588 = vunpack.c.l.b16 %v3490
    %v3589 = vunpack.c.h.b16 %v3490
    %v3590 = vunpack.c.l.b16 %v3491
    %v3591 = vunpack.c.h.b16 %v3491
    %v3592 = vunpack.c.l.b16 %v3492
    %v3593 = vunpack.c.h.b16 %v3492
    %v3594 = vunpack.c.l.b16 %v3493
    %v3595 = vunpack.c.h.b16 %v3493
    %v3596 = vunpack.c.l.b16 %v3494
    %v3597 = vunpack.c.h.b16 %v3494
    %v3598 = vunpack.c.l.b16 %v3495
    %v3599 = vunpack.c.h.b16 %v3495
    %v3600 = vunpack.c.l.b16 %v3496
    %v3601 = vunpack.c.h.b16 %v3496
    %v3602 = vunpack.c.l.b16 %v3497
    %v3603 = vunpack.c.h.b16 %v3497
    %v3604 = vunpack.c.l.b16 %v3498
    %v3605 = vunpack.c.h.b16 %v3498
    %v3606 = vunpack.c.l.b16 %v3499
    %v3607 = vunpack.c.h.b16 %v3499
    %v3608 = vpack.c.b16 %v3546, %v3544
    %v3609 = vpack.c.b16 %v3547, %v3545
    %v3610 = vpack.c.b16 %v3550, %v3548
    %v3611 = vpack.c.b16 %v3551, %v3549
    %v3612 = vpack.c.b16 %v3554, %v3552
    %v3613 = vpack.c.b16 %v3555, %v3553
    %v3614 = vpack.c.b16 %v3558, %v3556
    %v3615 = vpack.c.b16 %v3559, %v3557
    %v3616 = vpack.c.b16 %v3562, %v3560
    %v3617 = vpack.c.b16 %v3563, %v3561
    %v3618 = vpack.c.b16 %v3566, %v3564
    %v3619 = vpack.c.b16 %v3567, %v3565
    %v3620 = vpack.c.b16 %v3570, %v3568
    %v3621 = vpack.c.b16 %v3571, %v3569
    %v3622 = vpack.c.b16 %v3574, %v3572
    %v3623 = vpack.c.b16 %v3575, %v3573
    %v3624 = vpack.c.b16 %v3578, %v3576
    %v3625 = vpack.c.b16 %v3579, %v3577
    %v3626 = vpack.c.b16 %v3582, %v3580
    %v3627 = vpack.c.b16 %v3583, %v3581
    %v3628 = vpack.c.b16 %v3586, %v3584
    %v3629 = vpack.c.b16 %v3587, %v3585
    %v3630 = vpack.c.b16 %v3590, %v3588
    %v3631 = vpack.c.b16 %v3591, %v3589
    %v3632 = vpack.c.b16 %v3594, %v3592
    %v3633 = vpack.c.b16 %v3595, %v3593
    %v3634 = vpack.c.b16 %v3598, %v3596
    %v3635 = vpack.c.b16 %v3599, %v3597
    %v3636 = vpack.c.b16 %v3602, %v3600
    %v3637 = vpack.c.b16 %v3603, %v3601
    %v3638 = vpack.c.b16 %v3606, %v3604
    %v3639 = vpack.c.b16 %v3607, %v3605
    %3672 = vmatprep.subr.bf16.mxu0 %v3609
    %3673 = vmatpush1.bf16.msra.mxu0 %v3608
    %3674 = vmatprep.subr.bf16.mxu0 %v3611
    %3675 = vmatpush1.bf16.msra.mxu0 %v3610
    %3676 = vmatprep.subr.bf16.mxu0 %v3613
    %3677 = vmatpush1.bf16.msra.mxu0 %v3612
    %3678 = vmatprep.subr.bf16.mxu0 %v3615
    %3679 = vmatpush1.bf16.msra.mxu0 %v3614
    %3680 = vmatprep.subr.bf16.mxu0 %v3617
    %3681 = vmatpush1.bf16.msra.mxu0 %v3616
    %3682 = vmatprep.subr.bf16.mxu0 %v3619
    %3683 = vmatpush1.bf16.msra.mxu0 %v3618
    %3684 = vmatprep.subr.bf16.mxu0 %v3621
    %3685 = vmatpush1.bf16.msra.mxu0 %v3620
    %3686 = vmatprep.subr.bf16.mxu0 %v3623
    %3687 = vmatpush1.bf16.msra.mxu0 %v3622
    %3688 = vmatprep.subr.bf16.mxu0 %v3625
    %3689 = vmatpush1.bf16.msra.mxu0 %v3624
    %3690 = vmatprep.subr.bf16.mxu0 %v3627
    %3691 = vmatpush1.bf16.msra.mxu0 %v3626
    %3692 = vmatprep.subr.bf16.mxu0 %v3629
    %3693 = vmatpush1.bf16.msra.mxu0 %v3628
    %3694 = vmatprep.subr.bf16.mxu0 %v3631
    %3695 = vmatpush1.bf16.msra.mxu0 %v3630
    %3696 = vmatprep.subr.bf16.mxu0 %v3633
    %3697 = vmatpush1.bf16.msra.mxu0 %v3632
    %3698 = vmatprep.subr.bf16.mxu0 %v3635
    %3699 = vmatpush1.bf16.msra.mxu0 %v3634
    %3700 = vmatprep.subr.bf16.mxu0 %v3637
    %3701 = vmatpush1.bf16.msra.mxu0 %v3636
    %3702 = vmatprep.subr.bf16.mxu0 %v3639
    %3703 = vmatpush1.bf16.msra.mxu0 %v3638
    %3704 = vmatprep.mubr.bf16.mxu0 %v3467
    %3705 = vmatmul.mubr.bf16.gmra.mrb[0].mxu0 %v3466
    %v3706 = vpop.f32.mrb[0].mxu0
    %v3707 = vadd.f32 %v3505, %v3706
    %v3708 = vpop.f32.mrb[0].mxu0
    %v3709 = vadd.f32 %v3509, %v3708
    %v3710 = vpop.f32.mrb[0].mxu0
    %v3711 = vpop.f32.mrb[0].mxu0
    %3712 = vdwg.mxu0
    %3713 = vst [vmem:[%s10] sm:$0xff] %v3707
    %3714 = vst [vmem:[%s10 + $0x8] sm:$0xff] %v3709
    // Predicated region
    $region58: #{fwd.1} parent=1 // pred_check
      _
    $region59: #{fwd.1} parent=1 // pred_check_branch
      %3716 = sbr.rel (0) target = $region61
    $region60: #{fwd.1} parent=1 // pred_region
      _
    $region61: #{fwd.1} parent=1 // pred_fallthru
      _
    // Predicated region
    $region62: #{fwd.1} parent=1 // pred_check
      _
    $region63: #{fwd.1} parent=1 // pred_check_branch
      %3718 = sbr.rel (0) target = $region65
    $region64: #{fwd.1} parent=1 // pred_region
      _
    $region65: #{fwd.1} parent=1 // pred_fallthru
      _
    %3719 = vsyncpa [#allocation3], 1
    %3720 = vsyncpa [#allocation5], 1
    %3721 = vsyncpa [#allocation8], 1

// kernel: fwd.1
$region0: #{fwd.1}
  #allocation0 [shape = 'u32[]', space=smem, size = 0x4, offset = 0x4, fixed_abs, tag = 'smem constant byte address 0x4 - core index']
  #allocation1 [shape = 'u32[144,128]{1,0:T(1,128)}', space=vmem, size = 0x12000, scoped, tag = 'internal scratch']
  %s0 = inlined_call_operand.vmem [shape: bf16[8,128], index: 0, kind: input, shape index: {}]
  %s1 = inlined_call_operand.vmem [shape: bf16[8,128], index: 1, kind: input, shape index: {}]
  %s2 = inlined_call_operand.hbm [shape: bf16[256,1024], index: 2, kind: input, shape index: {}]
  %s3 = inlined_call_operand.vmem [shape: f32[1,1024], index: 3, kind: input, shape index: {}]
  %s4 = inlined_call_operand.hbm [shape: bf16[1024,512], index: 4, kind: input, shape index: {}]
  %s5 = inlined_call_operand.vmem [shape: f32[1,512], index: 5, kind: input, shape index: {}]
  %s6 = inlined_call_operand.hbm [shape: bf16[512,256], index: 6, kind: input, shape index: {}]
  %s7 = inlined_call_operand.vmem [shape: f32[1,256], index: 7, kind: input, shape index: {}]
  %s8 = inlined_call_operand.hbm [shape: bf16[256,256], index: 8, kind: input, shape index: {}]
  %s9 = inlined_call_operand.vmem [shape: f32[1,256], index: 9, kind: input, shape index: {}]
  %s10 = inlined_call_operand.vmem [shape: f32[8,256], index: 10, kind: output, shape index: {}]
  %s11 = sld [smem:[#allocation0]]
  $region66: #{fwd.1} parent=0
    _
  %s13 = ssub.s32 1, %s11
  %s14 = scalar_select 0, %s13, %s11
  $region1: #{fwd.1} parent=0
    #allocation2 [shape = 'u8[524288]{0}', space=vmem, size = 0x80000, scoped, tag = 'input window, operand 2, single buffered']
    #allocation3 [shape = 's32[1]{0}', space=sflag, size = 0x4, scoped, tag = 'scoped memory for fwd.1']
    #allocation4 [shape = 'u8[1048576]{0}', space=vmem, size = 0x100000, scoped, tag = 'input window, operand 4, single buffered']
    #allocation5 [shape = 's32[1]{0}', space=sflag, size = 0x4, scoped, tag = 'scoped memory for fwd.1']
    #allocation6 [shape = 'u8[262144]{0}', space=vmem, size = 0x40000, scoped, tag = 'input window, operand 6, single buffered']
    #allocation7 [shape = 'u8[131072]{0}', space=vmem, size = 0x20000, scoped, tag = 'input window, operand 8, single buffered']
    #allocation8 [shape = 's32[1]{0}', space=sflag, size = 0x4, scoped, tag = 'scoped memory for fwd.1']
    %15 = vsyncpa [#allocation3], 0
    %16 = vsyncpa [#allocation5], 0
    %17 = vsyncpa [#allocation8], 0
    // Predicated region
    $region2: #{fwd.1} parent=1 // pred_check
      _
    $region3: #{fwd.1} parent=1 // pred_check_branch
      %19 = sbr.rel (0) target = $region5
    $region4: #{fwd.1} parent=1 // pred_region
      _
    $region5: #{fwd.1} parent=1 // pred_fallthru
      _
    // Predicated region
    $region6: #{fwd.1} parent=1 // pred_check
      _
    $region7: #{fwd.1} parent=1 // pred_check_branch
      %21 = sbr.rel (0) target = $region9
    $region8: #{fwd.1} parent=1 // pred_region
      _
    $region9: #{fwd.1} parent=1 // pred_fallthru
      _
    // Predicated region
    $region10: #{fwd.1} parent=1 // pred_check
      _
    $region11: #{fwd.1} parent=1 // pred_check_branch
      %23 = sbr.rel (0) target = $region13
    $region12: #{fwd.1} parent=1 // pred_region
      %s25 = ssub.s32 16384, 16384
      %26 = vsyncadd [#allocation3], %s25
      %s27 = sshll.u32 [#allocation2], 4
      %s28 = int_to_ptr.vmem [resolvable:$true] %s27
      %33 = dma.hbm_to_vmem [thread:$0]  %s2, 16384, %s28, [#allocation3], 512, 512, 32
    $region13: #{fwd.1} parent=1 // pred_fallthru
      _
    // Predicated region
    $region14: #{fwd.1} parent=1 // pred_check
      _
    $region15: #{fwd.1} parent=1 // pred_check_branch
      %35 = sbr.rel (0) target = $region17
    $region16: #{fwd.1} parent=1 // pred_region
      _
    $region17: #{fwd.1} parent=1 // pred_fallthru
      _
    // Predicated region
    $region18: #{fwd.1} parent=1 // pred_check
      _
    $region19: #{fwd.1} parent=1 // pred_check_branch
      %37 = sbr.rel (0) target = $region21
    $region20: #{fwd.1} parent=1 // pred_region
      %s39 = ssub.s32 32768, 32768
      %40 = vsyncadd [#allocation5], %s39
      %s41 = sshll.u32 [#allocation4], 4
      %s42 = int_to_ptr.vmem [resolvable:$true] %s41
      %47 = dma.hbm_to_vmem [thread:$0]  %s4, 32768, %s42, [#allocation5], 256, 256, 16
    $region21: #{fwd.1} parent=1 // pred_fallthru
      _
    // Predicated region
    $region22: #{fwd.1} parent=1 // pred_check
      _
    $region23: #{fwd.1} parent=1 // pred_check_branch
      %49 = sbr.rel (0) target = $region25
    $region24: #{fwd.1} parent=1 // pred_region
      _
    $region25: #{fwd.1} parent=1 // pred_fallthru
      _
    // Predicated region
    $region26: #{fwd.1} parent=1 // pred_check
      _
    $region27: #{fwd.1} parent=1 // pred_check_branch
      %51 = sbr.rel (0) target = $region29
    $region28: #{fwd.1} parent=1 // pred_region
      %s53 = ssub.s32 8192, 8192
      %54 = vsyncadd [#allocation5], %s53
      %s55 = sshll.u32 [#allocation6], 4
      %s56 = int_to_ptr.vmem [resolvable:$true] %s55
      %61 = dma.hbm_to_vmem [thread:$0]  %s6, 8192, %s56, [#allocation5], 128, 128, 8
    $region29: #{fwd.1} parent=1 // pred_fallthru
      _
    // Predicated region
    $region30: #{fwd.1} parent=1 // pred_check
      _
    $region31: #{fwd.1} parent=1 // pred_check_branch
      %63 = sbr.rel (0) target = $region33
    $region32: #{fwd.1} parent=1 // pred_region
      _
    $region33: #{fwd.1} parent=1 // pred_fallthru
      _
    // Predicated region
    $region34: #{fwd.1} parent=1 // pred_check
      _
    $region35: #{fwd.1} parent=1 // pred_check_branch
      %65 = sbr.rel (0) target = $region37
    $region36: #{fwd.1} parent=1 // pred_region
      %s67 = ssub.s32 4096, 4096
      %68 = vsyncadd [#allocation8], %s67
      %s69 = sshll.u32 [#allocation7], 4
      %s70 = int_to_ptr.vmem [resolvable:$true] %s69
      %75 = dma.hbm_to_vmem [thread:$0]  %s8, 4096, %s70, [#allocation8], 128, 128, 8
    $region37: #{fwd.1} parent=1 // pred_fallthru
      _
    // Predicated region
    $region38: #{fwd.1} parent=1 // pred_check
      _
    $region39: #{fwd.1} parent=1 // pred_check_branch
      %77 = sbr.rel (0) target = $region41
    $region40: #{fwd.1} parent=1 // pred_region
      _
    $region41: #{fwd.1} parent=1 // pred_fallthru
      _
    // Predicated region
    $region42: #{fwd.1} parent=1 // pred_check
      _
    $region43: #{fwd.1} parent=1 // pred_check_branch
      %79 = sbr.rel (0) target = $region45
    $region44: #{fwd.1} parent=1 // pred_region
      %80 = dma.done [#allocation3], 16384
    $region45: #{fwd.1} parent=1 // pred_fallthru
      _
    // Predicated region
    $region46: #{fwd.1} parent=1 // pred_check
      _
    $region47: #{fwd.1} parent=1 // pred_check_branch
      %82 = sbr.rel (0) target = $region49
    $region48: #{fwd.1} parent=1 // pred_region
      %83 = dma.done [#allocation5], 32768
    $region49: #{fwd.1} parent=1 // pred_fallthru
      _
    // Predicated region
    $region50: #{fwd.1} parent=1 // pred_check
      _
    $region51: #{fwd.1} parent=1 // pred_check_branch
      %85 = sbr.rel (0) target = $region53
    $region52: #{fwd.1} parent=1 // pred_region
      %86 = dma.done [#allocation5], 8192
    $region53: #{fwd.1} parent=1 // pred_fallthru
      _
    // Predicated region
    $region54: #{fwd.1} parent=1 // pred_check
      _
    $region55: #{fwd.1} parent=1 // pred_check_branch
      %88 = sbr.rel (0) target = $region57
    $region56: #{fwd.1} parent=1 // pred_region
      %89 = dma.done [#allocation8], 4096
    $region57: #{fwd.1} parent=1 // pred_fallthru
      _
    %v90 = vld [vmem:[%s0] sm:$0xf]
    %v91 = vld [vmem:[%s1] sm:$0xf]
    %v92 = vld [vmem:[#allocation2] sm:$0xff]
    %v93 = vld [vmem:[#allocation2 + $0x8] sm:$0xff]
    %v94 = vld [vmem:[#allocation2 + $0x10] sm:$0xff]
    %v95 = vld [vmem:[#allocation2 + $0x18] sm:$0xff]
    %v96 = vld [vmem:[#allocation2 + $0x20] sm:$0xff]
    %v97 = vld [vmem:[#allocation2 + $0x28] sm:$0xff]
    %v98 = vld [vmem:[#allocation2 + $0x30] sm:$0xff]
    %v99 = vld [vmem:[#allocation2 + $0x38] sm:$0xff]
    %v100 = vld [vmem:[#allocation2 + $0x40] sm:$0xff]
    %v101 = vld [vmem:[#allocation2 + $0x48] sm:$0xff]
    %v102 = vld [vmem:[#allocation2 + $0x50] sm:$0xff]
    %v103 = vld [vmem:[#allocation2 + $0x58] sm:$0xff]
    %v104 = vld [vmem:[#allocation2 + $0x60] sm:$0xff]
    %v105 = vld [vmem:[#allocation2 + $0x68] sm:$0xff]
    %v106 = vld [vmem:[#allocation2 + $0x70] sm:$0xff]
    %v107 = vld [vmem:[#allocation2 + $0x78] sm:$0xff]
    %v108 = vld [vmem:[#allocation2 + $0x80] sm:$0xff]
    %v109 = vld [vmem:[#allocation2 + $0x88] sm:$0xff]
    %v110 = vld [vmem:[#allocation2 + $0x90] sm:$0xff]
    %v111 = vld [vmem:[#allocation2 + $0x98] sm:$0xff]
    %v112 = vld [vmem:[#allocation2 + $0xa0] sm:$0xff]
    %v113 = vld [vmem:[#allocation2 + $0xa8] sm:$0xff]
    %v114 = vld [vmem:[#allocation2 + $0xb0] sm:$0xff]
    %v115 = vld [vmem:[#allocation2 + $0xb8] sm:$0xff]
    %v116 = vld [vmem:[#allocation2 + $0xc0] sm:$0xff]
    %v117 = vld [vmem:[#allocation2 + $0xc8] sm:$0xff]
    %v118 = vld [vmem:[#allocation2 + $0xd0] sm:$0xff]
    %v119 = vld [vmem:[#allocation2 + $0xd8] sm:$0xff]
    %v120 = vld [vmem:[#allocation2 + $0xe0] sm:$0xff]
    %v121 = vld [vmem:[#allocation2 + $0xe8] sm:$0xff]
    %v122 = vld [vmem:[#allocation2 + $0xf0] sm:$0xff]
    %v123 = vld [vmem:[#allocation2 + $0xf8] sm:$0xff]
    %v124 = vld [vmem:[#allocation2 + $0x100] sm:$0xff]
    %v125 = vld [vmem:[#allocation2 + $0x108] sm:$0xff]
    %v126 = vld [vmem:[#allocation2 + $0x110] sm:$0xff]
    %v127 = vld [vmem:[#allocation2 + $0x118] sm:$0xff]
    %v128 = vld [vmem:[#allocation2 + $0x120] sm:$0xff]
    %v129 = vld [vmem:[#allocation2 + $0x128] sm:$0xff]
    %v130 = vld [vmem:[#allocation2 + $0x130] sm:$0xff]
    %v131 = vld [vmem:[#allocation2 + $0x138] sm:$0xff]
    %v132 = vld [vmem:[#allocation2 + $0x140] sm:$0xff]
    %v133 = vld [vmem:[#allocation2 + $0x148] sm:$0xff]
    %v134 = vld [vmem:[#allocation2 + $0x150] sm:$0xff]
    %v135 = vld [vmem:[#allocation2 + $0x158] sm:$0xff]
    %v136 = vld [vmem:[#allocation2 + $0x160] sm:$0xff]
    %v137 = vld [vmem:[#allocation2 + $0x168] sm:$0xff]
    %v138 = vld [vmem:[#allocation2 + $0x170] sm:$0xff]
    %v139 = vld [vmem:[#allocation2 + $0x178] sm:$0xff]
    %v140 = vld [vmem:[#allocation2 + $0x180] sm:$0xff]
    %v141 = vld [vmem:[#allocation2 + $0x188] sm:$0xff]
    %v142 = vld [vmem:[#allocation2 + $0x190] sm:$0xff]
    %v143 = vld [vmem:[#allocation2 + $0x198] sm:$0xff]
    %v144 = vld [vmem:[#allocation2 + $0x1a0] sm:$0xff]
    %v145 = vld [vmem:[#allocation2 + $0x1a8] sm:$0xff]
    %v146 = vld [vmem:[#allocation2 + $0x1b0] sm:$0xff]
    %v147 = vld [vmem:[#allocation2 + $0x1b8] sm:$0xff]
    %v148 = vld [vmem:[#allocation2 + $0x1c0] sm:$0xff]
    %v149 = vld [vmem:[#allocation2 + $0x1c8] sm:$0xff]
    %v150 = vld [vmem:[#allocation2 + $0x1d0] sm:$0xff]
    %v151 = vld [vmem:[#allocation2 + $0x1d8] sm:$0xff]
    %v152 = vld [vmem:[#allocation2 + $0x1e0] sm:$0xff]
    %v153 = vld [vmem:[#allocation2 + $0x1e8] sm:$0xff]
    %v154 = vld [vmem:[#allocation2 + $0x1f0] sm:$0xff]
    %v155 = vld [vmem:[#allocation2 + $0x1f8] sm:$0xff]
    %v156 = vld [vmem:[#allocation2 + $0x200] sm:$0xff]
    %v157 = vld [vmem:[#allocation2 + $0x208] sm:$0xff]
    %v158 = vld [vmem:[#allocation2 + $0x210] sm:$0xff]
    %v159 = vld [vmem:[#allocation2 + $0x218] sm:$0xff]
    %v160 = vld [vmem:[#allocation2 + $0x220] sm:$0xff]
    %v161 = vld [vmem:[#allocation2 + $0x228] sm:$0xff]
    %v162 = vld [vmem:[#allocation2 + $0x230] sm:$0xff]
    %v163 = vld [vmem:[#allocation2 + $0x238] sm:$0xff]
    %v164 = vld [vmem:[#allocation2 + $0x240] sm:$0xff]
    %v165 = vld [vmem:[#allocation2 + $0x248] sm:$0xff]
    %v166 = vld [vmem:[#allocation2 + $0x250] sm:$0xff]
    %v167 = vld [vmem:[#allocation2 + $0x258] sm:$0xff]
    %v168 = vld [vmem:[#allocation2 + $0x260] sm:$0xff]
    %v169 = vld [vmem:[#allocation2 + $0x268] sm:$0xff]
    %v170 = vld [vmem:[#allocation2 + $0x270] sm:$0xff]
    %v171 = vld [vmem:[#allocation2 + $0x278] sm:$0xff]
    %v172 = vld [vmem:[#allocation2 + $0x280] sm:$0xff]
    %v173 = vld [vmem:[#allocation2 + $0x288] sm:$0xff]
    %v174 = vld [vmem:[#allocation2 + $0x290] sm:$0xff]
    %v175 = vld [vmem:[#allocation2 + $0x298] sm:$0xff]
    %v176 = vld [vmem:[#allocation2 + $0x2a0] sm:$0xff]
    %v177 = vld [vmem:[#allocation2 + $0x2a8] sm:$0xff]
    %v178 = vld [vmem:[#allocation2 + $0x2b0] sm:$0xff]
    %v179 = vld [vmem:[#allocation2 + $0x2b8] sm:$0xff]
    %v180 = vld [vmem:[#allocation2 + $0x2c0] sm:$0xff]
    %v181 = vld [vmem:[#allocation2 + $0x2c8] sm:$0xff]
    %v182 = vld [vmem:[#allocation2 + $0x2d0] sm:$0xff]
    %v183 = vld [vmem:[#allocation2 + $0x2d8] sm:$0xff]
    %v184 = vld [vmem:[#allocation2 + $0x2e0] sm:$0xff]
    %v185 = vld [vmem:[#allocation2 + $0x2e8] sm:$0xff]
    %v186 = vld [vmem:[#allocation2 + $0x2f0] sm:$0xff]
    %v187 = vld [vmem:[#allocation2 + $0x2f8] sm:$0xff]
    %v188 = vld [vmem:[#allocation2 + $0x300] sm:$0xff]
    %v189 = vld [vmem:[#allocation2 + $0x308] sm:$0xff]
    %v190 = vld [vmem:[#allocation2 + $0x310] sm:$0xff]
    %v191 = vld [vmem:[#allocation2 + $0x318] sm:$0xff]
    %v192 = vld [vmem:[#allocation2 + $0x320] sm:$0xff]
    %v193 = vld [vmem:[#allocation2 + $0x328] sm:$0xff]
    %v194 = vld [vmem:[#allocation2 + $0x330] sm:$0xff]
    %v195 = vld [vmem:[#allocation2 + $0x338] sm:$0xff]
    %v196 = vld [vmem:[#allocation2 + $0x340] sm:$0xff]
    %v197 = vld [vmem:[#allocation2 + $0x348] sm:$0xff]
    %v198 = vld [vmem:[#allocation2 + $0x350] sm:$0xff]
    %v199 = vld [vmem:[#allocation2 + $0x358] sm:$0xff]
    %v200 = vld [vmem:[#allocation2 + $0x360] sm:$0xff]
    %v201 = vld [vmem:[#allocation2 + $0x368] sm:$0xff]
    %v202 = vld [vmem:[#allocation2 + $0x370] sm:$0xff]
    %v203 = vld [vmem:[#allocation2 + $0x378] sm:$0xff]
    %v204 = vld [vmem:[#allocation2 + $0x380] sm:$0xff]
    %v205 = vld [vmem:[#allocation2 + $0x388] sm:$0xff]
    %v206 = vld [vmem:[#allocation2 + $0x390] sm:$0xff]
    %v207 = vld [vmem:[#allocation2 + $0x398] sm:$0xff]
    %v208 = vld [vmem:[#allocation2 + $0x3a0] sm:$0xff]
    %v209 = vld [vmem:[#allocation2 + $0x3a8] sm:$0xff]
    %v210 = vld [vmem:[#allocation2 + $0x3b0] sm:$0xff]
    %v211 = vld [vmem:[#allocation2 + $0x3b8] sm:$0xff]
    %v212 = vld [vmem:[#allocation2 + $0x3c0] sm:$0xff]
    %v213 = vld [vmem:[#allocation2 + $0x3c8] sm:$0xff]
    %v214 = vld [vmem:[#allocation2 + $0x3d0] sm:$0xff]
    %v215 = vld [vmem:[#allocation2 + $0x3d8] sm:$0xff]
    %v216 = vld [vmem:[#allocation2 + $0x3e0] sm:$0xff]
    %v217 = vld [vmem:[#allocation2 + $0x3e8] sm:$0xff]
    %v218 = vld [vmem:[#allocation2 + $0x3f0] sm:$0xff]
    %v219 = vld [vmem:[#allocation2 + $0x3f8] sm:$0xff]
    %v220 = vld [vmem:[%s3] sm:$0xff]
    %v222 = vlaneseq
    %v223 = vshrl.u32 %v222, 7
    %v224 = vsub.s32 0, %v223
    %v225 = vrot.slane %v220, %v224
    %v226 = vlaneseq
    %v227 = vshrl.u32 %v226, 7
    %v228 = vsub.s32 1, %v227
    %v229 = vrot.slane %v220, %v228
    %v230 = vlaneseq
    %v231 = vshrl.u32 %v230, 7
    %v232 = vsub.s32 2, %v231
    %v233 = vrot.slane %v220, %v232
    %v234 = vlaneseq
    %v235 = vshrl.u32 %v234, 7
    %v236 = vsub.s32 3, %v235
    %v237 = vrot.slane %v220, %v236
    %v238 = vlaneseq
    %v239 = vshrl.u32 %v238, 7
    %v240 = vsub.s32 4, %v239
    %v241 = vrot.slane %v220, %v240
    %v242 = vlaneseq
    %v243 = vshrl.u32 %v242, 7
    %v244 = vsub.s32 5, %v243
    %v245 = vrot.slane %v220, %v244
    %v246 = vlaneseq
    %v247 = vshrl.u32 %v246, 7
    %v248 = vsub.s32 6, %v247
    %v249 = vrot.slane %v220, %v248
    %v250 = vlaneseq
    %v251 = vshrl.u32 %v250, 7
    %v252 = vsub.s32 7, %v251
    %v253 = vrot.slane %v220, %v252
    %v390 = vunpack.c.l.b16 %v92
    %v391 = vunpack.c.h.b16 %v92
    %v392 = vunpack.c.l.b16 %v93
    %v393 = vunpack.c.h.b16 %v93
    %v394 = vunpack.c.l.b16 %v94
    %v395 = vunpack.c.h.b16 %v94
    %v396 = vunpack.c.l.b16 %v95
    %v397 = vunpack.c.h.b16 %v95
    %v398 = vunpack.c.l.b16 %v96
    %v399 = vunpack.c.h.b16 %v96
    %v400 = vunpack.c.l.b16 %v97
    %v401 = vunpack.c.h.b16 %v97
    %v402 = vunpack.c.l.b16 %v98
    %v403 = vunpack.c.h.b16 %v98
    %v404 = vunpack.c.l.b16 %v99
    %v405 = vunpack.c.h.b16 %v99
    %v406 = vunpack.c.l.b16 %v100
    %v407 = vunpack.c.h.b16 %v100
    %v408 = vunpack.c.l.b16 %v101
    %v409 = vunpack.c.h.b16 %v101
    %v410 = vunpack.c.l.b16 %v102
    %v411 = vunpack.c.h.b16 %v102
    %v412 = vunpack.c.l.b16 %v103
    %v413 = vunpack.c.h.b16 %v103
    %v414 = vunpack.c.l.b16 %v104
    %v415 = vunpack.c.h.b16 %v104
    %v416 = vunpack.c.l.b16 %v105
    %v417 = vunpack.c.h.b16 %v105
    %v418 = vunpack.c.l.b16 %v106
    %v419 = vunpack.c.h.b16 %v106
    %v420 = vunpack.c.l.b16 %v107
    %v421 = vunpack.c.h.b16 %v107
    %v422 = vunpack.c.l.b16 %v108
    %v423 = vunpack.c.h.b16 %v108
    %v424 = vunpack.c.l.b16 %v109
    %v425 = vunpack.c.h.b16 %v109
    %v426 = vunpack.c.l.b16 %v110
    %v427 = vunpack.c.h.b16 %v110
    %v428 = vunpack.c.l.b16 %v111
    %v429 = vunpack.c.h.b16 %v111
    %v430 = vunpack.c.l.b16 %v112
    %v431 = vunpack.c.h.b16 %v112
    %v432 = vunpack.c.l.b16 %v113
    %v433 = vunpack.c.h.b16 %v113
    %v434 = vunpack.c.l.b16 %v114
    %v435 = vunpack.c.h.b16 %v114
    %v436 = vunpack.c.l.b16 %v115
    %v437 = vunpack.c.h.b16 %v115
    %v438 = vunpack.c.l.b16 %v116
    %v439 = vunpack.c.h.b16 %v116
    %v440 = vunpack.c.l.b16 %v117
    %v441 = vunpack.c.h.b16 %v117
    %v442 = vunpack.c.l.b16 %v118
    %v443 = vunpack.c.h.b16 %v118
    %v444 = vunpack.c.l.b16 %v119
    %v445 = vunpack.c.h.b16 %v119
    %v446 = vunpack.c.l.b16 %v120
    %v447 = vunpack.c.h.b16 %v120
    %v448 = vunpack.c.l.b16 %v121
    %v449 = vunpack.c.h.b16 %v121
    %v450 = vunpack.c.l.b16 %v122
    %v451 = vunpack.c.h.b16 %v122
    %v452 = vunpack.c.l.b16 %v123
    %v453 = vunpack.c.h.b16 %v123
    %v454 = vunpack.c.l.b16 %v124
    %v455 = vunpack.c.h.b16 %v124
    %v456 = vunpack.c.l.b16 %v125
    %v457 = vunpack.c.h.b16 %v125
    %v458 = vunpack.c.l.b16 %v126
    %v459 = vunpack.c.h.b16 %v126
    %v460 = vunpack.c.l.b16 %v127
    %v461 = vunpack.c.h.b16 %v127
    %v462 = vunpack.c.l.b16 %v128
    %v463 = vunpack.c.h.b16 %v128
    %v464 = vunpack.c.l.b16 %v129
    %v465 = vunpack.c.h.b16 %v129
    %v466 = vunpack.c.l.b16 %v130
    %v467 = vunpack.c.h.b16 %v130
    %v468 = vunpack.c.l.b16 %v131
    %v469 = vunpack.c.h.b16 %v131
    %v470 = vunpack.c.l.b16 %v132
    %v471 = vunpack.c.h.b16 %v132
    %v472 = vunpack.c.l.b16 %v133
    %v473 = vunpack.c.h.b16 %v133
    %v474 = vunpack.c.l.b16 %v134
    %v475 = vunpack.c.h.b16 %v134
    %v476 = vunpack.c.l.b16 %v135
    %v477 = vunpack.c.h.b16 %v135
    %v478 = vunpack.c.l.b16 %v136
    %v479 = vunpack.c.h.b16 %v136
    %v480 = vunpack.c.l.b16 %v137
    %v481 = vunpack.c.h.b16 %v137
    %v482 = vunpack.c.l.b16 %v138
    %v483 = vunpack.c.h.b16 %v138
    %v484 = vunpack.c.l.b16 %v139
    %v485 = vunpack.c.h.b16 %v139
    %v486 = vunpack.c.l.b16 %v140
    %v487 = vunpack.c.h.b16 %v140
    %v488 = vunpack.c.l.b16 %v141
    %v489 = vunpack.c.h.b16 %v141
    %v490 = vunpack.c.l.b16 %v142
    %v491 = vunpack.c.h.b16 %v142
    %v492 = vunpack.c.l.b16 %v143
    %v493 = vunpack.c.h.b16 %v143
    %v494 = vunpack.c.l.b16 %v144
    %v495 = vunpack.c.h.b16 %v144
    %v496 = vunpack.c.l.b16 %v145
    %v497 = vunpack.c.h.b16 %v145
    %v498 = vunpack.c.l.b16 %v146
    %v499 = vunpack.c.h.b16 %v146
    %v500 = vunpack.c.l.b16 %v147
    %v501 = vunpack.c.h.b16 %v147
    %v502 = vunpack.c.l.b16 %v148
    %v503 = vunpack.c.h.b16 %v148
    %v504 = vunpack.c.l.b16 %v149
    %v505 = vunpack.c.h.b16 %v149
    %v506 = vunpack.c.l.b16 %v150
    %v507 = vunpack.c.h.b16 %v150
    %v508 = vunpack.c.l.b16 %v151
    %v509 = vunpack.c.h.b16 %v151
    %v510 = vunpack.c.l.b16 %v152
    %v511 = vunpack.c.h.b16 %v152
    %v512 = vunpack.c.l.b16 %v153
    %v513 = vunpack.c.h.b16 %v153
    %v514 = vunpack.c.l.b16 %v154
    %v515 = vunpack.c.h.b16 %v154
    %v516 = vunpack.c.l.b16 %v155
    %v517 = vunpack.c.h.b16 %v155
    %v518 = vunpack.c.l.b16 %v156
    %v519 = vunpack.c.h.b16 %v156
    %v520 = vunpack.c.l.b16 %v157
    %v521 = vunpack.c.h.b16 %v157
    %v522 = vunpack.c.l.b16 %v158
    %v523 = vunpack.c.h.b16 %v158
    %v524 = vunpack.c.l.b16 %v159
    %v525 = vunpack.c.h.b16 %v159
    %v526 = vunpack.c.l.b16 %v160
    %v527 = vunpack.c.h.b16 %v160
    %v528 = vunpack.c.l.b16 %v161
    %v529 = vunpack.c.h.b16 %v161
    %v530 = vunpack.c.l.b16 %v162
    %v531 = vunpack.c.h.b16 %v162
    %v532 = vunpack.c.l.b16 %v163
    %v533 = vunpack.c.h.b16 %v163
    %v534 = vunpack.c.l.b16 %v164
    %v535 = vunpack.c.h.b16 %v164
    %v536 = vunpack.c.l.b16 %v165
    %v537 = vunpack.c.h.b16 %v165
    %v538 = vunpack.c.l.b16 %v166
    %v539 = vunpack.c.h.b16 %v166
    %v540 = vunpack.c.l.b16 %v167
    %v541 = vunpack.c.h.b16 %v167
    %v542 = vunpack.c.l.b16 %v168
    %v543 = vunpack.c.h.b16 %v168
    %v544 = vunpack.c.l.b16 %v169
    %v545 = vunpack.c.h.b16 %v169
    %v546 = vunpack.c.l.b16 %v170
    %v547 = vunpack.c.h.b16 %v170
    %v548 = vunpack.c.l.b16 %v171
    %v549 = vunpack.c.h.b16 %v171
    %v550 = vunpack.c.l.b16 %v172
    %v551 = vunpack.c.h.b16 %v172
    %v552 = vunpack.c.l.b16 %v173
    %v553 = vunpack.c.h.b16 %v173
    %v554 = vunpack.c.l.b16 %v174
    %v555 = vunpack.c.h.b16 %v174
    %v556 = vunpack.c.l.b16 %v175
    %v557 = vunpack.c.h.b16 %v175
    %v558 = vunpack.c.l.b16 %v176
    %v559 = vunpack.c.h.b16 %v176
    %v560 = vunpack.c.l.b16 %v177
    %v561 = vunpack.c.h.b16 %v177
    %v562 = vunpack.c.l.b16 %v178
    %v563 = vunpack.c.h.b16 %v178
    %v564 = vunpack.c.l.b16 %v179
    %v565 = vunpack.c.h.b16 %v179
    %v566 = vunpack.c.l.b16 %v180
    %v567 = vunpack.c.h.b16 %v180
    %v568 = vunpack.c.l.b16 %v181
    %v569 = vunpack.c.h.b16 %v181
    %v570 = vunpack.c.l.b16 %v182
    %v571 = vunpack.c.h.b16 %v182
    %v572 = vunpack.c.l.b16 %v183
    %v573 = vunpack.c.h.b16 %v183
    %v574 = vunpack.c.l.b16 %v184
    %v575 = vunpack.c.h.b16 %v184
    %v576 = vunpack.c.l.b16 %v185
    %v577 = vunpack.c.h.b16 %v185
    %v578 = vunpack.c.l.b16 %v186
    %v579 = vunpack.c.h.b16 %v186
    %v580 = vunpack.c.l.b16 %v187
    %v581 = vunpack.c.h.b16 %v187
    %v582 = vunpack.c.l.b16 %v188
    %v583 = vunpack.c.h.b16 %v188
    %v584 = vunpack.c.l.b16 %v189
    %v585 = vunpack.c.h.b16 %v189
    %v586 = vunpack.c.l.b16 %v190
    %v587 = vunpack.c.h.b16 %v190
    %v588 = vunpack.c.l.b16 %v191
    %v589 = vunpack.c.h.b16 %v191
    %v590 = vunpack.c.l.b16 %v192
    %v591 = vunpack.c.h.b16 %v192
    %v592 = vunpack.c.l.b16 %v193
    %v593 = vunpack.c.h.b16 %v193
    %v594 = vunpack.c.l.b16 %v194
    %v595 = vunpack.c.h.b16 %v194
    %v596 = vunpack.c.l.b16 %v195
    %v597 = vunpack.c.h.b16 %v195
    %v598 = vunpack.c.l.b16 %v196
    %v599 = vunpack.c.h.b16 %v196
    %v600 = vunpack.c.l.b16 %v197
    %v601 = vunpack.c.h.b16 %v197
    %v602 = vunpack.c.l.b16 %v198
    %v603 = vunpack.c.h.b16 %v198
    %v604 = vunpack.c.l.b16 %v199
    %v605 = vunpack.c.h.b16 %v199
    %v606 = vunpack.c.l.b16 %v200
    %v607 = vunpack.c.h.b16 %v200
    %v608 = vunpack.c.l.b16 %v201
    %v609 = vunpack.c.h.b16 %v201
    %v610 = vunpack.c.l.b16 %v202
    %v611 = vunpack.c.h.b16 %v202
    %v612 = vunpack.c.l.b16 %v203
    %v613 = vunpack.c.h.b16 %v203
    %v614 = vunpack.c.l.b16 %v204
    %v615 = vunpack.c.h.b16 %v204
    %v616 = vunpack.c.l.b16 %v205
    %v617 = vunpack.c.h.b16 %v205
    %v618 = vunpack.c.l.b16 %v206
    %v619 = vunpack.c.h.b16 %v206
    %v620 = vunpack.c.l.b16 %v207
    %v621 = vunpack.c.h.b16 %v207
    %v622 = vunpack.c.l.b16 %v208
    %v623 = vunpack.c.h.b16 %v208
    %v624 = vunpack.c.l.b16 %v209
    %v625 = vunpack.c.h.b16 %v209
    %v626 = vunpack.c.l.b16 %v210
    %v627 = vunpack.c.h.b16 %v210
    %v628 = vunpack.c.l.b16 %v211
    %v629 = vunpack.c.h.b16 %v211
    %v630 = vunpack.c.l.b16 %v212
    %v631 = vunpack.c.h.b16 %v212
    %v632 = vunpack.c.l.b16 %v213
    %v633 = vunpack.c.h.b16 %v213
    %v634 = vunpack.c.l.b16 %v214
    %v635 = vunpack.c.h.b16 %v214
    %v636 = vunpack.c.l.b16 %v215
    %v637 = vunpack.c.h.b16 %v215
    %v638 = vunpack.c.l.b16 %v216
    %v639 = vunpack.c.h.b16 %v216
    %v640 = vunpack.c.l.b16 %v217
    %v641 = vunpack.c.h.b16 %v217
    %v642 = vunpack.c.l.b16 %v218
    %v643 = vunpack.c.h.b16 %v218
    %v644 = vunpack.c.l.b16 %v219
    %v645 = vunpack.c.h.b16 %v219
    %v646 = vpack.c.b16 %v398, %v390
    %v647 = vpack.c.b16 %v399, %v391
    %v648 = vpack.c.b16 %v400, %v392
    %v649 = vpack.c.b16 %v401, %v393
    %v650 = vpack.c.b16 %v402, %v394
    %v651 = vpack.c.b16 %v403, %v395
    %v652 = vpack.c.b16 %v404, %v396
    %v653 = vpack.c.b16 %v405, %v397
    %v654 = vpack.c.b16 %v414, %v406
    %v655 = vpack.c.b16 %v415, %v407
    %v656 = vpack.c.b16 %v416, %v408
    %v657 = vpack.c.b16 %v417, %v409
    %v658 = vpack.c.b16 %v418, %v410
    %v659 = vpack.c.b16 %v419, %v411
    %v660 = vpack.c.b16 %v420, %v412
    %v661 = vpack.c.b16 %v421, %v413
    %v662 = vpack.c.b16 %v430, %v422
    %v663 = vpack.c.b16 %v431, %v423
    %v664 = vpack.c.b16 %v432, %v424
    %v665 = vpack.c.b16 %v433, %v425
    %v666 = vpack.c.b16 %v434, %v426
    %v667 = vpack.c.b16 %v435, %v427
    %v668 = vpack.c.b16 %v436, %v428
    %v669 = vpack.c.b16 %v437, %v429
    %v670 = vpack.c.b16 %v446, %v438
    %v671 = vpack.c.b16 %v447, %v439
    %v672 = vpack.c.b16 %v448, %v440
    %v673 = vpack.c.b16 %v449, %v441
    %v674 = vpack.c.b16 %v450, %v442
    %v675 = vpack.c.b16 %v451, %v443
    %v676 = vpack.c.b16 %v452, %v444
    %v677 = vpack.c.b16 %v453, %v445
    %v678 = vpack.c.b16 %v462, %v454
    %v679 = vpack.c.b16 %v463, %v455
    %v680 = vpack.c.b16 %v464, %v456
    %v681 = vpack.c.b16 %v465, %v457
    %v682 = vpack.c.b16 %v466, %v458
    %v683 = vpack.c.b16 %v467, %v459
    %v684 = vpack.c.b16 %v468, %v460
    %v685 = vpack.c.b16 %v469, %v461
    %v686 = vpack.c.b16 %v478, %v470
    %v687 = vpack.c.b16 %v479, %v471
    %v688 = vpack.c.b16 %v480, %v472
    %v689 = vpack.c.b16 %v481, %v473
    %v690 = vpack.c.b16 %v482, %v474
    %v691 = vpack.c.b16 %v483, %v475
    %v692 = vpack.c.b16 %v484, %v476
    %v693 = vpack.c.b16 %v485, %v477
    %v694 = vpack.c.b16 %v494, %v486
    %v695 = vpack.c.b16 %v495, %v487
    %v696 = vpack.c.b16 %v496, %v488
    %v697 = vpack.c.b16 %v497, %v489
    %v698 = vpack.c.b16 %v498, %v490
    %v699 = vpack.c.b16 %v499, %v491
    %v700 = vpack.c.b16 %v500, %v492
    %v701 = vpack.c.b16 %v501, %v493
    %v702 = vpack.c.b16 %v510, %v502
    %v703 = vpack.c.b16 %v511, %v503
    %v704 = vpack.c.b16 %v512, %v504
    %v705 = vpack.c.b16 %v513, %v505
    %v706 = vpack.c.b16 %v514, %v506
    %v707 = vpack.c.b16 %v515, %v507
    %v708 = vpack.c.b16 %v516, %v508
    %v709 = vpack.c.b16 %v517, %v509
    %v710 = vpack.c.b16 %v526, %v518
    %v711 = vpack.c.b16 %v527, %v519
    %v712 = vpack.c.b16 %v528, %v520
    %v713 = vpack.c.b16 %v529, %v521
    %v714 = vpack.c.b16 %v530, %v522
    %v715 = vpack.c.b16 %v531, %v523
    %v716 = vpack.c.b16 %v532, %v524
    %v717 = vpack.c.b16 %v533, %v525
    %v718 = vpack.c.b16 %v542, %v534
    %v719 = vpack.c.b16 %v543, %v535
    %v720 = vpack.c.b16 %v544, %v536
    %v721 = vpack.c.b16 %v545, %v537
    %v722 = vpack.c.b16 %v546, %v538
    %v723 = vpack.c.b16 %v547, %v539
    %v724 = vpack.c.b16 %v548, %v540
    %v725 = vpack.c.b16 %v549, %v541
    %v726 = vpack.c.b16 %v558, %v550
    %v727 = vpack.c.b16 %v559, %v551
    %v728 = vpack.c.b16 %v560, %v552
    %v729 = vpack.c.b16 %v561, %v553
    %v730 = vpack.c.b16 %v562, %v554
    %v731 = vpack.c.b16 %v563, %v555
    %v732 = vpack.c.b16 %v564, %v556
    %v733 = vpack.c.b16 %v565, %v557
    %v734 = vpack.c.b16 %v574, %v566
    %v735 = vpack.c.b16 %v575, %v567
    %v736 = vpack.c.b16 %v576, %v568
    %v737 = vpack.c.b16 %v577, %v569
    %v738 = vpack.c.b16 %v578, %v570
    %v739 = vpack.c.b16 %v579, %v571
    %v740 = vpack.c.b16 %v580, %v572
    %v741 = vpack.c.b16 %v581, %v573
    %v742 = vpack.c.b16 %v590, %v582
    %v743 = vpack.c.b16 %v591, %v583
    %v744 = vpack.c.b16 %v592, %v584
    %v745 = vpack.c.b16 %v593, %v585
    %v746 = vpack.c.b16 %v594, %v586
    %v747 = vpack.c.b16 %v595, %v587
    %v748 = vpack.c.b16 %v596, %v588
    %v749 = vpack.c.b16 %v597, %v589
    %v750 = vpack.c.b16 %v606, %v598
    %v751 = vpack.c.b16 %v607, %v599
    %v752 = vpack.c.b16 %v608, %v600
    %v753 = vpack.c.b16 %v609, %v601
    %v754 = vpack.c.b16 %v610, %v602
    %v755 = vpack.c.b16 %v611, %v603
    %v756 = vpack.c.b16 %v612, %v604
    %v757 = vpack.c.b16 %v613, %v605
    %v758 = vpack.c.b16 %v622, %v614
    %v759 = vpack.c.b16 %v623, %v615
    %v760 = vpack.c.b16 %v624, %v616
    %v761 = vpack.c.b16 %v625, %v617
    %v762 = vpack.c.b16 %v626, %v618
    %v763 = vpack.c.b16 %v627, %v619
    %v764 = vpack.c.b16 %v628, %v620
    %v765 = vpack.c.b16 %v629, %v621
    %v766 = vpack.c.b16 %v638, %v630
    %v767 = vpack.c.b16 %v639, %v631
    %v768 = vpack.c.b16 %v640, %v632
    %v769 = vpack.c.b16 %v641, %v633
    %v770 = vpack.c.b16 %v642, %v634
    %v771 = vpack.c.b16 %v643, %v635
    %v772 = vpack.c.b16 %v644, %v636
    %v773 = vpack.c.b16 %v645, %v637
    %902 = vmatprep.subr.bf16.mxu0 %v647
    %903 = vmatpush1.bf16.msra.mxu0 %v646
    %904 = vmatprep.subr.bf16.mxu0 %v655
    %905 = vmatpush1.bf16.msra.mxu0 %v654
    %906 = vmatprep.subr.bf16.mxu0 %v663
    %907 = vmatpush1.bf16.msra.mxu0 %v662
    %908 = vmatprep.subr.bf16.mxu0 %v671
    %909 = vmatpush1.bf16.msra.mxu0 %v670
    %910 = vmatprep.subr.bf16.mxu0 %v679
    %911 = vmatpush1.bf16.msra.mxu0 %v678
    %912 = vmatprep.subr.bf16.mxu0 %v687
    %913 = vmatpush1.bf16.msra.mxu0 %v686
    %914 = vmatprep.subr.bf16.mxu0 %v695
    %915 = vmatpush1.bf16.msra.mxu0 %v694
    %916 = vmatprep.subr.bf16.mxu0 %v703
    %917 = vmatpush1.bf16.msra.mxu0 %v702
    %918 = vmatprep.subr.bf16.mxu0 %v711
    %919 = vmatpush1.bf16.msra.mxu0 %v710
    %920 = vmatprep.subr.bf16.mxu0 %v719
    %921 = vmatpush1.bf16.msra.mxu0 %v718
    %922 = vmatprep.subr.bf16.mxu0 %v727
    %923 = vmatpush1.bf16.msra.mxu0 %v726
    %924 = vmatprep.subr.bf16.mxu0 %v735
    %925 = vmatpush1.bf16.msra.mxu0 %v734
    %926 = vmatprep.subr.bf16.mxu0 %v743
    %927 = vmatpush1.bf16.msra.mxu0 %v742
    %928 = vmatprep.subr.bf16.mxu0 %v751
    %929 = vmatpush1.bf16.msra.mxu0 %v750
    %930 = vmatprep.subr.bf16.mxu0 %v759
    %931 = vmatpush1.bf16.msra.mxu0 %v758
    %932 = vmatprep.subr.bf16.mxu0 %v767
    %933 = vmatpush1.bf16.msra.mxu0 %v766
    %934 = vmatprep.mubr.bf16.mxu0 %v91
    %935 = vmatmul.mubr.bf16.gmra.mrb[0].mxu0 %v90
    %v936 = vpop.f32.mrb[0].mxu0
    %v937 = vadd.f32 %v225, %v936
    %v938 = vpop.f32.mrb[0].mxu0
    %v939 = vadd.f32 %v229, %v938
    %v940 = vpop.f32.mrb[0].mxu0
    %v941 = vpop.f32.mrb[0].mxu0
    %942 = vdwg.mxu0
    %943 = vmatprep.subr.bf16.mxu0 %v649
    %944 = vmatpush1.bf16.msra.mxu0 %v648
    %945 = vmatprep.subr.bf16.mxu0 %v657
    %946 = vmatpush1.bf16.msra.mxu0 %v656
    %947 = vmatprep.subr.bf16.mxu0 %v665
    %948 = vmatpush1.bf16.msra.mxu0 %v664
    %949 = vmatprep.subr.bf16.mxu0 %v673
    %950 = vmatpush1.bf16.msra.mxu0 %v672
    %951 = vmatprep.subr.bf16.mxu0 %v681
    %952 = vmatpush1.bf16.msra.mxu0 %v680
    %953 = vmatprep.subr.bf16.mxu0 %v689
    %954 = vmatpush1.bf16.msra.mxu0 %v688
    %955 = vmatprep.subr.bf16.mxu0 %v697
    %956 = vmatpush1.bf16.msra.mxu0 %v696
    %957 = vmatprep.subr.bf16.mxu0 %v705
    %958 = vmatpush1.bf16.msra.mxu0 %v704
    %959 = vmatprep.subr.bf16.mxu0 %v713
    %960 = vmatpush1.bf16.msra.mxu0 %v712
    %961 = vmatprep.subr.bf16.mxu0 %v721
    %962 = vmatpush1.bf16.msra.mxu0 %v720
    %963 = vmatprep.subr.bf16.mxu0 %v729
    %964 = vmatpush1.bf16.msra.mxu0 %v728
    %965 = vmatprep.subr.bf16.mxu0 %v737
    %966 = vmatpush1.bf16.msra.mxu0 %v736
    %967 = vmatprep.subr.bf16.mxu0 %v745
    %968 = vmatpush1.bf16.msra.mxu0 %v744
    %969 = vmatprep.subr.bf16.mxu0 %v753
    %970 = vmatpush1.bf16.msra.mxu0 %v752
    %971 = vmatprep.subr.bf16.mxu0 %v761
    %972 = vmatpush1.bf16.msra.mxu0 %v760
    %973 = vmatprep.subr.bf16.mxu0 %v769
    %974 = vmatpush1.bf16.msra.mxu0 %v768
    %975 = vmatprep.mubr.bf16.mxu0 %v91
    %976 = vmatmul.mubr.bf16.gmra.mrb[0].mxu0 %v90
    %v977 = vpop.f32.mrb[0].mxu0
    %v978 = vadd.f32 %v233, %v977
    %v979 = vpop.f32.mrb[0].mxu0
    %v980 = vadd.f32 %v237, %v979
    %v981 = vpop.f32.mrb[0].mxu0
    %v982 = vpop.f32.mrb[0].mxu0
    %983 = vdwg.mxu0
    %984 = vmatprep.subr.bf16.mxu0 %v651
    %985 = vmatpush1.bf16.msra.mxu0 %v650
    %986 = vmatprep.subr.bf16.mxu0 %v659
    %987 = vmatpush1.bf16.msra.mxu0 %v658
    %988 = vmatprep.subr.bf16.mxu0 %v667
    %989 = vmatpush1.bf16.msra.mxu0 %v666
    %990 = vmatprep.subr.bf16.mxu0 %v675
    %991 = vmatpush1.bf16.msra.mxu0 %v674
    %992 = vmatprep.subr.bf16.mxu0 %v683
    %993 = vmatpush1.bf16.msra.mxu0 %v682
    %994 = vmatprep.subr.bf16.mxu0 %v691
    %995 = vmatpush1.bf16.msra.mxu0 %v690
    %996 = vmatprep.subr.bf16.mxu0 %v699
    %997 = vmatpush1.bf16.msra.mxu0 %v698
    %998 = vmatprep.subr.bf16.mxu0 %v707
    %999 = vmatpush1.bf16.msra.mxu0 %v706
    %1000 = vmatprep.subr.bf16.mxu0 %v715
    %1001 = vmatpush1.bf16.msra.mxu0 %v714
    %1002 = vmatprep.subr.bf16.mxu0 %v723
    %1003 = vmatpush1.bf16.msra.mxu0 %v722
    %1004 = vmatprep.subr.bf16.mxu0 %v731
    %1005 = vmatpush1.bf16.msra.mxu0 %v730
    %1006 = vmatprep.subr.bf16.mxu0 %v739
    %1007 = vmatpush1.bf16.msra.mxu0 %v738
    %1008 = vmatprep.subr.bf16.mxu0 %v747
    %1009 = vmatpush1.bf16.msra.mxu0 %v746
    %1010 = vmatprep.subr.bf16.mxu0 %v755
    %1011 = vmatpush1.bf16.msra.mxu0 %v754
    %1012 = vmatprep.subr.bf16.mxu0 %v763
    %1013 = vmatpush1.bf16.msra.mxu0 %v762
    %1014 = vmatprep.subr.bf16.mxu0 %v771
    %1015 = vmatpush1.bf16.msra.mxu0 %v770
    %1016 = vmatprep.mubr.bf16.mxu0 %v91
    %1017 = vmatmul.mubr.bf16.gmra.mrb[0].mxu0 %v90
    %v1018 = vpop.f32.mrb[0].mxu0
    %v1019 = vadd.f32 %v241, %v1018
    %v1020 = vpop.f32.mrb[0].mxu0
    %v1021 = vadd.f32 %v245, %v1020
    %v1022 = vpop.f32.mrb[0].mxu0
    %v1023 = vpop.f32.mrb[0].mxu0
    %1024 = vdwg.mxu0
    %1025 = vmatprep.subr.bf16.mxu0 %v653
    %1026 = vmatpush1.bf16.msra.mxu0 %v652
    %1027 = vmatprep.subr.bf16.mxu0 %v661
    %1028 = vmatpush1.bf16.msra.mxu0 %v660
    %1029 = vmatprep.subr.bf16.mxu0 %v669
    %1030 = vmatpush1.bf16.msra.mxu0 %v668
    %1031 = vmatprep.subr.bf16.mxu0 %v677
    %1032 = vmatpush1.bf16.msra.mxu0 %v676
    %1033 = vmatprep.subr.bf16.mxu0 %v685
    %1034 = vmatpush1.bf16.msra.mxu0 %v684
    %1035 = vmatprep.subr.bf16.mxu0 %v693
    %1036 = vmatpush1.bf16.msra.mxu0 %v692
    %1037 = vmatprep.subr.bf16.mxu0 %v701
    %1038 = vmatpush1.bf16.msra.mxu0 %v700
    %1039 = vmatprep.subr.bf16.mxu0 %v709
    %1040 = vmatpush1.bf16.msra.mxu0 %v708
    %1041 = vmatprep.subr.bf16.mxu0 %v717
    %1042 = vmatpush1.bf16.msra.mxu0 %v716
    %1043 = vmatprep.subr.bf16.mxu0 %v725
    %1044 = vmatpush1.bf16.msra.mxu0 %v724
    %1045 = vmatprep.subr.bf16.mxu0 %v733
    %1046 = vmatpush1.bf16.msra.mxu0 %v732
    %1047 = vmatprep.subr.bf16.mxu0 %v741
    %1048 = vmatpush1.bf16.msra.mxu0 %v740
    %1049 = vmatprep.subr.bf16.mxu0 %v749
    %1050 = vmatpush1.bf16.msra.mxu0 %v748
    %1051 = vmatprep.subr.bf16.mxu0 %v757
    %1052 = vmatpush1.bf16.msra.mxu0 %v756
    %1053 = vmatprep.subr.bf16.mxu0 %v765
    %1054 = vmatpush1.bf16.msra.mxu0 %v764
    %1055 = vmatprep.subr.bf16.mxu0 %v773
    %1056 = vmatpush1.bf16.msra.mxu0 %v772
    %1057 = vmatprep.mubr.bf16.mxu0 %v91
    %1058 = vmatmul.mubr.bf16.gmra.mrb[0].mxu0 %v90
    %v1059 = vpop.f32.mrb[0].mxu0
    %v1060 = vadd.f32 %v249, %v1059
    %v1061 = vpop.f32.mrb[0].mxu0
    %v1062 = vadd.f32 %v253, %v1061
    %v1063 = vpop.f32.mrb[0].mxu0
    %v1064 = vpop.f32.mrb[0].mxu0
    %1065 = vdwg.mxu0
    %v1066 = vtanh.pop %v937
    %v1067 = vtanh.pop %v939
    %v1068 = vtanh.pop %v978
    %v1069 = vtanh.pop %v980
    %v1070 = vtanh.pop %v1019
    %v1071 = vtanh.pop %v1021
    %v1072 = vtanh.pop %v1060
    %v1073 = vtanh.pop %v1062
    %v1074 = vpack.c.bf16 %v1066, %v1066
    %v1075 = vpack.c.bf16 %v1067, %v1067
    %v1076 = vpack.c.bf16 %v1068, %v1068
    %v1077 = vpack.c.bf16 %v1069, %v1069
    %v1078 = vpack.c.bf16 %v1070, %v1070
    %v1079 = vpack.c.bf16 %v1071, %v1071
    %v1080 = vpack.c.bf16 %v1072, %v1072
    %v1081 = vpack.c.bf16 %v1073, %v1073
    %v1082 = vld [vmem:[#allocation4] sm:$0xff]
    %v1083 = vld [vmem:[#allocation4 + $0x8] sm:$0xff]
    %v1084 = vld [vmem:[#allocation4 + $0x10] sm:$0xff]
    %v1085 = vld [vmem:[#allocation4 + $0x18] sm:$0xff]
    %v1086 = vld [vmem:[#allocation4 + $0x20] sm:$0xff]
    %v1087 = vld [vmem:[#allocation4 + $0x28] sm:$0xff]
    %v1088 = vld [vmem:[#allocation4 + $0x30] sm:$0xff]
    %v1089 = vld [vmem:[#allocation4 + $0x38] sm:$0xff]
    %v1090 = vld [vmem:[#allocation4 + $0x40] sm:$0xff]
    %v1091 = vld [vmem:[#allocation4 + $0x48] sm:$0xff]
    %v1092 = vld [vmem:[#allocation4 + $0x50] sm:$0xff]
    %v1093 = vld [vmem:[#allocation4 + $0x58] sm:$0xff]
    %v1094 = vld [vmem:[#allocation4 + $0x60] sm:$0xff]
    %v1095 = vld [vmem:[#allocation4 + $0x68] sm:$0xff]
    %v1096 = vld [vmem:[#allocation4 + $0x70] sm:$0xff]
    %v1097 = vld [vmem:[#allocation4 + $0x78] sm:$0xff]
    %v1098 = vld [vmem:[#allocation4 + $0x80] sm:$0xff]
    %v1099 = vld [vmem:[#allocation4 + $0x88] sm:$0xff]
    %v1100 = vld [vmem:[#allocation4 + $0x90] sm:$0xff]
    %v1101 = vld [vmem:[#allocation4 + $0x98] sm:$0xff]
    %v1102 = vld [vmem:[#allocation4 + $0xa0] sm:$0xff]
    %v1103 = vld [vmem:[#allocation4 + $0xa8] sm:$0xff]
    %v1104 = vld [vmem:[#allocation4 + $0xb0] sm:$0xff]
    %v1105 = vld [vmem:[#allocation4 + $0xb8] sm:$0xff]
    %v1106 = vld [vmem:[#allocation4 + $0xc0] sm:$0xff]
    %v1107 = vld [vmem:[#allocation4 + $0xc8] sm:$0xff]
    %v1108 = vld [vmem:[#allocation4 + $0xd0] sm:$0xff]
    %v1109 = vld [vmem:[#allocation4 + $0xd8] sm:$0xff]
    %v1110 = vld [vmem:[#allocation4 + $0xe0] sm:$0xff]
    %v1111 = vld [vmem:[#allocation4 + $0xe8] sm:$0xff]
    %v1112 = vld [vmem:[#allocation4 + $0xf0] sm:$0xff]
    %v1113 = vld [vmem:[#allocation4 + $0xf8] sm:$0xff]
    %v1114 = vld [vmem:[#allocation4 + $0x100] sm:$0xff]
    %v1115 = vld [vmem:[#allocation4 + $0x108] sm:$0xff]
    %v1116 = vld [vmem:[#allocation4 + $0x110] sm:$0xff]
    %v1117 = vld [vmem:[#allocation4 + $0x118] sm:$0xff]
    %v1118 = vld [vmem:[#allocation4 + $0x120] sm:$0xff]
    %v1119 = vld [vmem:[#allocation4 + $0x128] sm:$0xff]
    %v1120 = vld [vmem:[#allocation4 + $0x130] sm:$0xff]
    %v1121 = vld [vmem:[#allocation4 + $0x138] sm:$0xff]
    %v1122 = vld [vmem:[#allocation4 + $0x140] sm:$0xff]
    %v1123 = vld [vmem:[#allocation4 + $0x148] sm:$0xff]
    %v1124 = vld [vmem:[#allocation4 + $0x150] sm:$0xff]
    %v1125 = vld [vmem:[#allocation4 + $0x158] sm:$0xff]
    %v1126 = vld [vmem:[#allocation4 + $0x160] sm:$0xff]
    %v1127 = vld [vmem:[#allocation4 + $0x168] sm:$0xff]
    %v1128 = vld [vmem:[#allocation4 + $0x170] sm:$0xff]
    %v1129 = vld [vmem:[#allocation4 + $0x178] sm:$0xff]
    %v1130 = vld [vmem:[#allocation4 + $0x180] sm:$0xff]
    %v1131 = vld [vmem:[#allocation4 + $0x188] sm:$0xff]
    %v1132 = vld [vmem:[#allocation4 + $0x190] sm:$0xff]
    %v1133 = vld [vmem:[#allocation4 + $0x198] sm:$0xff]
    %v1134 = vld [vmem:[#allocation4 + $0x1a0] sm:$0xff]
    %v1135 = vld [vmem:[#allocation4 + $0x1a8] sm:$0xff]
    %v1136 = vld [vmem:[#allocation4 + $0x1b0] sm:$0xff]
    %v1137 = vld [vmem:[#allocation4 + $0x1b8] sm:$0xff]
    %v1138 = vld [vmem:[#allocation4 + $0x1c0] sm:$0xff]
    %v1139 = vld [vmem:[#allocation4 + $0x1c8] sm:$0xff]
    %v1140 = vld [vmem:[#allocation4 + $0x1d0] sm:$0xff]
    %v1141 = vld [vmem:[#allocation4 + $0x1d8] sm:$0xff]
    %v1142 = vld [vmem:[#allocation4 + $0x1e0] sm:$0xff]
    %v1143 = vld [vmem:[#allocation4 + $0x1e8] sm:$0xff]
    %v1144 = vld [vmem:[#allocation4 + $0x1f0] sm:$0xff]
    %v1145 = vld [vmem:[#allocation4 + $0x1f8] sm:$0xff]
    %v1146 = vld [vmem:[#allocation4 + $0x200] sm:$0xff]
    %v1147 = vld [vmem:[#allocation4 + $0x208] sm:$0xff]
    %v1148 = vld [vmem:[#allocation4 + $0x210] sm:$0xff]
    %v1149 = vld [vmem:[#allocation4 + $0x218] sm:$0xff]
    %v1150 = vld [vmem:[#allocation4 + $0x220] sm:$0xff]
    %v1151 = vld [vmem:[#allocation4 + $0x228] sm:$0xff]
    %v1152 = vld [vmem:[#allocation4 + $0x230] sm:$0xff]
    %v1153 = vld [vmem:[#allocation4 + $0x238] sm:$0xff]
    %v1154 = vld [vmem:[#allocation4 + $0x240] sm:$0xff]
    %v1155 = vld [vmem:[#allocation4 + $0x248] sm:$0xff]
    %v1156 = vld [vmem:[#allocation4 + $0x250] sm:$0xff]
    %v1157 = vld [vmem:[#allocation4 + $0x258] sm:$0xff]
    %v1158 = vld [vmem:[#allocation4 + $0x260] sm:$0xff]
    %v1159 = vld [vmem:[#allocation4 + $0x268] sm:$0xff]
    %v1160 = vld [vmem:[#allocation4 + $0x270] sm:$0xff]
    %v1161 = vld [vmem:[#allocation4 + $0x278] sm:$0xff]
    %v1162 = vld [vmem:[#allocation4 + $0x280] sm:$0xff]
    %v1163 = vld [vmem:[#allocation4 + $0x288] sm:$0xff]
    %v1164 = vld [vmem:[#allocation4 + $0x290] sm:$0xff]
    %v1165 = vld [vmem:[#allocation4 + $0x298] sm:$0xff]
    %v1166 = vld [vmem:[#allocation4 + $0x2a0] sm:$0xff]
    %v1167 = vld [vmem:[#allocation4 + $0x2a8] sm:$0xff]
    %v1168 = vld [vmem:[#allocation4 + $0x2b0] sm:$0xff]
    %v1169 = vld [vmem:[#allocation4 + $0x2b8] sm:$0xff]
    %v1170 = vld [vmem:[#allocation4 + $0x2c0] sm:$0xff]
    %v1171 = vld [vmem:[#allocation4 + $0x2c8] sm:$0xff]
    %v1172 = vld [vmem:[#allocation4 + $0x2d0] sm:$0xff]
    %v1173 = vld [vmem:[#allocation4 + $0x2d8] sm:$0xff]
    %v1174 = vld [vmem:[#allocation4 + $0x2e0] sm:$0xff]
    %v1175 = vld [vmem:[#allocation4 + $0x2e8] sm:$0xff]
    %v1176 = vld [vmem:[#allocation4 + $0x2f0] sm:$0xff]
    %v1177 = vld [vmem:[#allocation4 + $0x2f8] sm:$0xff]
    %v1178 = vld [vmem:[#allocation4 + $0x300] sm:$0xff]
    %v1179 = vld [vmem:[#allocation4 + $0x308] sm:$0xff]
    %v1180 = vld [vmem:[#allocation4 + $0x310] sm:$0xff]
    %v1181 = vld [vmem:[#allocation4 + $0x318] sm:$0xff]
    %v1182 = vld [vmem:[#allocation4 + $0x320] sm:$0xff]
    %v1183 = vld [vmem:[#allocation4 + $0x328] sm:$0xff]
    %v1184 = vld [vmem:[#allocation4 + $0x330] sm:$0xff]
    %v1185 = vld [vmem:[#allocation4 + $0x338] sm:$0xff]
    %v1186 = vld [vmem:[#allocation4 + $0x340] sm:$0xff]
    %v1187 = vld [vmem:[#allocation4 + $0x348] sm:$0xff]
    %v1188 = vld [vmem:[#allocation4 + $0x350] sm:$0xff]
    %v1189 = vld [vmem:[#allocation4 + $0x358] sm:$0xff]
    %v1190 = vld [vmem:[#allocation4 + $0x360] sm:$0xff]
    %v1191 = vld [vmem:[#allocation4 + $0x368] sm:$0xff]
    %v1192 = vld [vmem:[#allocation4 + $0x370] sm:$0xff]
    %v1193 = vld [vmem:[#allocation4 + $0x378] sm:$0xff]
    %v1194 = vld [vmem:[#allocation4 + $0x380] sm:$0xff]
    %v1195 = vld [vmem:[#allocation4 + $0x388] sm:$0xff]
    %v1196 = vld [vmem:[#allocation4 + $0x390] sm:$0xff]
    %v1197 = vld [vmem:[#allocation4 + $0x398] sm:$0xff]
    %v1198 = vld [vmem:[#allocation4 + $0x3a0] sm:$0xff]
    %v1199 = vld [vmem:[#allocation4 + $0x3a8] sm:$0xff]
    %v1200 = vld [vmem:[#allocation4 + $0x3b0] sm:$0xff]
    %v1201 = vld [vmem:[#allocation4 + $0x3b8] sm:$0xff]
    %v1202 = vld [vmem:[#allocation4 + $0x3c0] sm:$0xff]
    %v1203 = vld [vmem:[#allocation4 + $0x3c8] sm:$0xff]
    %v1204 = vld [vmem:[#allocation4 + $0x3d0] sm:$0xff]
    %v1205 = vld [vmem:[#allocation4 + $0x3d8] sm:$0xff]
    %v1206 = vld [vmem:[#allocation4 + $0x3e0] sm:$0xff]
    %v1207 = vld [vmem:[#allocation4 + $0x3e8] sm:$0xff]
    %v1208 = vld [vmem:[#allocation4 + $0x3f0] sm:$0xff]
    %v1209 = vld [vmem:[#allocation4 + $0x3f8] sm:$0xff]
    %v1210 = vld [vmem:[#allocation4 + $0x400] sm:$0xff]
    %v1211 = vld [vmem:[#allocation4 + $0x408] sm:$0xff]
    %v1212 = vld [vmem:[#allocation4 + $0x410] sm:$0xff]
    %v1213 = vld [vmem:[#allocation4 + $0x418] sm:$0xff]
    %v1214 = vld [vmem:[#allocation4 + $0x420] sm:$0xff]
    %v1215 = vld [vmem:[#allocation4 + $0x428] sm:$0xff]
    %v1216 = vld [vmem:[#allocation4 + $0x430] sm:$0xff]
    %v1217 = vld [vmem:[#allocation4 + $0x438] sm:$0xff]
    %v1218 = vld [vmem:[#allocation4 + $0x440] sm:$0xff]
    %v1219 = vld [vmem:[#allocation4 + $0x448] sm:$0xff]
    %v1220 = vld [vmem:[#allocation4 + $0x450] sm:$0xff]
    %v1221 = vld [vmem:[#allocation4 + $0x458] sm:$0xff]
    %v1222 = vld [vmem:[#allocation4 + $0x460] sm:$0xff]
    %v1223 = vld [vmem:[#allocation4 + $0x468] sm:$0xff]
    %v1224 = vld [vmem:[#allocation4 + $0x470] sm:$0xff]
    %v1225 = vld [vmem:[#allocation4 + $0x478] sm:$0xff]
    %v1226 = vld [vmem:[#allocation4 + $0x480] sm:$0xff]
    %v1227 = vld [vmem:[#allocation4 + $0x488] sm:$0xff]
    %v1228 = vld [vmem:[#allocation4 + $0x490] sm:$0xff]
    %v1229 = vld [vmem:[#allocation4 + $0x498] sm:$0xff]
    %v1230 = vld [vmem:[#allocation4 + $0x4a0] sm:$0xff]
    %v1231 = vld [vmem:[#allocation4 + $0x4a8] sm:$0xff]
    %v1232 = vld [vmem:[#allocation4 + $0x4b0] sm:$0xff]
    %v1233 = vld [vmem:[#allocation4 + $0x4b8] sm:$0xff]
    %v1234 = vld [vmem:[#allocation4 + $0x4c0] sm:$0xff]
    %v1235 = vld [vmem:[#allocation4 + $0x4c8] sm:$0xff]
    %v1236 = vld [vmem:[#allocation4 + $0x4d0] sm:$0xff]
    %v1237 = vld [vmem:[#allocation4 + $0x4d8] sm:$0xff]
    %v1238 = vld [vmem:[#allocation4 + $0x4e0] sm:$0xff]
    %v1239 = vld [vmem:[#allocation4 + $0x4e8] sm:$0xff]
    %v1240 = vld [vmem:[#allocation4 + $0x4f0] sm:$0xff]
    %v1241 = vld [vmem:[#allocation4 + $0x4f8] sm:$0xff]
    %v1242 = vld [vmem:[#allocation4 + $0x500] sm:$0xff]
    %v1243 = vld [vmem:[#allocation4 + $0x508] sm:$0xff]
    %v1244 = vld [vmem:[#allocation4 + $0x510] sm:$0xff]
    %v1245 = vld [vmem:[#allocation4 + $0x518] sm:$0xff]
    %v1246 = vld [vmem:[#allocation4 + $0x520] sm:$0xff]
    %v1247 = vld [vmem:[#allocation4 + $0x528] sm:$0xff]
    %v1248 = vld [vmem:[#allocation4 + $0x530] sm:$0xff]
    %v1249 = vld [vmem:[#allocation4 + $0x538] sm:$0xff]
    %v1250 = vld [vmem:[#allocation4 + $0x540] sm:$0xff]
    %v1251 = vld [vmem:[#allocation4 + $0x548] sm:$0xff]
    %v1252 = vld [vmem:[#allocation4 + $0x550] sm:$0xff]
    %v1253 = vld [vmem:[#allocation4 + $0x558] sm:$0xff]
    %v1254 = vld [vmem:[#allocation4 + $0x560] sm:$0xff]
    %v1255 = vld [vmem:[#allocation4 + $0x568] sm:$0xff]
    %v1256 = vld [vmem:[#allocation4 + $0x570] sm:$0xff]
    %v1257 = vld [vmem:[#allocation4 + $0x578] sm:$0xff]
    %v1258 = vld [vmem:[#allocation4 + $0x580] sm:$0xff]
    %v1259 = vld [vmem:[#allocation4 + $0x588] sm:$0xff]
    %v1260 = vld [vmem:[#allocation4 + $0x590] sm:$0xff]
    %v1261 = vld [vmem:[#allocation4 + $0x598] sm:$0xff]
    %v1262 = vld [vmem:[#allocation4 + $0x5a0] sm:$0xff]
    %v1263 = vld [vmem:[#allocation4 + $0x5a8] sm:$0xff]
    %v1264 = vld [vmem:[#allocation4 + $0x5b0] sm:$0xff]
    %v1265 = vld [vmem:[#allocation4 + $0x5b8] sm:$0xff]
    %v1266 = vld [vmem:[#allocation4 + $0x5c0] sm:$0xff]
    %v1267 = vld [vmem:[#allocation4 + $0x5c8] sm:$0xff]
    %v1268 = vld [vmem:[#allocation4 + $0x5d0] sm:$0xff]
    %v1269 = vld [vmem:[#allocation4 + $0x5d8] sm:$0xff]
    %v1270 = vld [vmem:[#allocation4 + $0x5e0] sm:$0xff]
    %v1271 = vld [vmem:[#allocation4 + $0x5e8] sm:$0xff]
    %v1272 = vld [vmem:[#allocation4 + $0x5f0] sm:$0xff]
    %v1273 = vld [vmem:[#allocation4 + $0x5f8] sm:$0xff]
    %v1274 = vld [vmem:[#allocation4 + $0x600] sm:$0xff]
    %v1275 = vld [vmem:[#allocation4 + $0x608] sm:$0xff]
    %v1276 = vld [vmem:[#allocation4 + $0x610] sm:$0xff]
    %v1277 = vld [vmem:[#allocation4 + $0x618] sm:$0xff]
    %v1278 = vld [vmem:[#allocation4 + $0x620] sm:$0xff]
    %v1279 = vld [vmem:[#allocation4 + $0x628] sm:$0xff]
    %v1280 = vld [vmem:[#allocation4 + $0x630] sm:$0xff]
    %v1281 = vld [vmem:[#allocation4 + $0x638] sm:$0xff]
    %v1282 = vld [vmem:[#allocation4 + $0x640] sm:$0xff]
    %v1283 = vld [vmem:[#allocation4 + $0x648] sm:$0xff]
    %v1284 = vld [vmem:[#allocation4 + $0x650] sm:$0xff]
    %v1285 = vld [vmem:[#allocation4 + $0x658] sm:$0xff]
    %v1286 = vld [vmem:[#allocation4 + $0x660] sm:$0xff]
    %v1287 = vld [vmem:[#allocation4 + $0x668] sm:$0xff]
    %v1288 = vld [vmem:[#allocation4 + $0x670] sm:$0xff]
    %v1289 = vld [vmem:[#allocation4 + $0x678] sm:$0xff]
    %v1290 = vld [vmem:[#allocation4 + $0x680] sm:$0xff]
    %v1291 = vld [vmem:[#allocation4 + $0x688] sm:$0xff]
    %v1292 = vld [vmem:[#allocation4 + $0x690] sm:$0xff]
    %v1293 = vld [vmem:[#allocation4 + $0x698] sm:$0xff]
    %v1294 = vld [vmem:[#allocation4 + $0x6a0] sm:$0xff]
    %v1295 = vld [vmem:[#allocation4 + $0x6a8] sm:$0xff]
    %v1296 = vld [vmem:[#allocation4 + $0x6b0] sm:$0xff]
    %v1297 = vld [vmem:[#allocation4 + $0x6b8] sm:$0xff]
    %v1298 = vld [vmem:[#allocation4 + $0x6c0] sm:$0xff]
    %v1299 = vld [vmem:[#allocation4 + $0x6c8] sm:$0xff]
    %v1300 = vld [vmem:[#allocation4 + $0x6d0] sm:$0xff]
    %v1301 = vld [vmem:[#allocation4 + $0x6d8] sm:$0xff]
    %v1302 = vld [vmem:[#allocation4 + $0x6e0] sm:$0xff]
    %v1303 = vld [vmem:[#allocation4 + $0x6e8] sm:$0xff]
    %v1304 = vld [vmem:[#allocation4 + $0x6f0] sm:$0xff]
    %v1305 = vld [vmem:[#allocation4 + $0x6f8] sm:$0xff]
    %v1306 = vld [vmem:[#allocation4 + $0x700] sm:$0xff]
    %v1307 = vld [vmem:[#allocation4 + $0x708] sm:$0xff]
    %v1308 = vld [vmem:[#allocation4 + $0x710] sm:$0xff]
    %v1309 = vld [vmem:[#allocation4 + $0x718] sm:$0xff]
    %v1310 = vld [vmem:[#allocation4 + $0x720] sm:$0xff]
    %v1311 = vld [vmem:[#allocation4 + $0x728] sm:$0xff]
    %v1312 = vld [vmem:[#allocation4 + $0x730] sm:$0xff]
    %v1313 = vld [vmem:[#allocation4 + $0x738] sm:$0xff]
    %v1314 = vld [vmem:[#allocation4 + $0x740] sm:$0xff]
    %v1315 = vld [vmem:[#allocation4 + $0x748] sm:$0xff]
    %v1316 = vld [vmem:[#allocation4 + $0x750] sm:$0xff]
    %v1317 = vld [vmem:[#allocation4 + $0x758] sm:$0xff]
    %v1318 = vld [vmem:[#allocation4 + $0x760] sm:$0xff]
    %v1319 = vld [vmem:[#allocation4 + $0x768] sm:$0xff]
    %v1320 = vld [vmem:[#allocation4 + $0x770] sm:$0xff]
    %v1321 = vld [vmem:[#allocation4 + $0x778] sm:$0xff]
    %v1322 = vld [vmem:[#allocation4 + $0x780] sm:$0xff]
    %v1323 = vld [vmem:[#allocation4 + $0x788] sm:$0xff]
    %v1324 = vld [vmem:[#allocation4 + $0x790] sm:$0xff]
    %v1325 = vld [vmem:[#allocation4 + $0x798] sm:$0xff]
    %v1326 = vld [vmem:[#allocation4 + $0x7a0] sm:$0xff]
    %v1327 = vld [vmem:[#allocation4 + $0x7a8] sm:$0xff]
    %v1328 = vld [vmem:[#allocation4 + $0x7b0] sm:$0xff]
    %v1329 = vld [vmem:[#allocation4 + $0x7b8] sm:$0xff]
    %v1330 = vld [vmem:[#allocation4 + $0x7c0] sm:$0xff]
    %v1331 = vld [vmem:[#allocation4 + $0x7c8] sm:$0xff]
    %v1332 = vld [vmem:[#allocation4 + $0x7d0] sm:$0xff]
    %v1333 = vld [vmem:[#allocation4 + $0x7d8] sm:$0xff]
    %v1334 = vld [vmem:[#allocation4 + $0x7e0] sm:$0xff]
    %v1335 = vld [vmem:[#allocation4 + $0x7e8] sm:$0xff]
    %v1336 = vld [vmem:[#allocation4 + $0x7f0] sm:$0xff]
    %v1337 = vld [vmem:[#allocation4 + $0x7f8] sm:$0xff]
    %v1338 = vld [vmem:[%s5] sm:$0xf]
    %v1340 = vlaneseq
    %v1341 = vshrl.u32 %v1340, 7
    %v1342 = vsub.s32 0, %v1341
    %v1343 = vrot.slane %v1338, %v1342
    %v1344 = vlaneseq
    %v1345 = vshrl.u32 %v1344, 7
    %v1346 = vsub.s32 1, %v1345
    %v1347 = vrot.slane %v1338, %v1346
    %v1348 = vlaneseq
    %v1349 = vshrl.u32 %v1348, 7
    %v1350 = vsub.s32 2, %v1349
    %v1351 = vrot.slane %v1338, %v1350
    %v1352 = vlaneseq
    %v1353 = vshrl.u32 %v1352, 7
    %v1354 = vsub.s32 3, %v1353
    %v1355 = vrot.slane %v1338, %v1354
    %v1616 = vunpack.c.l.b16 %v1082
    %v1617 = vunpack.c.h.b16 %v1082
    %v1618 = vunpack.c.l.b16 %v1083
    %v1619 = vunpack.c.h.b16 %v1083
    %v1620 = vunpack.c.l.b16 %v1084
    %v1621 = vunpack.c.h.b16 %v1084
    %v1622 = vunpack.c.l.b16 %v1085
    %v1623 = vunpack.c.h.b16 %v1085
    %v1624 = vunpack.c.l.b16 %v1086
    %v1625 = vunpack.c.h.b16 %v1086
    %v1626 = vunpack.c.l.b16 %v1087
    %v1627 = vunpack.c.h.b16 %v1087
    %v1628 = vunpack.c.l.b16 %v1088
    %v1629 = vunpack.c.h.b16 %v1088
    %v1630 = vunpack.c.l.b16 %v1089
    %v1631 = vunpack.c.h.b16 %v1089
    %v1632 = vunpack.c.l.b16 %v1090
    %v1633 = vunpack.c.h.b16 %v1090
    %v1634 = vunpack.c.l.b16 %v1091
    %v1635 = vunpack.c.h.b16 %v1091
    %v1636 = vunpack.c.l.b16 %v1092
    %v1637 = vunpack.c.h.b16 %v1092
    %v1638 = vunpack.c.l.b16 %v1093
    %v1639 = vunpack.c.h.b16 %v1093
    %v1640 = vunpack.c.l.b16 %v1094
    %v1641 = vunpack.c.h.b16 %v1094
    %v1642 = vunpack.c.l.b16 %v1095
    %v1643 = vunpack.c.h.b16 %v1095
    %v1644 = vunpack.c.l.b16 %v1096
    %v1645 = vunpack.c.h.b16 %v1096
    %v1646 = vunpack.c.l.b16 %v1097
    %v1647 = vunpack.c.h.b16 %v1097
    %v1648 = vunpack.c.l.b16 %v1098
    %v1649 = vunpack.c.h.b16 %v1098
    %v1650 = vunpack.c.l.b16 %v1099
    %v1651 = vunpack.c.h.b16 %v1099
    %v1652 = vunpack.c.l.b16 %v1100
    %v1653 = vunpack.c.h.b16 %v1100
    %v1654 = vunpack.c.l.b16 %v1101
    %v1655 = vunpack.c.h.b16 %v1101
    %v1656 = vunpack.c.l.b16 %v1102
    %v1657 = vunpack.c.h.b16 %v1102
    %v1658 = vunpack.c.l.b16 %v1103
    %v1659 = vunpack.c.h.b16 %v1103
    %v1660 = vunpack.c.l.b16 %v1104
    %v1661 = vunpack.c.h.b16 %v1104
    %v1662 = vunpack.c.l.b16 %v1105
    %v1663 = vunpack.c.h.b16 %v1105
    %v1664 = vunpack.c.l.b16 %v1106
    %v1665 = vunpack.c.h.b16 %v1106
    %v1666 = vunpack.c.l.b16 %v1107
    %v1667 = vunpack.c.h.b16 %v1107
    %v1668 = vunpack.c.l.b16 %v1108
    %v1669 = vunpack.c.h.b16 %v1108
    %v1670 = vunpack.c.l.b16 %v1109
    %v1671 = vunpack.c.h.b16 %v1109
    %v1672 = vunpack.c.l.b16 %v1110
    %v1673 = vunpack.c.h.b16 %v1110
    %v1674 = vunpack.c.l.b16 %v1111
    %v1675 = vunpack.c.h.b16 %v1111
    %v1676 = vunpack.c.l.b16 %v1112
    %v1677 = vunpack.c.h.b16 %v1112
    %v1678 = vunpack.c.l.b16 %v1113
    %v1679 = vunpack.c.h.b16 %v1113
    %v1680 = vunpack.c.l.b16 %v1114
    %v1681 = vunpack.c.h.b16 %v1114
    %v1682 = vunpack.c.l.b16 %v1115
    %v1683 = vunpack.c.h.b16 %v1115
    %v1684 = vunpack.c.l.b16 %v1116
    %v1685 = vunpack.c.h.b16 %v1116
    %v1686 = vunpack.c.l.b16 %v1117
    %v1687 = vunpack.c.h.b16 %v1117
    %v1688 = vunpack.c.l.b16 %v1118
    %v1689 = vunpack.c.h.b16 %v1118
    %v1690 = vunpack.c.l.b16 %v1119
    %v1691 = vunpack.c.h.b16 %v1119
    %v1692 = vunpack.c.l.b16 %v1120
    %v1693 = vunpack.c.h.b16 %v1120
    %v1694 = vunpack.c.l.b16 %v1121
    %v1695 = vunpack.c.h.b16 %v1121
    %v1696 = vunpack.c.l.b16 %v1122
    %v1697 = vunpack.c.h.b16 %v1122
    %v1698 = vunpack.c.l.b16 %v1123
    %v1699 = vunpack.c.h.b16 %v1123
    %v1700 = vunpack.c.l.b16 %v1124
    %v1701 = vunpack.c.h.b16 %v1124
    %v1702 = vunpack.c.l.b16 %v1125
    %v1703 = vunpack.c.h.b16 %v1125
    %v1704 = vunpack.c.l.b16 %v1126
    %v1705 = vunpack.c.h.b16 %v1126
    %v1706 = vunpack.c.l.b16 %v1127
    %v1707 = vunpack.c.h.b16 %v1127
    %v1708 = vunpack.c.l.b16 %v1128
    %v1709 = vunpack.c.h.b16 %v1128
    %v1710 = vunpack.c.l.b16 %v1129
    %v1711 = vunpack.c.h.b16 %v1129
    %v1712 = vunpack.c.l.b16 %v1130
    %v1713 = vunpack.c.h.b16 %v1130
    %v1714 = vunpack.c.l.b16 %v1131
    %v1715 = vunpack.c.h.b16 %v1131
    %v1716 = vunpack.c.l.b16 %v1132
    %v1717 = vunpack.c.h.b16 %v1132
    %v1718 = vunpack.c.l.b16 %v1133
    %v1719 = vunpack.c.h.b16 %v1133
    %v1720 = vunpack.c.l.b16 %v1134
    %v1721 = vunpack.c.h.b16 %v1134
    %v1722 = vunpack.c.l.b16 %v1135
    %v1723 = vunpack.c.h.b16 %v1135
    %v1724 = vunpack.c.l.b16 %v1136
    %v1725 = vunpack.c.h.b16 %v1136
    %v1726 = vunpack.c.l.b16 %v1137
    %v1727 = vunpack.c.h.b16 %v1137
    %v1728 = vunpack.c.l.b16 %v1138
    %v1729 = vunpack.c.h.b16 %v1138
    %v1730 = vunpack.c.l.b16 %v1139
    %v1731 = vunpack.c.h.b16 %v1139
    %v1732 = vunpack.c.l.b16 %v1140
    %v1733 = vunpack.c.h.b16 %v1140
    %v1734 = vunpack.c.l.b16 %v1141
    %v1735 = vunpack.c.h.b16 %v1141
    %v1736 = vunpack.c.l.b16 %v1142
    %v1737 = vunpack.c.h.b16 %v1142
    %v1738 = vunpack.c.l.b16 %v1143
    %v1739 = vunpack.c.h.b16 %v1143
    %v1740 = vunpack.c.l.b16 %v1144
    %v1741 = vunpack.c.h.b16 %v1144
    %v1742 = vunpack.c.l.b16 %v1145
    %v1743 = vunpack.c.h.b16 %v1145
    %v1744 = vunpack.c.l.b16 %v1146
    %v1745 = vunpack.c.h.b16 %v1146
    %v1746 = vunpack.c.l.b16 %v1147
    %v1747 = vunpack.c.h.b16 %v1147
    %v1748 = vunpack.c.l.b16 %v1148
    %v1749 = vunpack.c.h.b16 %v1148
    %v1750 = vunpack.c.l.b16 %v1149
    %v1751 = vunpack.c.h.b16 %v1149
    %v1752 = vunpack.c.l.b16 %v1150
    %v1753 = vunpack.c.h.b16 %v1150
    %v1754 = vunpack.c.l.b16 %v1151
    %v1755 = vunpack.c.h.b16 %v1151
    %v1756 = vunpack.c.l.b16 %v1152
    %v1757 = vunpack.c.h.b16 %v1152
    %v1758 = vunpack.c.l.b16 %v1153
    %v1759 = vunpack.c.h.b16 %v1153
    %v1760 = vunpack.c.l.b16 %v1154
    %v1761 = vunpack.c.h.b16 %v1154
    %v1762 = vunpack.c.l.b16 %v1155
    %v1763 = vunpack.c.h.b16 %v1155
    %v1764 = vunpack.c.l.b16 %v1156
    %v1765 = vunpack.c.h.b16 %v1156
    %v1766 = vunpack.c.l.b16 %v1157
    %v1767 = vunpack.c.h.b16 %v1157
    %v1768 = vunpack.c.l.b16 %v1158
    %v1769 = vunpack.c.h.b16 %v1158
    %v1770 = vunpack.c.l.b16 %v1159
    %v1771 = vunpack.c.h.b16 %v1159
    %v1772 = vunpack.c.l.b16 %v1160
    %v1773 = vunpack.c.h.b16 %v1160
    %v1774 = vunpack.c.l.b16 %v1161
    %v1775 = vunpack.c.h.b16 %v1161
    %v1776 = vunpack.c.l.b16 %v1162
    %v1777 = vunpack.c.h.b16 %v1162
    %v1778 = vunpack.c.l.b16 %v1163
    %v1779 = vunpack.c.h.b16 %v1163
    %v1780 = vunpack.c.l.b16 %v1164
    %v1781 = vunpack.c.h.b16 %v1164
    %v1782 = vunpack.c.l.b16 %v1165
    %v1783 = vunpack.c.h.b16 %v1165
    %v1784 = vunpack.c.l.b16 %v1166
    %v1785 = vunpack.c.h.b16 %v1166
    %v1786 = vunpack.c.l.b16 %v1167
    %v1787 = vunpack.c.h.b16 %v1167
    %v1788 = vunpack.c.l.b16 %v1168
    %v1789 = vunpack.c.h.b16 %v1168
    %v1790 = vunpack.c.l.b16 %v1169
    %v1791 = vunpack.c.h.b16 %v1169
    %v1792 = vunpack.c.l.b16 %v1170
    %v1793 = vunpack.c.h.b16 %v1170
    %v1794 = vunpack.c.l.b16 %v1171
    %v1795 = vunpack.c.h.b16 %v1171
    %v1796 = vunpack.c.l.b16 %v1172
    %v1797 = vunpack.c.h.b16 %v1172
    %v1798 = vunpack.c.l.b16 %v1173
    %v1799 = vunpack.c.h.b16 %v1173
    %v1800 = vunpack.c.l.b16 %v1174
    %v1801 = vunpack.c.h.b16 %v1174
    %v1802 = vunpack.c.l.b16 %v1175
    %v1803 = vunpack.c.h.b16 %v1175
    %v1804 = vunpack.c.l.b16 %v1176
    %v1805 = vunpack.c.h.b16 %v1176
    %v1806 = vunpack.c.l.b16 %v1177
    %v1807 = vunpack.c.h.b16 %v1177
    %v1808 = vunpack.c.l.b16 %v1178
    %v1809 = vunpack.c.h.b16 %v1178
    %v1810 = vunpack.c.l.b16 %v1179
    %v1811 = vunpack.c.h.b16 %v1179
    %v1812 = vunpack.c.l.b16 %v1180
    %v1813 = vunpack.c.h.b16 %v1180
    %v1814 = vunpack.c.l.b16 %v1181
    %v1815 = vunpack.c.h.b16 %v1181
    %v1816 = vunpack.c.l.b16 %v1182
    %v1817 = vunpack.c.h.b16 %v1182
    %v1818 = vunpack.c.l.b16 %v1183
    %v1819 = vunpack.c.h.b16 %v1183
    %v1820 = vunpack.c.l.b16 %v1184
    %v1821 = vunpack.c.h.b16 %v1184
    %v1822 = vunpack.c.l.b16 %v1185
    %v1823 = vunpack.c.h.b16 %v1185
    %v1824 = vunpack.c.l.b16 %v1186
    %v1825 = vunpack.c.h.b16 %v1186
    %v1826 = vunpack.c.l.b16 %v1187
    %v1827 = vunpack.c.h.b16 %v1187
    %v1828 = vunpack.c.l.b16 %v1188
    %v1829 = vunpack.c.h.b16 %v1188
    %v1830 = vunpack.c.l.b16 %v1189
    %v1831 = vunpack.c.h.b16 %v1189
    %v1832 = vunpack.c.l.b16 %v1190
    %v1833 = vunpack.c.h.b16 %v1190
    %v1834 = vunpack.c.l.b16 %v1191
    %v1835 = vunpack.c.h.b16 %v1191
    %v1836 = vunpack.c.l.b16 %v1192
    %v1837 = vunpack.c.h.b16 %v1192
    %v1838 = vunpack.c.l.b16 %v1193
    %v1839 = vunpack.c.h.b16 %v1193
    %v1840 = vunpack.c.l.b16 %v1194
    %v1841 = vunpack.c.h.b16 %v1194
    %v1842 = vunpack.c.l.b16 %v1195
    %v1843 = vunpack.c.h.b16 %v1195
    %v1844 = vunpack.c.l.b16 %v1196
    %v1845 = vunpack.c.h.b16 %v1196
    %v1846 = vunpack.c.l.b16 %v1197
    %v1847 = vunpack.c.h.b16 %v1197
    %v1848 = vunpack.c.l.b16 %v1198
    %v1849 = vunpack.c.h.b16 %v1198
    %v1850 = vunpack.c.l.b16 %v1199
    %v1851 = vunpack.c.h.b16 %v1199
    %v1852 = vunpack.c.l.b16 %v1200
    %v1853 = vunpack.c.h.b16 %v1200
    %v1854 = vunpack.c.l.b16 %v1201
    %v1855 = vunpack.c.h.b16 %v1201
    %v1856 = vunpack.c.l.b16 %v1202
    %v1857 = vunpack.c.h.b16 %v1202
    %v1858 = vunpack.c.l.b16 %v1203
    %v1859 = vunpack.c.h.b16 %v1203
    %v1860 = vunpack.c.l.b16 %v1204
    %v1861 = vunpack.c.h.b16 %v1204
    %v1862 = vunpack.c.l.b16 %v1205
    %v1863 = vunpack.c.h.b16 %v1205
    %v1864 = vunpack.c.l.b16 %v1206
    %v1865 = vunpack.c.h.b16 %v1206
    %v1866 = vunpack.c.l.b16 %v1207
    %v1867 = vunpack.c.h.b16 %v1207
    %v1868 = vunpack.c.l.b16 %v1208
    %v1869 = vunpack.c.h.b16 %v1208
    %v1870 = vunpack.c.l.b16 %v1209
    %v1871 = vunpack.c.h.b16 %v1209
    %v1872 = vunpack.c.l.b16 %v1210
    %v1873 = vunpack.c.h.b16 %v1210
    %v1874 = vunpack.c.l.b16 %v1211
    %v1875 = vunpack.c.h.b16 %v1211
    %v1876 = vunpack.c.l.b16 %v1212
    %v1877 = vunpack.c.h.b16 %v1212
    %v1878 = vunpack.c.l.b16 %v1213
    %v1879 = vunpack.c.h.b16 %v1213
    %v1880 = vunpack.c.l.b16 %v1214
    %v1881 = vunpack.c.h.b16 %v1214
    %v1882 = vunpack.c.l.b16 %v1215
    %v1883 = vunpack.c.h.b16 %v1215
    %v1884 = vunpack.c.l.b16 %v1216
    %v1885 = vunpack.c.h.b16 %v1216
    %v1886 = vunpack.c.l.b16 %v1217
    %v1887 = vunpack.c.h.b16 %v1217
    %v1888 = vunpack.c.l.b16 %v1218
    %v1889 = vunpack.c.h.b16 %v1218
    %v1890 = vunpack.c.l.b16 %v1219
    %v1891 = vunpack.c.h.b16 %v1219
    %v1892 = vunpack.c.l.b16 %v1220
    %v1893 = vunpack.c.h.b16 %v1220
    %v1894 = vunpack.c.l.b16 %v1221
    %v1895 = vunpack.c.h.b16 %v1221
    %v1896 = vunpack.c.l.b16 %v1222
    %v1897 = vunpack.c.h.b16 %v1222
    %v1898 = vunpack.c.l.b16 %v1223
    %v1899 = vunpack.c.h.b16 %v1223
    %v1900 = vunpack.c.l.b16 %v1224
    %v1901 = vunpack.c.h.b16 %v1224
    %v1902 = vunpack.c.l.b16 %v1225
    %v1903 = vunpack.c.h.b16 %v1225
    %v1904 = vunpack.c.l.b16 %v1226
    %v1905 = vunpack.c.h.b16 %v1226
    %v1906 = vunpack.c.l.b16 %v1227
    %v1907 = vunpack.c.h.b16 %v1227
    %v1908 = vunpack.c.l.b16 %v1228
    %v1909 = vunpack.c.h.b16 %v1228
    %v1910 = vunpack.c.l.b16 %v1229
    %v1911 = vunpack.c.h.b16 %v1229
    %v1912 = vunpack.c.l.b16 %v1230
    %v1913 = vunpack.c.h.b16 %v1230
    %v1914 = vunpack.c.l.b16 %v1231
    %v1915 = vunpack.c.h.b16 %v1231
    %v1916 = vunpack.c.l.b16 %v1232
    %v1917 = vunpack.c.h.b16 %v1232
    %v1918 = vunpack.c.l.b16 %v1233
    %v1919 = vunpack.c.h.b16 %v1233
    %v1920 = vunpack.c.l.b16 %v1234
    %v1921 = vunpack.c.h.b16 %v1234
    %v1922 = vunpack.c.l.b16 %v1235
    %v1923 = vunpack.c.h.b16 %v1235
    %v1924 = vunpack.c.l.b16 %v1236
    %v1925 = vunpack.c.h.b16 %v1236
    %v1926 = vunpack.c.l.b16 %v1237
    %v1927 = vunpack.c.h.b16 %v1237
    %v1928 = vunpack.c.l.b16 %v1238
    %v1929 = vunpack.c.h.b16 %v1238
    %v1930 = vunpack.c.l.b16 %v1239
    %v1931 = vunpack.c.h.b16 %v1239
    %v1932 = vunpack.c.l.b16 %v1240
    %v1933 = vunpack.c.h.b16 %v1240
    %v1934 = vunpack.c.l.b16 %v1241
    %v1935 = vunpack.c.h.b16 %v1241
    %v1936 = vunpack.c.l.b16 %v1242
    %v1937 = vunpack.c.h.b16 %v1242
    %v1938 = vunpack.c.l.b16 %v1243
    %v1939 = vunpack.c.h.b16 %v1243
    %v1940 = vunpack.c.l.b16 %v1244
    %v1941 = vunpack.c.h.b16 %v1244
    %v1942 = vunpack.c.l.b16 %v1245
    %v1943 = vunpack.c.h.b16 %v1245
    %v1944 = vunpack.c.l.b16 %v1246
    %v1945 = vunpack.c.h.b16 %v1246
    %v1946 = vunpack.c.l.b16 %v1247
    %v1947 = vunpack.c.h.b16 %v1247
    %v1948 = vunpack.c.l.b16 %v1248
    %v1949 = vunpack.c.h.b16 %v1248
    %v1950 = vunpack.c.l.b16 %v1249
    %v1951 = vunpack.c.h.b16 %v1249
    %v1952 = vunpack.c.l.b16 %v1250
    %v1953 = vunpack.c.h.b16 %v1250
    %v1954 = vunpack.c.l.b16 %v1251
    %v1955 = vunpack.c.h.b16 %v1251
    %v1956 = vunpack.c.l.b16 %v1252
    %v1957 = vunpack.c.h.b16 %v1252
    %v1958 = vunpack.c.l.b16 %v1253
    %v1959 = vunpack.c.h.b16 %v1253
    %v1960 = vunpack.c.l.b16 %v1254
    %v1961 = vunpack.c.h.b16 %v1254
    %v1962 = vunpack.c.l.b16 %v1255
    %v1963 = vunpack.c.h.b16 %v1255
    %v1964 = vunpack.c.l.b16 %v1256
    %v1965 = vunpack.c.h.b16 %v1256
    %v1966 = vunpack.c.l.b16 %v1257
    %v1967 = vunpack.c.h.b16 %v1257
    %v1968 = vunpack.c.l.b16 %v1258
    %v1969 = vunpack.c.h.b16 %v1258
    %v1970 = vunpack.c.l.b16 %v1259
    %v1971 = vunpack.c.h.b16 %v1259
    %v1972 = vunpack.c.l.b16 %v1260
    %v1973 = vunpack.c.h.b16 %v1260
    %v1974 = vunpack.c.l.b16 %v1261
    %v1975 = vunpack.c.h.b16 %v1261
    %v1976 = vunpack.c.l.b16 %v1262
    %v1977 = vunpack.c.h.b16 %v1262
    %v1978 = vunpack.c.l.b16 %v1263
    %v1979 = vunpack.c.h.b16 %v1263
    %v1980 = vunpack.c.l.b16 %v1264
    %v1981 = vunpack.c.h.b16 %v1264
    %v1982 = vunpack.c.l.b16 %v1265
    %v1983 = vunpack.c.h.b16 %v1265
    %v1984 = vunpack.c.l.b16 %v1266
    %v1985 = vunpack.c.h.b16 %v1266
    %v1986 = vunpack.c.l.b16 %v1267
    %v1987 = vunpack.c.h.b16 %v1267
    %v1988 = vunpack.c.l.b16 %v1268
    %v1989 = vunpack.c.h.b16 %v1268
    %v1990 = vunpack.c.l.b16 %v1269
    %v1991 = vunpack.c.h.b16 %v1269
    %v1992 = vunpack.c.l.b16 %v1270
    %v1993 = vunpack.c.h.b16 %v1270
    %v1994 = vunpack.c.l.b16 %v1271
    %v1995 = vunpack.c.h.b16 %v1271
    %v1996 = vunpack.c.l.b16 %v1272
    %v1997 = vunpack.c.h.b16 %v1272
    %v1998 = vunpack.c.l.b16 %v1273
    %v1999 = vunpack.c.h.b16 %v1273
    %v2000 = vunpack.c.l.b16 %v1274
    %v2001 = vunpack.c.h.b16 %v1274
    %v2002 = vunpack.c.l.b16 %v1275
    %v2003 = vunpack.c.h.b16 %v1275
    %v2004 = vunpack.c.l.b16 %v1276
    %v2005 = vunpack.c.h.b16 %v1276
    %v2006 = vunpack.c.l.b16 %v1277
    %v2007 = vunpack.c.h.b16 %v1277
    %v2008 = vunpack.c.l.b16 %v1278
    %v2009 = vunpack.c.h.b16 %v1278
    %v2010 = vunpack.c.l.b16 %v1279
    %v2011 = vunpack.c.h.b16 %v1279
    %v2012 = vunpack.c.l.b16 %v1280
    %v2013 = vunpack.c.h.b16 %v1280
    %v2014 = vunpack.c.l.b16 %v1281
    %v2015 = vunpack.c.h.b16 %v1281
    %v2016 = vunpack.c.l.b16 %v1282
    %v2017 = vunpack.c.h.b16 %v1282
    %v2018 = vunpack.c.l.b16 %v1283
    %v2019 = vunpack.c.h.b16 %v1283
    %v2020 = vunpack.c.l.b16 %v1284
    %v2021 = vunpack.c.h.b16 %v1284
    %v2022 = vunpack.c.l.b16 %v1285
    %v2023 = vunpack.c.h.b16 %v1285
    %v2024 = vunpack.c.l.b16 %v1286
    %v2025 = vunpack.c.h.b16 %v1286
    %v2026 = vunpack.c.l.b16 %v1287
    %v2027 = vunpack.c.h.b16 %v1287
    %v2028 = vunpack.c.l.b16 %v1288
    %v2029 = vunpack.c.h.b16 %v1288
    %v2030 = vunpack.c.l.b16 %v1289
    %v2031 = vunpack.c.h.b16 %v1289
    %v2032 = vunpack.c.l.b16 %v1290
    %v2033 = vunpack.c.h.b16 %v1290
    %v2034 = vunpack.c.l.b16 %v1291
    %v2035 = vunpack.c.h.b16 %v1291
    %v2036 = vunpack.c.l.b16 %v1292
    %v2037 = vunpack.c.h.b16 %v1292
    %v2038 = vunpack.c.l.b16 %v1293
    %v2039 = vunpack.c.h.b16 %v1293
    %v2040 = vunpack.c.l.b16 %v1294
    %v2041 = vunpack.c.h.b16 %v1294
    %v2042 = vunpack.c.l.b16 %v1295
    %v2043 = vunpack.c.h.b16 %v1295
    %v2044 = vunpack.c.l.b16 %v1296
    %v2045 = vunpack.c.h.b16 %v1296
    %v2046 = vunpack.c.l.b16 %v1297
    %v2047 = vunpack.c.h.b16 %v1297
    %v2048 = vunpack.c.l.b16 %v1298
    %v2049 = vunpack.c.h.b16 %v1298
    %v2050 = vunpack.c.l.b16 %v1299
    %v2051 = vunpack.c.h.b16 %v1299
    %v2052 = vunpack.c.l.b16 %v1300
    %v2053 = vunpack.c.h.b16 %v1300
    %v2054 = vunpack.c.l.b16 %v1301
    %v2055 = vunpack.c.h.b16 %v1301
    %v2056 = vunpack.c.l.b16 %v1302
    %v2057 = vunpack.c.h.b16 %v1302
    %v2058 = vunpack.c.l.b16 %v1303
    %v2059 = vunpack.c.h.b16 %v1303
    %v2060 = vunpack.c.l.b16 %v1304
    %v2061 = vunpack.c.h.b16 %v1304
    %v2062 = vunpack.c.l.b16 %v1305
    %v2063 = vunpack.c.h.b16 %v1305
    %v2064 = vunpack.c.l.b16 %v1306
    %v2065 = vunpack.c.h.b16 %v1306
    %v2066 = vunpack.c.l.b16 %v1307
    %v2067 = vunpack.c.h.b16 %v1307
    %v2068 = vunpack.c.l.b16 %v1308
    %v2069 = vunpack.c.h.b16 %v1308
    %v2070 = vunpack.c.l.b16 %v1309
    %v2071 = vunpack.c.h.b16 %v1309
    %v2072 = vunpack.c.l.b16 %v1310
    %v2073 = vunpack.c.h.b16 %v1310
    %v2074 = vunpack.c.l.b16 %v1311
    %v2075 = vunpack.c.h.b16 %v1311
    %v2076 = vunpack.c.l.b16 %v1312
    %v2077 = vunpack.c.h.b16 %v1312
    %v2078 = vunpack.c.l.b16 %v1313
    %v2079 = vunpack.c.h.b16 %v1313
    %v2080 = vunpack.c.l.b16 %v1314
    %v2081 = vunpack.c.h.b16 %v1314
    %v2082 = vunpack.c.l.b16 %v1315
    %v2083 = vunpack.c.h.b16 %v1315
    %v2084 = vunpack.c.l.b16 %v1316
    %v2085 = vunpack.c.h.b16 %v1316
    %v2086 = vunpack.c.l.b16 %v1317
    %v2087 = vunpack.c.h.b16 %v1317
    %v2088 = vunpack.c.l.b16 %v1318
    %v2089 = vunpack.c.h.b16 %v1318
    %v2090 = vunpack.c.l.b16 %v1319
    %v2091 = vunpack.c.h.b16 %v1319
    %v2092 = vunpack.c.l.b16 %v1320
    %v2093 = vunpack.c.h.b16 %v1320
    %v2094 = vunpack.c.l.b16 %v1321
    %v2095 = vunpack.c.h.b16 %v1321
    %v2096 = vunpack.c.l.b16 %v1322
    %v2097 = vunpack.c.h.b16 %v1322
    %v2098 = vunpack.c.l.b16 %v1323
    %v2099 = vunpack.c.h.b16 %v1323
    %v2100 = vunpack.c.l.b16 %v1324
    %v2101 = vunpack.c.h.b16 %v1324
    %v2102 = vunpack.c.l.b16 %v1325
    %v2103 = vunpack.c.h.b16 %v1325
    %v2104 = vunpack.c.l.b16 %v1326
    %v2105 = vunpack.c.h.b16 %v1326
    %v2106 = vunpack.c.l.b16 %v1327
    %v2107 = vunpack.c.h.b16 %v1327
    %v2108 = vunpack.c.l.b16 %v1328
    %v2109 = vunpack.c.h.b16 %v1328
    %v2110 = vunpack.c.l.b16 %v1329
    %v2111 = vunpack.c.h.b16 %v1329
    %v2112 = vunpack.c.l.b16 %v1330
    %v2113 = vunpack.c.h.b16 %v1330
    %v2114 = vunpack.c.l.b16 %v1331
    %v2115 = vunpack.c.h.b16 %v1331
    %v2116 = vunpack.c.l.b16 %v1332
    %v2117 = vunpack.c.h.b16 %v1332
    %v2118 = vunpack.c.l.b16 %v1333
    %v2119 = vunpack.c.h.b16 %v1333
    %v2120 = vunpack.c.l.b16 %v1334
    %v2121 = vunpack.c.h.b16 %v1334
    %v2122 = vunpack.c.l.b16 %v1335
    %v2123 = vunpack.c.h.b16 %v1335
    %v2124 = vunpack.c.l.b16 %v1336
    %v2125 = vunpack.c.h.b16 %v1336
    %v2126 = vunpack.c.l.b16 %v1337
    %v2127 = vunpack.c.h.b16 %v1337
    %v2128 = vpack.c.b16 %v1620, %v1616
    %v2129 = vpack.c.b16 %v1621, %v1617
    %v2130 = vpack.c.b16 %v1622, %v1618
    %v2131 = vpack.c.b16 %v1623, %v1619
    %v2132 = vpack.c.b16 %v1628, %v1624
    %v2133 = vpack.c.b16 %v1629, %v1625
    %v2134 = vpack.c.b16 %v1630, %v1626
    %v2135 = vpack.c.b16 %v1631, %v1627
    %v2136 = vpack.c.b16 %v1636, %v1632
    %v2137 = vpack.c.b16 %v1637, %v1633
    %v2138 = vpack.c.b16 %v1638, %v1634
    %v2139 = vpack.c.b16 %v1639, %v1635
    %v2140 = vpack.c.b16 %v1644, %v1640
    %v2141 = vpack.c.b16 %v1645, %v1641
    %v2142 = vpack.c.b16 %v1646, %v1642
    %v2143 = vpack.c.b16 %v1647, %v1643
    %v2144 = vpack.c.b16 %v1652, %v1648
    %v2145 = vpack.c.b16 %v1653, %v1649
    %v2146 = vpack.c.b16 %v1654, %v1650
    %v2147 = vpack.c.b16 %v1655, %v1651
    %v2148 = vpack.c.b16 %v1660, %v1656
    %v2149 = vpack.c.b16 %v1661, %v1657
    %v2150 = vpack.c.b16 %v1662, %v1658
    %v2151 = vpack.c.b16 %v1663, %v1659
    %v2152 = vpack.c.b16 %v1668, %v1664
    %v2153 = vpack.c.b16 %v1669, %v1665
    %v2154 = vpack.c.b16 %v1670, %v1666
    %v2155 = vpack.c.b16 %v1671, %v1667
    %v2156 = vpack.c.b16 %v1676, %v1672
    %v2157 = vpack.c.b16 %v1677, %v1673
    %v2158 = vpack.c.b16 %v1678, %v1674
    %v2159 = vpack.c.b16 %v1679, %v1675
    %v2160 = vpack.c.b16 %v1684, %v1680
    %v2161 = vpack.c.b16 %v1685, %v1681
    %v2162 = vpack.c.b16 %v1686, %v1682
    %v2163 = vpack.c.b16 %v1687, %v1683
    %v2164 = vpack.c.b16 %v1692, %v1688
    %v2165 = vpack.c.b16 %v1693, %v1689
    %v2166 = vpack.c.b16 %v1694, %v1690
    %v2167 = vpack.c.b16 %v1695, %v1691
    %v2168 = vpack.c.b16 %v1700, %v1696
    %v2169 = vpack.c.b16 %v1701, %v1697
    %v2170 = vpack.c.b16 %v1702, %v1698
    %v2171 = vpack.c.b16 %v1703, %v1699
    %v2172 = vpack.c.b16 %v1708, %v1704
    %v2173 = vpack.c.b16 %v1709, %v1705
    %v2174 = vpack.c.b16 %v1710, %v1706
    %v2175 = vpack.c.b16 %v1711, %v1707
    %v2176 = vpack.c.b16 %v1716, %v1712
    %v2177 = vpack.c.b16 %v1717, %v1713
    %v2178 = vpack.c.b16 %v1718, %v1714
    %v2179 = vpack.c.b16 %v1719, %v1715
    %v2180 = vpack.c.b16 %v1724, %v1720
    %v2181 = vpack.c.b16 %v1725, %v1721
    %v2182 = vpack.c.b16 %v1726, %v1722
    %v2183 = vpack.c.b16 %v1727, %v1723
    %v2184 = vpack.c.b16 %v1732, %v1728
    %v2185 = vpack.c.b16 %v1733, %v1729
    %v2186 = vpack.c.b16 %v1734, %v1730
    %v2187 = vpack.c.b16 %v1735, %v1731
    %v2188 = vpack.c.b16 %v1740, %v1736
    %v2189 = vpack.c.b16 %v1741, %v1737
    %v2190 = vpack.c.b16 %v1742, %v1738
    %v2191 = vpack.c.b16 %v1743, %v1739
    %v2192 = vpack.c.b16 %v1748, %v1744
    %v2193 = vpack.c.b16 %v1749, %v1745
    %v2194 = vpack.c.b16 %v1750, %v1746
    %v2195 = vpack.c.b16 %v1751, %v1747
    %v2196 = vpack.c.b16 %v1756, %v1752
    %v2197 = vpack.c.b16 %v1757, %v1753
    %v2198 = vpack.c.b16 %v1758, %v1754
    %v2199 = vpack.c.b16 %v1759, %v1755
    %v2200 = vpack.c.b16 %v1764, %v1760
    %v2201 = vpack.c.b16 %v1765, %v1761
    %v2202 = vpack.c.b16 %v1766, %v1762
    %v2203 = vpack.c.b16 %v1767, %v1763
    %v2204 = vpack.c.b16 %v1772, %v1768
    %v2205 = vpack.c.b16 %v1773, %v1769
    %v2206 = vpack.c.b16 %v1774, %v1770
    %v2207 = vpack.c.b16 %v1775, %v1771
    %v2208 = vpack.c.b16 %v1780, %v1776
    %v2209 = vpack.c.b16 %v1781, %v1777
    %v2210 = vpack.c.b16 %v1782, %v1778
    %v2211 = vpack.c.b16 %v1783, %v1779
    %v2212 = vpack.c.b16 %v1788, %v1784
    %v2213 = vpack.c.b16 %v1789, %v1785
    %v2214 = vpack.c.b16 %v1790, %v1786
    %v2215 = vpack.c.b16 %v1791, %v1787
    %v2216 = vpack.c.b16 %v1796, %v1792
    %v2217 = vpack.c.b16 %v1797, %v1793
    %v2218 = vpack.c.b16 %v1798, %v1794
    %v2219 = vpack.c.b16 %v1799, %v1795
    %v2220 = vpack.c.b16 %v1804, %v1800
    %v2221 = vpack.c.b16 %v1805, %v1801
    %v2222 = vpack.c.b16 %v1806, %v1802
    %v2223 = vpack.c.b16 %v1807, %v1803
    %v2224 = vpack.c.b16 %v1812, %v1808
    %v2225 = vpack.c.b16 %v1813, %v1809
    %v2226 = vpack.c.b16 %v1814, %v1810
    %v2227 = vpack.c.b16 %v1815, %v1811
    %v2228 = vpack.c.b16 %v1820, %v1816
    %v2229 = vpack.c.b16 %v1821, %v1817
    %v2230 = vpack.c.b16 %v1822, %v1818
    %v2231 = vpack.c.b16 %v1823, %v1819
    %v2232 = vpack.c.b16 %v1828, %v1824
    %v2233 = vpack.c.b16 %v1829, %v1825
    %v2234 = vpack.c.b16 %v1830, %v1826
    %v2235 = vpack.c.b16 %v1831, %v1827
    %v2236 = vpack.c.b16 %v1836, %v1832
    %v2237 = vpack.c.b16 %v1837, %v1833
    %v2238 = vpack.c.b16 %v1838, %v1834
    %v2239 = vpack.c.b16 %v1839, %v1835
    %v2240 = vpack.c.b16 %v1844, %v1840
    %v2241 = vpack.c.b16 %v1845, %v1841
    %v2242 = vpack.c.b16 %v1846, %v1842
    %v2243 = vpack.c.b16 %v1847, %v1843
    %v2244 = vpack.c.b16 %v1852, %v1848
    %v2245 = vpack.c.b16 %v1853, %v1849
    %v2246 = vpack.c.b16 %v1854, %v1850
    %v2247 = vpack.c.b16 %v1855, %v1851
    %v2248 = vpack.c.b16 %v1860, %v1856
    %v2249 = vpack.c.b16 %v1861, %v1857
    %v2250 = vpack.c.b16 %v1862, %v1858
    %v2251 = vpack.c.b16 %v1863, %v1859
    %v2252 = vpack.c.b16 %v1868, %v1864
    %v2253 = vpack.c.b16 %v1869, %v1865
    %v2254 = vpack.c.b16 %v1870, %v1866
    %v2255 = vpack.c.b16 %v1871, %v1867
    %v2256 = vpack.c.b16 %v1876, %v1872
    %v2257 = vpack.c.b16 %v1877, %v1873
    %v2258 = vpack.c.b16 %v1878, %v1874
    %v2259 = vpack.c.b16 %v1879, %v1875
    %v2260 = vpack.c.b16 %v1884, %v1880
    %v2261 = vpack.c.b16 %v1885, %v1881
    %v2262 = vpack.c.b16 %v1886, %v1882
    %v2263 = vpack.c.b16 %v1887, %v1883
    %v2264 = vpack.c.b16 %v1892, %v1888
    %v2265 = vpack.c.b16 %v1893, %v1889
    %v2266 = vpack.c.b16 %v1894, %v1890
    %v2267 = vpack.c.b16 %v1895, %v1891
    %v2268 = vpack.c.b16 %v1900, %v1896
    %v2269 = vpack.c.b16 %v1901, %v1897
    %v2270 = vpack.c.b16 %v1902, %v1898
    %v2271 = vpack.c.b16 %v1903, %v1899
    %v2272 = vpack.c.b16 %v1908, %v1904
    %v2273 = vpack.c.b16 %v1909, %v1905
    %v2274 = vpack.c.b16 %v1910, %v1906
    %v2275 = vpack.c.b16 %v1911, %v1907
    %v2276 = vpack.c.b16 %v1916, %v1912
    %v2277 = vpack.c.b16 %v1917, %v1913
    %v2278 = vpack.c.b16 %v1918, %v1914
    %v2279 = vpack.c.b16 %v1919, %v1915
    %v2280 = vpack.c.b16 %v1924, %v1920
    %v2281 = vpack.c.b16 %v1925, %v1921
    %v2282 = vpack.c.b16 %v1926, %v1922
    %v2283 = vpack.c.b16 %v1927, %v1923
    %v2284 = vpack.c.b16 %v1932, %v1928
    %v2285 = vpack.c.b16 %v1933, %v1929
    %v2286 = vpack.c.b16 %v1934, %v1930
    %v2287 = vpack.c.b16 %v1935, %v1931
    %v2288 = vpack.c.b16 %v1940, %v1936
    %v2289 = vpack.c.b16 %v1941, %v1937
    %v2290 = vpack.c.b16 %v1942, %v1938
    %v2291 = vpack.c.b16 %v1943, %v1939
    %v2292 = vpack.c.b16 %v1948, %v1944
    %v2293 = vpack.c.b16 %v1949, %v1945
    %v2294 = vpack.c.b16 %v1950, %v1946
    %v2295 = vpack.c.b16 %v1951, %v1947
    %v2296 = vpack.c.b16 %v1956, %v1952
    %v2297 = vpack.c.b16 %v1957, %v1953
    %v2298 = vpack.c.b16 %v1958, %v1954
    %v2299 = vpack.c.b16 %v1959, %v1955
    %v2300 = vpack.c.b16 %v1964, %v1960
    %v2301 = vpack.c.b16 %v1965, %v1961
    %v2302 = vpack.c.b16 %v1966, %v1962
    %v2303 = vpack.c.b16 %v1967, %v1963
    %v2304 = vpack.c.b16 %v1972, %v1968
    %v2305 = vpack.c.b16 %v1973, %v1969
    %v2306 = vpack.c.b16 %v1974, %v1970
    %v2307 = vpack.c.b16 %v1975, %v1971
    %v2308 = vpack.c.b16 %v1980, %v1976
    %v2309 = vpack.c.b16 %v1981, %v1977
    %v2310 = vpack.c.b16 %v1982, %v1978
    %v2311 = vpack.c.b16 %v1983, %v1979
    %v2312 = vpack.c.b16 %v1988, %v1984
    %v2313 = vpack.c.b16 %v1989, %v1985
    %v2314 = vpack.c.b16 %v1990, %v1986
    %v2315 = vpack.c.b16 %v1991, %v1987
    %v2316 = vpack.c.b16 %v1996, %v1992
    %v2317 = vpack.c.b16 %v1997, %v1993
    %v2318 = vpack.c.b16 %v1998, %v1994
    %v2319 = vpack.c.b16 %v1999, %v1995
    %v2320 = vpack.c.b16 %v2004, %v2000
    %v2321 = vpack.c.b16 %v2005, %v2001
    %v2322 = vpack.c.b16 %v2006, %v2002
    %v2323 = vpack.c.b16 %v2007, %v2003
    %v2324 = vpack.c.b16 %v2012, %v2008
    %v2325 = vpack.c.b16 %v2013, %v2009
    %v2326 = vpack.c.b16 %v2014, %v2010
    %v2327 = vpack.c.b16 %v2015, %v2011
    %v2328 = vpack.c.b16 %v2020, %v2016
    %v2329 = vpack.c.b16 %v2021, %v2017
    %v2330 = vpack.c.b16 %v2022, %v2018
    %v2331 = vpack.c.b16 %v2023, %v2019
    %v2332 = vpack.c.b16 %v2028, %v2024
    %v2333 = vpack.c.b16 %v2029, %v2025
    %v2334 = vpack.c.b16 %v2030, %v2026
    %v2335 = vpack.c.b16 %v2031, %v2027
    %v2336 = vpack.c.b16 %v2036, %v2032
    %v2337 = vpack.c.b16 %v2037, %v2033
    %v2338 = vpack.c.b16 %v2038, %v2034
    %v2339 = vpack.c.b16 %v2039, %v2035
    %v2340 = vpack.c.b16 %v2044, %v2040
    %v2341 = vpack.c.b16 %v2045, %v2041
    %v2342 = vpack.c.b16 %v2046, %v2042
    %v2343 = vpack.c.b16 %v2047, %v2043
    %v2344 = vpack.c.b16 %v2052, %v2048
    %v2345 = vpack.c.b16 %v2053, %v2049
    %v2346 = vpack.c.b16 %v2054, %v2050
    %v2347 = vpack.c.b16 %v2055, %v2051
    %v2348 = vpack.c.b16 %v2060, %v2056
    %v2349 = vpack.c.b16 %v2061, %v2057
    %v2350 = vpack.c.b16 %v2062, %v2058
    %v2351 = vpack.c.b16 %v2063, %v2059
    %v2352 = vpack.c.b16 %v2068, %v2064
    %v2353 = vpack.c.b16 %v2069, %v2065
    %v2354 = vpack.c.b16 %v2070, %v2066
    %v2355 = vpack.c.b16 %v2071, %v2067
    %v2356 = vpack.c.b16 %v2076, %v2072
    %v2357 = vpack.c.b16 %v2077, %v2073
    %v2358 = vpack.c.b16 %v2078, %v2074
    %v2359 = vpack.c.b16 %v2079, %v2075
    %v2360 = vpack.c.b16 %v2084, %v2080
    %v2361 = vpack.c.b16 %v2085, %v2081
    %v2362 = vpack.c.b16 %v2086, %v2082
    %v2363 = vpack.c.b16 %v2087, %v2083
    %v2364 = vpack.c.b16 %v2092, %v2088
    %v2365 = vpack.c.b16 %v2093, %v2089
    %v2366 = vpack.c.b16 %v2094, %v2090
    %v2367 = vpack.c.b16 %v2095, %v2091
    %v2368 = vpack.c.b16 %v2100, %v2096
    %v2369 = vpack.c.b16 %v2101, %v2097
    %v2370 = vpack.c.b16 %v2102, %v2098
    %v2371 = vpack.c.b16 %v2103, %v2099
    %v2372 = vpack.c.b16 %v2108, %v2104
    %v2373 = vpack.c.b16 %v2109, %v2105
    %v2374 = vpack.c.b16 %v2110, %v2106
    %v2375 = vpack.c.b16 %v2111, %v2107
    %v2376 = vpack.c.b16 %v2116, %v2112
    %v2377 = vpack.c.b16 %v2117, %v2113
    %v2378 = vpack.c.b16 %v2118, %v2114
    %v2379 = vpack.c.b16 %v2119, %v2115
    %v2380 = vpack.c.b16 %v2124, %v2120
    %v2381 = vpack.c.b16 %v2125, %v2121
    %v2382 = vpack.c.b16 %v2126, %v2122
    %v2383 = vpack.c.b16 %v2127, %v2123
    %2640 = vmatprep.subr.bf16.mxu0 %v2129
    %2641 = vmatpush1.bf16.msra.mxu0 %v2128
    %2642 = vmatprep.subr.bf16.mxu0 %v2133
    %2643 = vmatpush1.bf16.msra.mxu0 %v2132
    %2644 = vmatprep.subr.bf16.mxu0 %v2137
    %2645 = vmatpush1.bf16.msra.mxu0 %v2136
    %2646 = vmatprep.subr.bf16.mxu0 %v2141
    %2647 = vmatpush1.bf16.msra.mxu0 %v2140
    %2648 = vmatprep.subr.bf16.mxu0 %v2145
    %2649 = vmatpush1.bf16.msra.mxu0 %v2144
    %2650 = vmatprep.subr.bf16.mxu0 %v2149
    %2651 = vmatpush1.bf16.msra.mxu0 %v2148
    %2652 = vmatprep.subr.bf16.mxu0 %v2153
    %2653 = vmatpush1.bf16.msra.mxu0 %v2152
    %2654 = vmatprep.subr.bf16.mxu0 %v2157
    %2655 = vmatpush1.bf16.msra.mxu0 %v2156
    %2656 = vmatprep.subr.bf16.mxu0 %v2161
    %2657 = vmatpush1.bf16.msra.mxu0 %v2160
    %2658 = vmatprep.subr.bf16.mxu0 %v2165
    %2659 = vmatpush1.bf16.msra.mxu0 %v2164
    %2660 = vmatprep.subr.bf16.mxu0 %v2169
    %2661 = vmatpush1.bf16.msra.mxu0 %v2168
    %2662 = vmatprep.subr.bf16.mxu0 %v2173
    %2663 = vmatpush1.bf16.msra.mxu0 %v2172
    %2664 = vmatprep.subr.bf16.mxu0 %v2177
    %2665 = vmatpush1.bf16.msra.mxu0 %v2176
    %2666 = vmatprep.subr.bf16.mxu0 %v2181
    %2667 = vmatpush1.bf16.msra.mxu0 %v2180
    %2668 = vmatprep.subr.bf16.mxu0 %v2185
    %2669 = vmatpush1.bf16.msra.mxu0 %v2184
    %2670 = vmatprep.subr.bf16.mxu0 %v2189
    %2671 = vmatpush1.bf16.msra.mxu0 %v2188
    %2672 = vmatprep.mubr.bf16.mxu0 %v1075
    %2673 = vmatmul.mubr.bf16.gmra.mrb[0].mxu0 %v1074
    %v2674 = vpop.f32.mrb[0].mxu0
    %v2675 = vadd.f32 %v1343, %v2674
    %v2676 = vpop.f32.mrb[0].mxu0
    %v2677 = vadd.f32 %v1347, %v2676
    %v2678 = vpop.f32.mrb[0].mxu0
    %v2679 = vpop.f32.mrb[0].mxu0
    %2680 = vdwg.mxu0
    %2681 = vmatprep.subr.bf16.mxu0 %v2193
    %2682 = vmatpush1.bf16.msra.mxu0 %v2192
    %2683 = vmatprep.subr.bf16.mxu0 %v2197
    %2684 = vmatpush1.bf16.msra.mxu0 %v2196
    %2685 = vmatprep.subr.bf16.mxu0 %v2201
    %2686 = vmatpush1.bf16.msra.mxu0 %v2200
    %2687 = vmatprep.subr.bf16.mxu0 %v2205
    %2688 = vmatpush1.bf16.msra.mxu0 %v2204
    %2689 = vmatprep.subr.bf16.mxu0 %v2209
    %2690 = vmatpush1.bf16.msra.mxu0 %v2208
    %2691 = vmatprep.subr.bf16.mxu0 %v2213
    %2692 = vmatpush1.bf16.msra.mxu0 %v2212
    %2693 = vmatprep.subr.bf16.mxu0 %v2217
    %2694 = vmatpush1.bf16.msra.mxu0 %v2216
    %2695 = vmatprep.subr.bf16.mxu0 %v2221
    %2696 = vmatpush1.bf16.msra.mxu0 %v2220
    %2697 = vmatprep.subr.bf16.mxu0 %v2225
    %2698 = vmatpush1.bf16.msra.mxu0 %v2224
    %2699 = vmatprep.subr.bf16.mxu0 %v2229
    %2700 = vmatpush1.bf16.msra.mxu0 %v2228
    %2701 = vmatprep.subr.bf16.mxu0 %v2233
    %2702 = vmatpush1.bf16.msra.mxu0 %v2232
    %2703 = vmatprep.subr.bf16.mxu0 %v2237
    %2704 = vmatpush1.bf16.msra.mxu0 %v2236
    %2705 = vmatprep.subr.bf16.mxu0 %v2241
    %2706 = vmatpush1.bf16.msra.mxu0 %v2240
    %2707 = vmatprep.subr.bf16.mxu0 %v2245
    %2708 = vmatpush1.bf16.msra.mxu0 %v2244
    %2709 = vmatprep.subr.bf16.mxu0 %v2249
    %2710 = vmatpush1.bf16.msra.mxu0 %v2248
    %2711 = vmatprep.subr.bf16.mxu0 %v2253
    %2712 = vmatpush1.bf16.msra.mxu0 %v2252
    %2713 = vmatprep.mubr.bf16.mxu0 %v1077
    %2714 = vmatmul.mubr.bf16.gmra.mrb[0].mxu0 %v1076
    %v2715 = vpop.f32.mrb[0].mxu0
    %v2716 = vadd.f32 %v2675, %v2715
    %v2717 = vpop.f32.mrb[0].mxu0
    %v2718 = vadd.f32 %v2677, %v2717
    %v2719 = vpop.f32.mrb[0].mxu0
    %v2720 = vpop.f32.mrb[0].mxu0
    %2721 = vdwg.mxu0
    %2722 = vmatprep.subr.bf16.mxu0 %v2257
    %2723 = vmatpush1.bf16.msra.mxu0 %v2256
    %2724 = vmatprep.subr.bf16.mxu0 %v2261
    %2725 = vmatpush1.bf16.msra.mxu0 %v2260
    %2726 = vmatprep.subr.bf16.mxu0 %v2265
    %2727 = vmatpush1.bf16.msra.mxu0 %v2264
    %2728 = vmatprep.subr.bf16.mxu0 %v2269
    %2729 = vmatpush1.bf16.msra.mxu0 %v2268
    %2730 = vmatprep.subr.bf16.mxu0 %v2273
    %2731 = vmatpush1.bf16.msra.mxu0 %v2272
    %2732 = vmatprep.subr.bf16.mxu0 %v2277
    %2733 = vmatpush1.bf16.msra.mxu0 %v2276
    %2734 = vmatprep.subr.bf16.mxu0 %v2281
    %2735 = vmatpush1.bf16.msra.mxu0 %v2280
    %2736 = vmatprep.subr.bf16.mxu0 %v2285
    %2737 = vmatpush1.bf16.msra.mxu0 %v2284
    %2738 = vmatprep.subr.bf16.mxu0 %v2289
    %2739 = vmatpush1.bf16.msra.mxu0 %v2288
    %2740 = vmatprep.subr.bf16.mxu0 %v2293
    %2741 = vmatpush1.bf16.msra.mxu0 %v2292
    %2742 = vmatprep.subr.bf16.mxu0 %v2297
    %2743 = vmatpush1.bf16.msra.mxu0 %v2296
    %2744 = vmatprep.subr.bf16.mxu0 %v2301
    %2745 = vmatpush1.bf16.msra.mxu0 %v2300
    %2746 = vmatprep.subr.bf16.mxu0 %v2305
    %2747 = vmatpush1.bf16.msra.mxu0 %v2304
    %2748 = vmatprep.subr.bf16.mxu0 %v2309
    %2749 = vmatpush1.bf16.msra.mxu0 %v2308
    %2750 = vmatprep.subr.bf16.mxu0 %v2313
    %2751 = vmatpush1.bf16.msra.mxu0 %v2312
    %2752 = vmatprep.subr.bf16.mxu0 %v2317
    %2753 = vmatpush1.bf16.msra.mxu0 %v2316
    %2754 = vmatprep.mubr.bf16.mxu0 %v1079
    %2755 = vmatmul.mubr.bf16.gmra.mrb[0].mxu0 %v1078
    %v2756 = vpop.f32.mrb[0].mxu0
    %v2757 = vadd.f32 %v2716, %v2756
    %v2758 = vpop.f32.mrb[0].mxu0
    %v2759 = vadd.f32 %v2718, %v2758
    %v2760 = vpop.f32.mrb[0].mxu0
    %v2761 = vpop.f32.mrb[0].mxu0
    %2762 = vdwg.mxu0
    %2763 = vmatprep.subr.bf16.mxu0 %v2321
    %2764 = vmatpush1.bf16.msra.mxu0 %v2320
    %2765 = vmatprep.subr.bf16.mxu0 %v2325
    %2766 = vmatpush1.bf16.msra.mxu0 %v2324
    %2767 = vmatprep.subr.bf16.mxu0 %v2329
    %2768 = vmatpush1.bf16.msra.mxu0 %v2328
    %2769 = vmatprep.subr.bf16.mxu0 %v2333
    %2770 = vmatpush1.bf16.msra.mxu0 %v2332
    %2771 = vmatprep.subr.bf16.mxu0 %v2337
    %2772 = vmatpush1.bf16.msra.mxu0 %v2336
    %2773 = vmatprep.subr.bf16.mxu0 %v2341
    %2774 = vmatpush1.bf16.msra.mxu0 %v2340
    %2775 = vmatprep.subr.bf16.mxu0 %v2345
    %2776 = vmatpush1.bf16.msra.mxu0 %v2344
    %2777 = vmatprep.subr.bf16.mxu0 %v2349
    %2778 = vmatpush1.bf16.msra.mxu0 %v2348
    %2779 = vmatprep.subr.bf16.mxu0 %v2353
    %2780 = vmatpush1.bf16.msra.mxu0 %v2352
    %2781 = vmatprep.subr.bf16.mxu0 %v2357
    %2782 = vmatpush1.bf16.msra.mxu0 %v2356
    %2783 = vmatprep.subr.bf16.mxu0 %v2361
    %2784 = vmatpush1.bf16.msra.mxu0 %v2360
    %2785 = vmatprep.subr.bf16.mxu0 %v2365
    %2786 = vmatpush1.bf16.msra.mxu0 %v2364
    %2787 = vmatprep.subr.bf16.mxu0 %v2369
    %2788 = vmatpush1.bf16.msra.mxu0 %v2368
    %2789 = vmatprep.subr.bf16.mxu0 %v2373
    %2790 = vmatpush1.bf16.msra.mxu0 %v2372
    %2791 = vmatprep.subr.bf16.mxu0 %v2377
    %2792 = vmatpush1.bf16.msra.mxu0 %v2376
    %2793 = vmatprep.subr.bf16.mxu0 %v2381
    %2794 = vmatpush1.bf16.msra.mxu0 %v2380
    %2795 = vmatprep.mubr.bf16.mxu0 %v1081
    %2796 = vmatmul.mubr.bf16.gmra.mrb[0].mxu0 %v1080
    %v2797 = vpop.f32.mrb[0].mxu0
    %v2798 = vadd.f32 %v2757, %v2797
    %v2799 = vpop.f32.mrb[0].mxu0
    %v2800 = vadd.f32 %v2759, %v2799
    %v2801 = vpop.f32.mrb[0].mxu0
    %v2802 = vpop.f32.mrb[0].mxu0
    %2803 = vdwg.mxu0
    %2804 = vmatprep.subr.bf16.mxu0 %v2131
    %2805 = vmatpush1.bf16.msra.mxu0 %v2130
    %2806 = vmatprep.subr.bf16.mxu0 %v2135
    %2807 = vmatpush1.bf16.msra.mxu0 %v2134
    %2808 = vmatprep.subr.bf16.mxu0 %v2139
    %2809 = vmatpush1.bf16.msra.mxu0 %v2138
    %2810 = vmatprep.subr.bf16.mxu0 %v2143
    %2811 = vmatpush1.bf16.msra.mxu0 %v2142
    %2812 = vmatprep.subr.bf16.mxu0 %v2147
    %2813 = vmatpush1.bf16.msra.mxu0 %v2146
    %2814 = vmatprep.subr.bf16.mxu0 %v2151
    %2815 = vmatpush1.bf16.msra.mxu0 %v2150
    %2816 = vmatprep.subr.bf16.mxu0 %v2155
    %2817 = vmatpush1.bf16.msra.mxu0 %v2154
    %2818 = vmatprep.subr.bf16.mxu0 %v2159
    %2819 = vmatpush1.bf16.msra.mxu0 %v2158
    %2820 = vmatprep.subr.bf16.mxu0 %v2163
    %2821 = vmatpush1.bf16.msra.mxu0 %v2162
    %2822 = vmatprep.subr.bf16.mxu0 %v2167
    %2823 = vmatpush1.bf16.msra.mxu0 %v2166
    %2824 = vmatprep.subr.bf16.mxu0 %v2171
    %2825 = vmatpush1.bf16.msra.mxu0 %v2170
    %2826 = vmatprep.subr.bf16.mxu0 %v2175
    %2827 = vmatpush1.bf16.msra.mxu0 %v2174
    %2828 = vmatprep.subr.bf16.mxu0 %v2179
    %2829 = vmatpush1.bf16.msra.mxu0 %v2178
    %2830 = vmatprep.subr.bf16.mxu0 %v2183
    %2831 = vmatpush1.bf16.msra.mxu0 %v2182
    %2832 = vmatprep.subr.bf16.mxu0 %v2187
    %2833 = vmatpush1.bf16.msra.mxu0 %v2186
    %2834 = vmatprep.subr.bf16.mxu0 %v2191
    %2835 = vmatpush1.bf16.msra.mxu0 %v2190
    %2836 = vmatprep.mubr.bf16.mxu0 %v1075
    %2837 = vmatmul.mubr.bf16.gmra.mrb[0].mxu0 %v1074
    %v2838 = vpop.f32.mrb[0].mxu0
    %v2839 = vadd.f32 %v1351, %v2838
    %v2840 = vpop.f32.mrb[0].mxu0
    %v2841 = vadd.f32 %v1355, %v2840
    %v2842 = vpop.f32.mrb[0].mxu0
    %v2843 = vpop.f32.mrb[0].mxu0
    %2844 = vdwg.mxu0
    %2845 = vmatprep.subr.bf16.mxu0 %v2195
    %2846 = vmatpush1.bf16.msra.mxu0 %v2194
    %2847 = vmatprep.subr.bf16.mxu0 %v2199
    %2848 = vmatpush1.bf16.msra.mxu0 %v2198
    %2849 = vmatprep.subr.bf16.mxu0 %v2203
    %2850 = vmatpush1.bf16.msra.mxu0 %v2202
    %2851 = vmatprep.subr.bf16.mxu0 %v2207
    %2852 = vmatpush1.bf16.msra.mxu0 %v2206
    %2853 = vmatprep.subr.bf16.mxu0 %v2211
    %2854 = vmatpush1.bf16.msra.mxu0 %v2210
    %2855 = vmatprep.subr.bf16.mxu0 %v2215
    %2856 = vmatpush1.bf16.msra.mxu0 %v2214
    %2857 = vmatprep.subr.bf16.mxu0 %v2219
    %2858 = vmatpush1.bf16.msra.mxu0 %v2218
    %2859 = vmatprep.subr.bf16.mxu0 %v2223
    %2860 = vmatpush1.bf16.msra.mxu0 %v2222
    %2861 = vmatprep.subr.bf16.mxu0 %v2227
    %2862 = vmatpush1.bf16.msra.mxu0 %v2226
    %2863 = vmatprep.subr.bf16.mxu0 %v2231
    %2864 = vmatpush1.bf16.msra.mxu0 %v2230
    %2865 = vmatprep.subr.bf16.mxu0 %v2235
    %2866 = vmatpush1.bf16.msra.mxu0 %v2234
    %2867 = vmatprep.subr.bf16.mxu0 %v2239
    %2868 = vmatpush1.bf16.msra.mxu0 %v2238
    %2869 = vmatprep.subr.bf16.mxu0 %v2243
    %2870 = vmatpush1.bf16.msra.mxu0 %v2242
    %2871 = vmatprep.subr.bf16.mxu0 %v2247
    %2872 = vmatpush1.bf16.msra.mxu0 %v2246
    %2873 = vmatprep.subr.bf16.mxu0 %v2251
    %2874 = vmatpush1.bf16.msra.mxu0 %v2250
    %2875 = vmatprep.subr.bf16.mxu0 %v2255
    %2876 = vmatpush1.bf16.msra.mxu0 %v2254
    %2877 = vmatprep.mubr.bf16.mxu0 %v1077
    %2878 = vmatmul.mubr.bf16.gmra.mrb[0].mxu0 %v1076
    %v2879 = vpop.f32.mrb[0].mxu0
    %v2880 = vadd.f32 %v2839, %v2879
    %v2881 = vpop.f32.mrb[0].mxu0
    %v2882 = vadd.f32 %v2841, %v2881
    %v2883 = vpop.f32.mrb[0].mxu0
    %v2884 = vpop.f32.mrb[0].mxu0
    %2885 = vdwg.mxu0
    %2886 = vmatprep.subr.bf16.mxu0 %v2259
    %2887 = vmatpush1.bf16.msra.mxu0 %v2258
    %2888 = vmatprep.subr.bf16.mxu0 %v2263
    %2889 = vmatpush1.bf16.msra.mxu0 %v2262
    %2890 = vmatprep.subr.bf16.mxu0 %v2267
    %2891 = vmatpush1.bf16.msra.mxu0 %v2266
    %2892 = vmatprep.subr.bf16.mxu0 %v2271
    %2893 = vmatpush1.bf16.msra.mxu0 %v2270
    %2894 = vmatprep.subr.bf16.mxu0 %v2275
    %2895 = vmatpush1.bf16.msra.mxu0 %v2274
    %2896 = vmatprep.subr.bf16.mxu0 %v2279
    %2897 = vmatpush1.bf16.msra.mxu0 %v2278
    %2898 = vmatprep.subr.bf16.mxu0 %v2283
    %2899 = vmatpush1.bf16.msra.mxu0 %v2282
    %2900 = vmatprep.subr.bf16.mxu0 %v2287
    %2901 = vmatpush1.bf16.msra.mxu0 %v2286
    %2902 = vmatprep.subr.bf16.mxu0 %v2291
    %2903 = vmatpush1.bf16.msra.mxu0 %v2290
    %2904 = vmatprep.subr.bf16.mxu0 %v2295
    %2905 = vmatpush1.bf16.msra.mxu0 %v2294
    %2906 = vmatprep.subr.bf16.mxu0 %v2299
    %2907 = vmatpush1.bf16.msra.mxu0 %v2298
    %2908 = vmatprep.subr.bf16.mxu0 %v2303
    %2909 = vmatpush1.bf16.msra.mxu0 %v2302
    %2910 = vmatprep.subr.bf16.mxu0 %v2307
    %2911 = vmatpush1.bf16.msra.mxu0 %v2306
    %2912 = vmatprep.subr.bf16.mxu0 %v2311
    %2913 = vmatpush1.bf16.msra.mxu0 %v2310
    %2914 = vmatprep.subr.bf16.mxu0 %v2315
    %2915 = vmatpush1.bf16.msra.mxu0 %v2314
    %2916 = vmatprep.subr.bf16.mxu0 %v2319
    %2917 = vmatpush1.bf16.msra.mxu0 %v2318
    %2918 = vmatprep.mubr.bf16.mxu0 %v1079
    %2919 = vmatmul.mubr.bf16.gmra.mrb[0].mxu0 %v1078
    %v2920 = vpop.f32.mrb[0].mxu0
    %v2921 = vadd.f32 %v2880, %v2920
    %v2922 = vpop.f32.mrb[0].mxu0
    %v2923 = vadd.f32 %v2882, %v2922
    %v2924 = vpop.f32.mrb[0].mxu0
    %v2925 = vpop.f32.mrb[0].mxu0
    %2926 = vdwg.mxu0
    %2927 = vmatprep.subr.bf16.mxu0 %v2323
    %2928 = vmatpush1.bf16.msra.mxu0 %v2322
    %2929 = vmatprep.subr.bf16.mxu0 %v2327
    %2930 = vmatpush1.bf16.msra.mxu0 %v2326
    %2931 = vmatprep.subr.bf16.mxu0 %v2331
    %2932 = vmatpush1.bf16.msra.mxu0 %v2330
    %2933 = vmatprep.subr.bf16.mxu0 %v2335
    %2934 = vmatpush1.bf16.msra.mxu0 %v2334
    %2935 = vmatprep.subr.bf16.mxu0 %v2339
    %2936 = vmatpush1.bf16.msra.mxu0 %v2338
    %2937 = vmatprep.subr.bf16.mxu0 %v2343
    %2938 = vmatpush1.bf16.msra.mxu0 %v2342
    %2939 = vmatprep.subr.bf16.mxu0 %v2347
    %2940 = vmatpush1.bf16.msra.mxu0 %v2346
    %2941 = vmatprep.subr.bf16.mxu0 %v2351
    %2942 = vmatpush1.bf16.msra.mxu0 %v2350
    %2943 = vmatprep.subr.bf16.mxu0 %v2355
    %2944 = vmatpush1.bf16.msra.mxu0 %v2354
    %2945 = vmatprep.subr.bf16.mxu0 %v2359
    %2946 = vmatpush1.bf16.msra.mxu0 %v2358
    %2947 = vmatprep.subr.bf16.mxu0 %v2363
    %2948 = vmatpush1.bf16.msra.mxu0 %v2362
    %2949 = vmatprep.subr.bf16.mxu0 %v2367
    %2950 = vmatpush1.bf16.msra.mxu0 %v2366
    %2951 = vmatprep.subr.bf16.mxu0 %v2371
    %2952 = vmatpush1.bf16.msra.mxu0 %v2370
    %2953 = vmatprep.subr.bf16.mxu0 %v2375
    %2954 = vmatpush1.bf16.msra.mxu0 %v2374
    %2955 = vmatprep.subr.bf16.mxu0 %v2379
    %2956 = vmatpush1.bf16.msra.mxu0 %v2378
    %2957 = vmatprep.subr.bf16.mxu0 %v2383
    %2958 = vmatpush1.bf16.msra.mxu0 %v2382
    %2959 = vmatprep.mubr.bf16.mxu0 %v1081
    %2960 = vmatmul.mubr.bf16.gmra.mrb[0].mxu0 %v1080
    %v2961 = vpop.f32.mrb[0].mxu0
    %v2962 = vadd.f32 %v2921, %v2961
    %v2963 = vpop.f32.mrb[0].mxu0
    %v2964 = vadd.f32 %v2923, %v2963
    %v2965 = vpop.f32.mrb[0].mxu0
    %v2966 = vpop.f32.mrb[0].mxu0
    %2967 = vdwg.mxu0
    %v2968 = vtanh.pop %v2798
    %v2969 = vtanh.pop %v2800
    %v2970 = vtanh.pop %v2962
    %v2971 = vtanh.pop %v2964
    %v2972 = vpack.c.bf16 %v2968, %v2968
    %v2973 = vpack.c.bf16 %v2969, %v2969
    %v2974 = vpack.c.bf16 %v2970, %v2970
    %v2975 = vpack.c.bf16 %v2971, %v2971
    %v2976 = vld [vmem:[#allocation6] sm:$0xff]
    %v2977 = vld [vmem:[#allocation6 + $0x8] sm:$0xff]
    %v2978 = vld [vmem:[#allocation6 + $0x10] sm:$0xff]
    %v2979 = vld [vmem:[#allocation6 + $0x18] sm:$0xff]
    %v2980 = vld [vmem:[#allocation6 + $0x20] sm:$0xff]
    %v2981 = vld [vmem:[#allocation6 + $0x28] sm:$0xff]
    %v2982 = vld [vmem:[#allocation6 + $0x30] sm:$0xff]
    %v2983 = vld [vmem:[#allocation6 + $0x38] sm:$0xff]
    %v2984 = vld [vmem:[#allocation6 + $0x40] sm:$0xff]
    %v2985 = vld [vmem:[#allocation6 + $0x48] sm:$0xff]
    %v2986 = vld [vmem:[#allocation6 + $0x50] sm:$0xff]
    %v2987 = vld [vmem:[#allocation6 + $0x58] sm:$0xff]
    %v2988 = vld [vmem:[#allocation6 + $0x60] sm:$0xff]
    %v2989 = vld [vmem:[#allocation6 + $0x68] sm:$0xff]
    %v2990 = vld [vmem:[#allocation6 + $0x70] sm:$0xff]
    %v2991 = vld [vmem:[#allocation6 + $0x78] sm:$0xff]
    %v2992 = vld [vmem:[#allocation6 + $0x80] sm:$0xff]
    %v2993 = vld [vmem:[#allocation6 + $0x88] sm:$0xff]
    %v2994 = vld [vmem:[#allocation6 + $0x90] sm:$0xff]
    %v2995 = vld [vmem:[#allocation6 + $0x98] sm:$0xff]
    %v2996 = vld [vmem:[#allocation6 + $0xa0] sm:$0xff]
    %v2997 = vld [vmem:[#allocation6 + $0xa8] sm:$0xff]
    %v2998 = vld [vmem:[#allocation6 + $0xb0] sm:$0xff]
    %v2999 = vld [vmem:[#allocation6 + $0xb8] sm:$0xff]
    %v3000 = vld [vmem:[#allocation6 + $0xc0] sm:$0xff]
    %v3001 = vld [vmem:[#allocation6 + $0xc8] sm:$0xff]
    %v3002 = vld [vmem:[#allocation6 + $0xd0] sm:$0xff]
    %v3003 = vld [vmem:[#allocation6 + $0xd8] sm:$0xff]
    %v3004 = vld [vmem:[#allocation6 + $0xe0] sm:$0xff]
    %v3005 = vld [vmem:[#allocation6 + $0xe8] sm:$0xff]
    %v3006 = vld [vmem:[#allocation6 + $0xf0] sm:$0xff]
    %v3007 = vld [vmem:[#allocation6 + $0xf8] sm:$0xff]
    %v3008 = vld [vmem:[#allocation6 + $0x100] sm:$0xff]
    %v3009 = vld [vmem:[#allocation6 + $0x108] sm:$0xff]
    %v3010 = vld [vmem:[#allocation6 + $0x110] sm:$0xff]
    %v3011 = vld [vmem:[#allocation6 + $0x118] sm:$0xff]
    %v3012 = vld [vmem:[#allocation6 + $0x120] sm:$0xff]
    %v3013 = vld [vmem:[#allocation6 + $0x128] sm:$0xff]
    %v3014 = vld [vmem:[#allocation6 + $0x130] sm:$0xff]
    %v3015 = vld [vmem:[#allocation6 + $0x138] sm:$0xff]
    %v3016 = vld [vmem:[#allocation6 + $0x140] sm:$0xff]
    %v3017 = vld [vmem:[#allocation6 + $0x148] sm:$0xff]
    %v3018 = vld [vmem:[#allocation6 + $0x150] sm:$0xff]
    %v3019 = vld [vmem:[#allocation6 + $0x158] sm:$0xff]
    %v3020 = vld [vmem:[#allocation6 + $0x160] sm:$0xff]
    %v3021 = vld [vmem:[#allocation6 + $0x168] sm:$0xff]
    %v3022 = vld [vmem:[#allocation6 + $0x170] sm:$0xff]
    %v3023 = vld [vmem:[#allocation6 + $0x178] sm:$0xff]
    %v3024 = vld [vmem:[#allocation6 + $0x180] sm:$0xff]
    %v3025 = vld [vmem:[#allocation6 + $0x188] sm:$0xff]
    %v3026 = vld [vmem:[#allocation6 + $0x190] sm:$0xff]
    %v3027 = vld [vmem:[#allocation6 + $0x198] sm:$0xff]
    %v3028 = vld [vmem:[#allocation6 + $0x1a0] sm:$0xff]
    %v3029 = vld [vmem:[#allocation6 + $0x1a8] sm:$0xff]
    %v3030 = vld [vmem:[#allocation6 + $0x1b0] sm:$0xff]
    %v3031 = vld [vmem:[#allocation6 + $0x1b8] sm:$0xff]
    %v3032 = vld [vmem:[#allocation6 + $0x1c0] sm:$0xff]
    %v3033 = vld [vmem:[#allocation6 + $0x1c8] sm:$0xff]
    %v3034 = vld [vmem:[#allocation6 + $0x1d0] sm:$0xff]
    %v3035 = vld [vmem:[#allocation6 + $0x1d8] sm:$0xff]
    %v3036 = vld [vmem:[#allocation6 + $0x1e0] sm:$0xff]
    %v3037 = vld [vmem:[#allocation6 + $0x1e8] sm:$0xff]
    %v3038 = vld [vmem:[#allocation6 + $0x1f0] sm:$0xff]
    %v3039 = vld [vmem:[#allocation6 + $0x1f8] sm:$0xff]
    %v3040 = vld [vmem:[%s7] sm:$0x3]
    %v3042 = vlaneseq
    %v3043 = vshrl.u32 %v3042, 7
    %v3044 = vsub.s32 0, %v3043
    %v3045 = vrot.slane %v3040, %v3044
    %v3046 = vlaneseq
    %v3047 = vshrl.u32 %v3046, 7
    %v3048 = vsub.s32 1, %v3047
    %v3049 = vrot.slane %v3040, %v3048
    %v3116 = vunpack.c.l.b16 %v2976
    %v3117 = vunpack.c.h.b16 %v2976
    %v3118 = vunpack.c.l.b16 %v2977
    %v3119 = vunpack.c.h.b16 %v2977
    %v3120 = vunpack.c.l.b16 %v2978
    %v3121 = vunpack.c.h.b16 %v2978
    %v3122 = vunpack.c.l.b16 %v2979
    %v3123 = vunpack.c.h.b16 %v2979
    %v3124 = vunpack.c.l.b16 %v2980
    %v3125 = vunpack.c.h.b16 %v2980
    %v3126 = vunpack.c.l.b16 %v2981
    %v3127 = vunpack.c.h.b16 %v2981
    %v3128 = vunpack.c.l.b16 %v2982
    %v3129 = vunpack.c.h.b16 %v2982
    %v3130 = vunpack.c.l.b16 %v2983
    %v3131 = vunpack.c.h.b16 %v2983
    %v3132 = vunpack.c.l.b16 %v2984
    %v3133 = vunpack.c.h.b16 %v2984
    %v3134 = vunpack.c.l.b16 %v2985
    %v3135 = vunpack.c.h.b16 %v2985
    %v3136 = vunpack.c.l.b16 %v2986
    %v3137 = vunpack.c.h.b16 %v2986
    %v3138 = vunpack.c.l.b16 %v2987
    %v3139 = vunpack.c.h.b16 %v2987
    %v3140 = vunpack.c.l.b16 %v2988
    %v3141 = vunpack.c.h.b16 %v2988
    %v3142 = vunpack.c.l.b16 %v2989
    %v3143 = vunpack.c.h.b16 %v2989
    %v3144 = vunpack.c.l.b16 %v2990
    %v3145 = vunpack.c.h.b16 %v2990
    %v3146 = vunpack.c.l.b16 %v2991
    %v3147 = vunpack.c.h.b16 %v2991
    %v3148 = vunpack.c.l.b16 %v2992
    %v3149 = vunpack.c.h.b16 %v2992
    %v3150 = vunpack.c.l.b16 %v2993
    %v3151 = vunpack.c.h.b16 %v2993
    %v3152 = vunpack.c.l.b16 %v2994
    %v3153 = vunpack.c.h.b16 %v2994
    %v3154 = vunpack.c.l.b16 %v2995
    %v3155 = vunpack.c.h.b16 %v2995
    %v3156 = vunpack.c.l.b16 %v2996
    %v3157 = vunpack.c.h.b16 %v2996
    %v3158 = vunpack.c.l.b16 %v2997
    %v3159 = vunpack.c.h.b16 %v2997
    %v3160 = vunpack.c.l.b16 %v2998
    %v3161 = vunpack.c.h.b16 %v2998
    %v3162 = vunpack.c.l.b16 %v2999
    %v3163 = vunpack.c.h.b16 %v2999
    %v3164 = vunpack.c.l.b16 %v3000
    %v3165 = vunpack.c.h.b16 %v3000
    %v3166 = vunpack.c.l.b16 %v3001
    %v3167 = vunpack.c.h.b16 %v3001
    %v3168 = vunpack.c.l.b16 %v3002
    %v3169 = vunpack.c.h.b16 %v3002
    %v3170 = vunpack.c.l.b16 %v3003
    %v3171 = vunpack.c.h.b16 %v3003
    %v3172 = vunpack.c.l.b16 %v3004
    %v3173 = vunpack.c.h.b16 %v3004
    %v3174 = vunpack.c.l.b16 %v3005
    %v3175 = vunpack.c.h.b16 %v3005
    %v3176 = vunpack.c.l.b16 %v3006
    %v3177 = vunpack.c.h.b16 %v3006
    %v3178 = vunpack.c.l.b16 %v3007
    %v3179 = vunpack.c.h.b16 %v3007
    %v3180 = vunpack.c.l.b16 %v3008
    %v3181 = vunpack.c.h.b16 %v3008
    %v3182 = vunpack.c.l.b16 %v3009
    %v3183 = vunpack.c.h.b16 %v3009
    %v3184 = vunpack.c.l.b16 %v3010
    %v3185 = vunpack.c.h.b16 %v3010
    %v3186 = vunpack.c.l.b16 %v3011
    %v3187 = vunpack.c.h.b16 %v3011
    %v3188 = vunpack.c.l.b16 %v3012
    %v3189 = vunpack.c.h.b16 %v3012
    %v3190 = vunpack.c.l.b16 %v3013
    %v3191 = vunpack.c.h.b16 %v3013
    %v3192 = vunpack.c.l.b16 %v3014
    %v3193 = vunpack.c.h.b16 %v3014
    %v3194 = vunpack.c.l.b16 %v3015
    %v3195 = vunpack.c.h.b16 %v3015
    %v3196 = vunpack.c.l.b16 %v3016
    %v3197 = vunpack.c.h.b16 %v3016
    %v3198 = vunpack.c.l.b16 %v3017
    %v3199 = vunpack.c.h.b16 %v3017
    %v3200 = vunpack.c.l.b16 %v3018
    %v3201 = vunpack.c.h.b16 %v3018
    %v3202 = vunpack.c.l.b16 %v3019
    %v3203 = vunpack.c.h.b16 %v3019
    %v3204 = vunpack.c.l.b16 %v3020
    %v3205 = vunpack.c.h.b16 %v3020
    %v3206 = vunpack.c.l.b16 %v3021
    %v3207 = vunpack.c.h.b16 %v3021
    %v3208 = vunpack.c.l.b16 %v3022
    %v3209 = vunpack.c.h.b16 %v3022
    %v3210 = vunpack.c.l.b16 %v3023
    %v3211 = vunpack.c.h.b16 %v3023
    %v3212 = vunpack.c.l.b16 %v3024
    %v3213 = vunpack.c.h.b16 %v3024
    %v3214 = vunpack.c.l.b16 %v3025
    %v3215 = vunpack.c.h.b16 %v3025
    %v3216 = vunpack.c.l.b16 %v3026
    %v3217 = vunpack.c.h.b16 %v3026
    %v3218 = vunpack.c.l.b16 %v3027
    %v3219 = vunpack.c.h.b16 %v3027
    %v3220 = vunpack.c.l.b16 %v3028
    %v3221 = vunpack.c.h.b16 %v3028
    %v3222 = vunpack.c.l.b16 %v3029
    %v3223 = vunpack.c.h.b16 %v3029
    %v3224 = vunpack.c.l.b16 %v3030
    %v3225 = vunpack.c.h.b16 %v3030
    %v3226 = vunpack.c.l.b16 %v3031
    %v3227 = vunpack.c.h.b16 %v3031
    %v3228 = vunpack.c.l.b16 %v3032
    %v3229 = vunpack.c.h.b16 %v3032
    %v3230 = vunpack.c.l.b16 %v3033
    %v3231 = vunpack.c.h.b16 %v3033
    %v3232 = vunpack.c.l.b16 %v3034
    %v3233 = vunpack.c.h.b16 %v3034
    %v3234 = vunpack.c.l.b16 %v3035
    %v3235 = vunpack.c.h.b16 %v3035
    %v3236 = vunpack.c.l.b16 %v3036
    %v3237 = vunpack.c.h.b16 %v3036
    %v3238 = vunpack.c.l.b16 %v3037
    %v3239 = vunpack.c.h.b16 %v3037
    %v3240 = vunpack.c.l.b16 %v3038
    %v3241 = vunpack.c.h.b16 %v3038
    %v3242 = vunpack.c.l.b16 %v3039
    %v3243 = vunpack.c.h.b16 %v3039
    %v3244 = vpack.c.b16 %v3118, %v3116
    %v3245 = vpack.c.b16 %v3119, %v3117
    %v3246 = vpack.c.b16 %v3122, %v3120
    %v3247 = vpack.c.b16 %v3123, %v3121
    %v3248 = vpack.c.b16 %v3126, %v3124
    %v3249 = vpack.c.b16 %v3127, %v3125
    %v3250 = vpack.c.b16 %v3130, %v3128
    %v3251 = vpack.c.b16 %v3131, %v3129
    %v3252 = vpack.c.b16 %v3134, %v3132
    %v3253 = vpack.c.b16 %v3135, %v3133
    %v3254 = vpack.c.b16 %v3138, %v3136
    %v3255 = vpack.c.b16 %v3139, %v3137
    %v3256 = vpack.c.b16 %v3142, %v3140
    %v3257 = vpack.c.b16 %v3143, %v3141
    %v3258 = vpack.c.b16 %v3146, %v3144
    %v3259 = vpack.c.b16 %v3147, %v3145
    %v3260 = vpack.c.b16 %v3150, %v3148
    %v3261 = vpack.c.b16 %v3151, %v3149
    %v3262 = vpack.c.b16 %v3154, %v3152
    %v3263 = vpack.c.b16 %v3155, %v3153
    %v3264 = vpack.c.b16 %v3158, %v3156
    %v3265 = vpack.c.b16 %v3159, %v3157
    %v3266 = vpack.c.b16 %v3162, %v3160
    %v3267 = vpack.c.b16 %v3163, %v3161
    %v3268 = vpack.c.b16 %v3166, %v3164
    %v3269 = vpack.c.b16 %v3167, %v3165
    %v3270 = vpack.c.b16 %v3170, %v3168
    %v3271 = vpack.c.b16 %v3171, %v3169
    %v3272 = vpack.c.b16 %v3174, %v3172
    %v3273 = vpack.c.b16 %v3175, %v3173
    %v3274 = vpack.c.b16 %v3178, %v3176
    %v3275 = vpack.c.b16 %v3179, %v3177
    %v3276 = vpack.c.b16 %v3182, %v3180
    %v3277 = vpack.c.b16 %v3183, %v3181
    %v3278 = vpack.c.b16 %v3186, %v3184
    %v3279 = vpack.c.b16 %v3187, %v3185
    %v3280 = vpack.c.b16 %v3190, %v3188
    %v3281 = vpack.c.b16 %v3191, %v3189
    %v3282 = vpack.c.b16 %v3194, %v3192
    %v3283 = vpack.c.b16 %v3195, %v3193
    %v3284 = vpack.c.b16 %v3198, %v3196
    %v3285 = vpack.c.b16 %v3199, %v3197
    %v3286 = vpack.c.b16 %v3202, %v3200
    %v3287 = vpack.c.b16 %v3203, %v3201
    %v3288 = vpack.c.b16 %v3206, %v3204
    %v3289 = vpack.c.b16 %v3207, %v3205
    %v3290 = vpack.c.b16 %v3210, %v3208
    %v3291 = vpack.c.b16 %v3211, %v3209
    %v3292 = vpack.c.b16 %v3214, %v3212
    %v3293 = vpack.c.b16 %v3215, %v3213
    %v3294 = vpack.c.b16 %v3218, %v3216
    %v3295 = vpack.c.b16 %v3219, %v3217
    %v3296 = vpack.c.b16 %v3222, %v3220
    %v3297 = vpack.c.b16 %v3223, %v3221
    %v3298 = vpack.c.b16 %v3226, %v3224
    %v3299 = vpack.c.b16 %v3227, %v3225
    %v3300 = vpack.c.b16 %v3230, %v3228
    %v3301 = vpack.c.b16 %v3231, %v3229
    %v3302 = vpack.c.b16 %v3234, %v3232
    %v3303 = vpack.c.b16 %v3235, %v3233
    %v3304 = vpack.c.b16 %v3238, %v3236
    %v3305 = vpack.c.b16 %v3239, %v3237
    %v3306 = vpack.c.b16 %v3242, %v3240
    %v3307 = vpack.c.b16 %v3243, %v3241
    %3372 = vmatprep.subr.bf16.mxu0 %v3245
    %3373 = vmatpush1.bf16.msra.mxu0 %v3244
    %3374 = vmatprep.subr.bf16.mxu0 %v3247
    %3375 = vmatpush1.bf16.msra.mxu0 %v3246
    %3376 = vmatprep.subr.bf16.mxu0 %v3249
    %3377 = vmatpush1.bf16.msra.mxu0 %v3248
    %3378 = vmatprep.subr.bf16.mxu0 %v3251
    %3379 = vmatpush1.bf16.msra.mxu0 %v3250
    %3380 = vmatprep.subr.bf16.mxu0 %v3253
    %3381 = vmatpush1.bf16.msra.mxu0 %v3252
    %3382 = vmatprep.subr.bf16.mxu0 %v3255
    %3383 = vmatpush1.bf16.msra.mxu0 %v3254
    %3384 = vmatprep.subr.bf16.mxu0 %v3257
    %3385 = vmatpush1.bf16.msra.mxu0 %v3256
    %3386 = vmatprep.subr.bf16.mxu0 %v3259
    %3387 = vmatpush1.bf16.msra.mxu0 %v3258
    %3388 = vmatprep.subr.bf16.mxu0 %v3261
    %3389 = vmatpush1.bf16.msra.mxu0 %v3260
    %3390 = vmatprep.subr.bf16.mxu0 %v3263
    %3391 = vmatpush1.bf16.msra.mxu0 %v3262
    %3392 = vmatprep.subr.bf16.mxu0 %v3265
    %3393 = vmatpush1.bf16.msra.mxu0 %v3264
    %3394 = vmatprep.subr.bf16.mxu0 %v3267
    %3395 = vmatpush1.bf16.msra.mxu0 %v3266
    %3396 = vmatprep.subr.bf16.mxu0 %v3269
    %3397 = vmatpush1.bf16.msra.mxu0 %v3268
    %3398 = vmatprep.subr.bf16.mxu0 %v3271
    %3399 = vmatpush1.bf16.msra.mxu0 %v3270
    %3400 = vmatprep.subr.bf16.mxu0 %v3273
    %3401 = vmatpush1.bf16.msra.mxu0 %v3272
    %3402 = vmatprep.subr.bf16.mxu0 %v3275
    %3403 = vmatpush1.bf16.msra.mxu0 %v3274
    %3404 = vmatprep.mubr.bf16.mxu0 %v2973
    %3405 = vmatmul.mubr.bf16.gmra.mrb[0].mxu0 %v2972
    %v3406 = vpop.f32.mrb[0].mxu0
    %v3407 = vadd.f32 %v3045, %v3406
    %v3408 = vpop.f32.mrb[0].mxu0
    %v3409 = vadd.f32 %v3049, %v3408
    %v3410 = vpop.f32.mrb[0].mxu0
    %v3411 = vpop.f32.mrb[0].mxu0
    %3412 = vdwg.mxu0
    %3413 = vmatprep.subr.bf16.mxu0 %v3277
    %3414 = vmatpush1.bf16.msra.mxu0 %v3276
    %3415 = vmatprep.subr.bf16.mxu0 %v3279
    %3416 = vmatpush1.bf16.msra.mxu0 %v3278
    %3417 = vmatprep.subr.bf16.mxu0 %v3281
    %3418 = vmatpush1.bf16.msra.mxu0 %v3280
    %3419 = vmatprep.subr.bf16.mxu0 %v3283
    %3420 = vmatpush1.bf16.msra.mxu0 %v3282
    %3421 = vmatprep.subr.bf16.mxu0 %v3285
    %3422 = vmatpush1.bf16.msra.mxu0 %v3284
    %3423 = vmatprep.subr.bf16.mxu0 %v3287
    %3424 = vmatpush1.bf16.msra.mxu0 %v3286
    %3425 = vmatprep.subr.bf16.mxu0 %v3289
    %3426 = vmatpush1.bf16.msra.mxu0 %v3288
    %3427 = vmatprep.subr.bf16.mxu0 %v3291
    %3428 = vmatpush1.bf16.msra.mxu0 %v3290
    %3429 = vmatprep.subr.bf16.mxu0 %v3293
    %3430 = vmatpush1.bf16.msra.mxu0 %v3292
    %3431 = vmatprep.subr.bf16.mxu0 %v3295
    %3432 = vmatpush1.bf16.msra.mxu0 %v3294
    %3433 = vmatprep.subr.bf16.mxu0 %v3297
    %3434 = vmatpush1.bf16.msra.mxu0 %v3296
    %3435 = vmatprep.subr.bf16.mxu0 %v3299
    %3436 = vmatpush1.bf16.msra.mxu0 %v3298
    %3437 = vmatprep.subr.bf16.mxu0 %v3301
    %3438 = vmatpush1.bf16.msra.mxu0 %v3300
    %3439 = vmatprep.subr.bf16.mxu0 %v3303
    %3440 = vmatpush1.bf16.msra.mxu0 %v3302
    %3441 = vmatprep.subr.bf16.mxu0 %v3305
    %3442 = vmatpush1.bf16.msra.mxu0 %v3304
    %3443 = vmatprep.subr.bf16.mxu0 %v3307
    %3444 = vmatpush1.bf16.msra.mxu0 %v3306
    %3445 = vmatprep.mubr.bf16.mxu0 %v2975
    %3446 = vmatmul.mubr.bf16.gmra.mrb[0].mxu0 %v2974
    %v3447 = vpop.f32.mrb[0].mxu0
    %v3448 = vadd.f32 %v3407, %v3447
    %v3449 = vpop.f32.mrb[0].mxu0
    %v3450 = vadd.f32 %v3409, %v3449
    %v3451 = vpop.f32.mrb[0].mxu0
    %v3452 = vpop.f32.mrb[0].mxu0
    %3453 = vdwg.mxu0
    %v3454 = vxor.u32 %v3448, 2147483648
    %v3455 = vxor.u32 %v3450, 2147483648
    %v3456 = vmul.f32 %v3454, 1.442695
    %v3457 = vpow.pop %v3456
    %v3458 = vmul.f32 %v3455, 1.442695
    %v3459 = vpow.pop %v3458
    %v3460 = vadd.f32 %v3457, 1.0
    %v3461 = vadd.f32 %v3459, 1.0
    %v3462 = vrcp.pop %v3460
    %v3463 = vmul.f32 1.0, %v3462
    %v3464 = vrcp.pop %v3461
    %v3465 = vmul.f32 1.0, %v3464
    %v3466 = vpack.c.bf16 %v3463, %v3463
    %v3467 = vpack.c.bf16 %v3465, %v3465
    %v3468 = vld [vmem:[#allocation7] sm:$0xff]
    %v3469 = vld [vmem:[#allocation7 + $0x8] sm:$0xff]
    %v3470 = vld [vmem:[#allocation7 + $0x10] sm:$0xff]
    %v3471 = vld [vmem:[#allocation7 + $0x18] sm:$0xff]
    %v3472 = vld [vmem:[#allocation7 + $0x20] sm:$0xff]
    %v3473 = vld [vmem:[#allocation7 + $0x28] sm:$0xff]
    %v3474 = vld [vmem:[#allocation7 + $0x30] sm:$0xff]
    %v3475 = vld [vmem:[#allocation7 + $0x38] sm:$0xff]
    %v3476 = vld [vmem:[#allocation7 + $0x40] sm:$0xff]
    %v3477 = vld [vmem:[#allocation7 + $0x48] sm:$0xff]
    %v3478 = vld [vmem:[#allocation7 + $0x50] sm:$0xff]
    %v3479 = vld [vmem:[#allocation7 + $0x58] sm:$0xff]
    %v3480 = vld [vmem:[#allocation7 + $0x60] sm:$0xff]
    %v3481 = vld [vmem:[#allocation7 + $0x68] sm:$0xff]
    %v3482 = vld [vmem:[#allocation7 + $0x70] sm:$0xff]
    %v3483 = vld [vmem:[#allocation7 + $0x78] sm:$0xff]
    %v3484 = vld [vmem:[#allocation7 + $0x80] sm:$0xff]
    %v3485 = vld [vmem:[#allocation7 + $0x88] sm:$0xff]
    %v3486 = vld [vmem:[#allocation7 + $0x90] sm:$0xff]
    %v3487 = vld [vmem:[#allocation7 + $0x98] sm:$0xff]
    %v3488 = vld [vmem:[#allocation7 + $0xa0] sm:$0xff]
    %v3489 = vld [vmem:[#allocation7 + $0xa8] sm:$0xff]
    %v3490 = vld [vmem:[#allocation7 + $0xb0] sm:$0xff]
    %v3491 = vld [vmem:[#allocation7 + $0xb8] sm:$0xff]
    %v3492 = vld [vmem:[#allocation7 + $0xc0] sm:$0xff]
    %v3493 = vld [vmem:[#allocation7 + $0xc8] sm:$0xff]
    %v3494 = vld [vmem:[#allocation7 + $0xd0] sm:$0xff]
    %v3495 = vld [vmem:[#allocation7 + $0xd8] sm:$0xff]
    %v3496 = vld [vmem:[#allocation7 + $0xe0] sm:$0xff]
    %v3497 = vld [vmem:[#allocation7 + $0xe8] sm:$0xff]
    %v3498 = vld [vmem:[#allocation7 + $0xf0] sm:$0xff]
    %v3499 = vld [vmem:[#allocation7 + $0xf8] sm:$0xff]
    %v3500 = vld [vmem:[%s9] sm:$0x3]
    %v3502 = vlaneseq
    %v3503 = vshrl.u32 %v3502, 7
    %v3504 = vsub.s32 0, %v3503
    %v3505 = vrot.slane %v3500, %v3504
    %v3506 = vlaneseq
    %v3507 = vshrl.u32 %v3506, 7
    %v3508 = vsub.s32 1, %v3507
    %v3509 = vrot.slane %v3500, %v3508
    %v3544 = vunpack.c.l.b16 %v3468
    %v3545 = vunpack.c.h.b16 %v3468
    %v3546 = vunpack.c.l.b16 %v3469
    %v3547 = vunpack.c.h.b16 %v3469
    %v3548 = vunpack.c.l.b16 %v3470
    %v3549 = vunpack.c.h.b16 %v3470
    %v3550 = vunpack.c.l.b16 %v3471
    %v3551 = vunpack.c.h.b16 %v3471
    %v3552 = vunpack.c.l.b16 %v3472
    %v3553 = vunpack.c.h.b16 %v3472
    %v3554 = vunpack.c.l.b16 %v3473
    %v3555 = vunpack.c.h.b16 %v3473
    %v3556 = vunpack.c.l.b16 %v3474
    %v3557 = vunpack.c.h.b16 %v3474
    %v3558 = vunpack.c.l.b16 %v3475
    %v3559 = vunpack.c.h.b16 %v3475
    %v3560 = vunpack.c.l.b16 %v3476
    %v3561 = vunpack.c.h.b16 %v3476
    %v3562 = vunpack.c.l.b16 %v3477
    %v3563 = vunpack.c.h.b16 %v3477
    %v3564 = vunpack.c.l.b16 %v3478
    %v3565 = vunpack.c.h.b16 %v3478
    %v3566 = vunpack.c.l.b16 %v3479
    %v3567 = vunpack.c.h.b16 %v3479
    %v3568 = vunpack.c.l.b16 %v3480
    %v3569 = vunpack.c.h.b16 %v3480
    %v3570 = vunpack.c.l.b16 %v3481
    %v3571 = vunpack.c.h.b16 %v3481
    %v3572 = vunpack.c.l.b16 %v3482
    %v3573 = vunpack.c.h.b16 %v3482
    %v3574 = vunpack.c.l.b16 %v3483
    %v3575 = vunpack.c.h.b16 %v3483
    %v3576 = vunpack.c.l.b16 %v3484
    %v3577 = vunpack.c.h.b16 %v3484
    %v3578 = vunpack.c.l.b16 %v3485
    %v3579 = vunpack.c.h.b16 %v3485
    %v3580 = vunpack.c.l.b16 %v3486
    %v3581 = vunpack.c.h.b16 %v3486
    %v3582 = vunpack.c.l.b16 %v3487
    %v3583 = vunpack.c.h.b16 %v3487
    %v3584 = vunpack.c.l.b16 %v3488
    %v3585 = vunpack.c.h.b16 %v3488
    %v3586 = vunpack.c.l.b16 %v3489
    %v3587 = vunpack.c.h.b16 %v3489
    %v3588 = vunpack.c.l.b16 %v3490
    %v3589 = vunpack.c.h.b16 %v3490
    %v3590 = vunpack.c.l.b16 %v3491
    %v3591 = vunpack.c.h.b16 %v3491
    %v3592 = vunpack.c.l.b16 %v3492
    %v3593 = vunpack.c.h.b16 %v3492
    %v3594 = vunpack.c.l.b16 %v3493
    %v3595 = vunpack.c.h.b16 %v3493
    %v3596 = vunpack.c.l.b16 %v3494
    %v3597 = vunpack.c.h.b16 %v3494
    %v3598 = vunpack.c.l.b16 %v3495
    %v3599 = vunpack.c.h.b16 %v3495
    %v3600 = vunpack.c.l.b16 %v3496
    %v3601 = vunpack.c.h.b16 %v3496
    %v3602 = vunpack.c.l.b16 %v3497
    %v3603 = vunpack.c.h.b16 %v3497
    %v3604 = vunpack.c.l.b16 %v3498
    %v3605 = vunpack.c.h.b16 %v3498
    %v3606 = vunpack.c.l.b16 %v3499
    %v3607 = vunpack.c.h.b16 %v3499
    %v3608 = vpack.c.b16 %v3546, %v3544
    %v3609 = vpack.c.b16 %v3547, %v3545
    %v3610 = vpack.c.b16 %v3550, %v3548
    %v3611 = vpack.c.b16 %v3551, %v3549
    %v3612 = vpack.c.b16 %v3554, %v3552
    %v3613 = vpack.c.b16 %v3555, %v3553
    %v3614 = vpack.c.b16 %v3558, %v3556
    %v3615 = vpack.c.b16 %v3559, %v3557
    %v3616 = vpack.c.b16 %v3562, %v3560
    %v3617 = vpack.c.b16 %v3563, %v3561
    %v3618 = vpack.c.b16 %v3566, %v3564
    %v3619 = vpack.c.b16 %v3567, %v3565
    %v3620 = vpack.c.b16 %v3570, %v3568
    %v3621 = vpack.c.b16 %v3571, %v3569
    %v3622 = vpack.c.b16 %v3574, %v3572
    %v3623 = vpack.c.b16 %v3575, %v3573
    %v3624 = vpack.c.b16 %v3578, %v3576
    %v3625 = vpack.c.b16 %v3579, %v3577
    %v3626 = vpack.c.b16 %v3582, %v3580
    %v3627 = vpack.c.b16 %v3583, %v3581
    %v3628 = vpack.c.b16 %v3586, %v3584
    %v3629 = vpack.c.b16 %v3587, %v3585
    %v3630 = vpack.c.b16 %v3590, %v3588
    %v3631 = vpack.c.b16 %v3591, %v3589
    %v3632 = vpack.c.b16 %v3594, %v3592
    %v3633 = vpack.c.b16 %v3595, %v3593
    %v3634 = vpack.c.b16 %v3598, %v3596
    %v3635 = vpack.c.b16 %v3599, %v3597
    %v3636 = vpack.c.b16 %v3602, %v3600
    %v3637 = vpack.c.b16 %v3603, %v3601
    %v3638 = vpack.c.b16 %v3606, %v3604
    %v3639 = vpack.c.b16 %v3607, %v3605
    %3672 = vmatprep.subr.bf16.mxu0 %v3609
    %3673 = vmatpush1.bf16.msra.mxu0 %v3608
    %3674 = vmatprep.subr.bf16.mxu0 %v3611
    %3675 = vmatpush1.bf16.msra.mxu0 %v3610
    %3676 = vmatprep.subr.bf16.mxu0 %v3613
    %3677 = vmatpush1.bf16.msra.mxu0 %v3612
    %3678 = vmatprep.subr.bf16.mxu0 %v3615
    %3679 = vmatpush1.bf16.msra.mxu0 %v3614
    %3680 = vmatprep.subr.bf16.mxu0 %v3617
    %3681 = vmatpush1.bf16.msra.mxu0 %v3616
    %3682 = vmatprep.subr.bf16.mxu0 %v3619
    %3683 = vmatpush1.bf16.msra.mxu0 %v3618
    %3684 = vmatprep.subr.bf16.mxu0 %v3621
    %3685 = vmatpush1.bf16.msra.mxu0 %v3620
    %3686 = vmatprep.subr.bf16.mxu0 %v3623
    %3687 = vmatpush1.bf16.msra.mxu0 %v3622
    %3688 = vmatprep.subr.bf16.mxu0 %v3625
    %3689 = vmatpush1.bf16.msra.mxu0 %v3624
    %3690 = vmatprep.subr.bf16.mxu0 %v3627
    %3691 = vmatpush1.bf16.msra.mxu0 %v3626
    %3692 = vmatprep.subr.bf16.mxu0 %v3629
    %3693 = vmatpush1.bf16.msra.mxu0 %v3628
    %3694 = vmatprep.subr.bf16.mxu0 %v3631
    %3695 = vmatpush1.bf16.msra.mxu0 %v3630
    %3696 = vmatprep.subr.bf16.mxu0 %v3633
    %3697 = vmatpush1.bf16.msra.mxu0 %v3632
    %3698 = vmatprep.subr.bf16.mxu0 %v3635
    %3699 = vmatpush1.bf16.msra.mxu0 %v3634
    %3700 = vmatprep.subr.bf16.mxu0 %v3637
    %3701 = vmatpush1.bf16.msra.mxu0 %v3636
    %3702 = vmatprep.subr.bf16.mxu0 %v3639
    %3703 = vmatpush1.bf16.msra.mxu0 %v3638
    %3704 = vmatprep.mubr.bf16.mxu0 %v3467
    %3705 = vmatmul.mubr.bf16.gmra.mrb[0].mxu0 %v3466
    %v3706 = vpop.f32.mrb[0].mxu0
    %v3707 = vadd.f32 %v3505, %v3706
    %v3708 = vpop.f32.mrb[0].mxu0
    %v3709 = vadd.f32 %v3509, %v3708
    %v3710 = vpop.f32.mrb[0].mxu0
    %v3711 = vpop.f32.mrb[0].mxu0
    %3712 = vdwg.mxu0
    %3713 = vst [vmem:[%s10] sm:$0xff] %v3707
    %3714 = vst [vmem:[%s10 + $0x8] sm:$0xff] %v3709
    // Predicated region
    $region58: #{fwd.1} parent=1 // pred_check
      _
    $region59: #{fwd.1} parent=1 // pred_check_branch
      %3716 = sbr.rel (0) target = $region61
    $region60: #{fwd.1} parent=1 // pred_region
      _
    $region61: #{fwd.1} parent=1 // pred_fallthru
      _
    // Predicated region
    $region62: #{fwd.1} parent=1 // pred_check
      _
    $region63: #{fwd.1} parent=1 // pred_check_branch
      %3718 = sbr.rel (0) target = $region65
    $region64: #{fwd.1} parent=1 // pred_region
      _
    $region65: #{fwd.1} parent=1 // pred_fallthru
      _
    %3719 = vsyncpa [#allocation3], 1
    %3720 = vsyncpa [#allocation5], 1
    %3721 = vsyncpa [#allocation8], 1

</llo_original>
